<compile_context>
chip_gen: v5e
topology: v5e:2x2
jax: 0.10.0
libtpu: 0.0.40
codegen_flags: <defaults>
</compile_context>

<pallas_src>
import functools

import jax
import jax.numpy as jnp
from jax.experimental import pallas as pl
from jax.experimental.pallas import tpu as pltpu

HIDDEN = 256  # hidden_dim in the PyTorch module


def shield_kernel(
    b3_ref,      # SMEM (1,)      f32   : fc3 bias
    idx_ref,     # VMEM (B, 1)    int32 : last_informative_layers (clamped)
    a_idx_ref,   # VMEM (B, 1)    int32 : discrete action indices
    s_ref,       # VMEM (T, D)    f32   : states of batch row B-1 only
    wih_ref,     # VMEM (D, 4H)   f32   : LSTM weight_ih^T, gate order i,f,o,g
    whh_ref,     # VMEM (H, 4H)   f32   : LSTM weight_hh^T, gate order i,f,o,g
    bl_ref,      # VMEM (1, 4H)   f32   : bias_ih + bias_hh, gate order i,f,o,g
    w1s_ref,     # VMEM (H, H)    f32   : fc1 weight, state slice (transposed)
    w1a_ref,     # VMEM (Ap, H)   f32   : fc1 weight, action slice (transposed, zero-padded)
    b1_ref,      # VMEM (1, H)    f32
    w2_ref,      # VMEM (H, H)    f32
    b2_ref,      # VMEM (1, H)    f32
    w3_ref,      # VMEM (1, H)    f32   : fc3 weight row
    out_ref,     # VMEM (B, 128)  f32   : sigmoid scores broadcast across lanes
    *, T, B, H, A_pad,
):
    # ---- hoisted input projection for the single batch row that is ever read
    xproj = (
        jnp.dot(s_ref[...], wih_ref[...], preferred_element_type=jnp.float32)
        + bl_ref[...]
    )  # (T, 4H) f32

    # ---- LSTM recurrence on one (1,H) row; gate order i,f,o,g
    h = jnp.zeros((1, H), jnp.float32)
    c = jnp.zeros((1, H), jnp.float32)
    hist = jnp.zeros((T, H), jnp.float32)
    row_iota = jax.lax.broadcasted_iota(jnp.int32, (T, H), 0)
    for t in range(T):
        g_in = xproj[t:t + 1, :]                       # (1, 4H)
        if t == 0:
            gates = g_in                               # h == 0  =>  h @ whh == 0
        else:
            gates = g_in + jnp.dot(h, whh_ref[...],
                                   preferred_element_type=jnp.float32)
        sig = jax.nn.sigmoid(gates[:, 0:3 * H])        # i | f | o in ONE EUP call
        i_g = sig[:, 0:H]
        f_g = sig[:, H:2 * H]
        o_g = sig[:, 2 * H:3 * H]
        g_g = jnp.tanh(gates[:, 3 * H:4 * H])
        c = f_g * c + i_g * g_g
        h = o_g * jnp.tanh(c)
        hist = jnp.where(row_iota == t, jnp.broadcast_to(h, (T, H)), hist)

    # ---- time gather lstm_output[B-1, idx[b], :] via one-hot select matmul
    t_iota = jax.lax.broadcasted_iota(jnp.int32, (B, T), 1)
    sel_t = (t_iota == idx_ref[...]).astype(jnp.float32)             # (B, T)
    gath = jnp.dot(sel_t, hist, preferred_element_type=jnp.float32)  # (B, H)

    # ---- action path: identity embedding + fc1 action slice == one-hot matmul
    a_iota = jax.lax.broadcasted_iota(jnp.int32, (B, A_pad), 1)
    sel_a = (a_iota == a_idx_ref[...]).astype(jnp.float32)           # (B, A_pad)
    act = jnp.dot(sel_a, w1a_ref[...], preferred_element_type=jnp.float32)

    # ---- MLP head: fc1 -> relu -> fc2 -> relu -> fc3 -> sigmoid
    x1 = jnp.maximum(
        jnp.dot(gath, w1s_ref[...], preferred_element_type=jnp.float32)
        + act + b1_ref[...], 0.0)
    x2 = jnp.maximum(
        jnp.dot(x1, w2_ref[...], preferred_element_type=jnp.float32)
        + b2_ref[...], 0.0)
    # fc3 (H -> 1) as a VPU/XLU reduce instead of a wasteful N=1 MXU pass
    logit = jnp.sum(x2 * w3_ref[...], axis=-1, keepdims=True) + b3_ref[0]  # (B,1)
    out_ref[...] = jnp.broadcast_to(jax.nn.sigmoid(logit), out_ref.shape)


def init_params(key, state_dim, action_dim, hidden_dim=HIDDEN):
    """Deterministic synthetic parameters with PyTorch-like shapes / init scale."""
    ks = jax.random.split(key, 10)
    k_lstm = 1.0 / jnp.sqrt(hidden_dim)
    k_fc1 = 1.0 / jnp.sqrt(hidden_dim + action_dim)
    k_fc23 = 1.0 / jnp.sqrt(hidden_dim)
    u = lambda k, shape, scale: jax.random.uniform(
        k, shape, jnp.float32, minval=-scale, maxval=scale)
    return {
        "weight_ih": u(ks[0], (4 * hidden_dim, state_dim), k_lstm),
        "weight_hh": u(ks[1], (4 * hidden_dim, hidden_dim), k_lstm),
        "bias_ih":   u(ks[2], (4 * hidden_dim,), k_lstm),
        "bias_hh":   u(ks[3], (4 * hidden_dim,), k_lstm),
        "w_fc1":     u(ks[4], (hidden_dim, hidden_dim + action_dim), k_fc1),
        "b_fc1":     u(ks[5], (hidden_dim,), k_fc1),
        "w_fc2":     u(ks[6], (hidden_dim, hidden_dim), k_fc23),
        "b_fc2":     u(ks[7], (hidden_dim,), k_fc23),
        "w_fc3":     u(ks[8], (1, hidden_dim), k_fc23),
        "b_fc3":     u(ks[9], (1,), k_fc23),
        "action_dim": action_dim,
        "state_dim": state_dim,
        "hidden_dim": hidden_dim,
    }


def prepare_shield_params(params):
    """One-time (init-time) weight preparation — NOT per forward call.

    PyTorch gate order [i | f | g | o] is permuted to [i | f | o | g], LSTM /
    fc weights are transposed for right-multiplication, the two LSTM biases
    are folded, and the fc1 action slice is zero-padded to >= 8 sublanes.
    """
    H = params["w_fc2"].shape[0]
    A = params["w_fc1"].shape[1] - H

    def reorder(w):  # rows [i | f | g | o] -> [i | f | o | g]
        return jnp.concatenate(
            [w[0:2 * H], w[3 * H:4 * H], w[2 * H:3 * H]], axis=0)

    A_pad = max(8, ((A + 7) // 8) * 8)
    w1 = params["w_fc1"].astype(jnp.float32)
    w1a = jnp.zeros((A_pad, H), jnp.float32).at[:A, :].set(w1[:, H:].T)

    return {
        "wih_t": reorder(params["weight_ih"]).T.astype(jnp.float32),   # (D, 4H)
        "whh_t": reorder(params["weight_hh"]).T.astype(jnp.float32),   # (H, 4H)
        "bl": reorder(params["bias_ih"] + params["bias_hh"])[None, :].astype(jnp.float32),
        "w1s": w1[:, :H].T,                                            # (H, H)
        "w1a": w1a,                                                    # (A_pad, H)
        "b1": params["b_fc1"][None, :].astype(jnp.float32),
        "w2t": params["w_fc2"].T.astype(jnp.float32),
        "b2": params["b_fc2"][None, :].astype(jnp.float32),
        "w3": params["w_fc3"].astype(jnp.float32),                     # (1, H)
        "b3": params["b_fc3"].astype(jnp.float32),                     # (1,)
    }


@jax.jit
def shield_forward_pallas(prep, s, last_informative_layers, a):
    """prep: output of prepare_shield_params.  s: (B,T,D) f32, a: (B,) int."""
    B, T, D = s.shape
    H = prep["w2t"].shape[0]
    A_pad = prep["w1a"].shape[0]

    # Only batch row B-1 of the LSTM output is ever read (the original
    # module's indexing quirk), so only that row's sequence enters the kernel.
    s_last = s[B - 1].astype(jnp.float32)                              # (T, D)
    # clamp: out-of-range indices would otherwise silently select zero rows
    idx = jnp.clip(last_informative_layers.astype(jnp.int32), 0, T - 1)[:, None]
    a_idx = a.astype(jnp.int32)[:, None]                               # (B, 1)

    vmem = pl.BlockSpec(memory_space=pltpu.MemorySpace.VMEM)
    smem = pl.BlockSpec(memory_space=pltpu.MemorySpace.SMEM)

    flops = (2 * T * D * 4 * H            # hoisted input projection
             + 2 * (T - 1) * H * 4 * H    # recurrent h @ whh
             + 2 * B * T * H              # one-hot time gather
             + 2 * B * A_pad * H          # one-hot action gather
             + 2 * 2 * B * H * H          # fc1 (state slice) + fc2
             + 2 * B * H)                 # fc3 reduce
    transcendentals = T * 5 * H + B
    bytes_accessed = 4 * (T * D + D * 4 * H + H * 4 * H + 4 * H
                          + 2 * H * H + A_pad * H + 4 * H + 1
                          + 2 * B + B * 128)

    out = pl.pallas_call(
        functools.partial(shield_kernel, T=T, B=B, H=H, A_pad=A_pad),
        out_shape=jax.ShapeDtypeStruct((B, 128), jnp.float32),
        in_specs=[smem] + [vmem] * 12,
        out_specs=vmem,
        cost_estimate=pl.CostEstimate(flops=flops,
                                      transcendentals=transcendentals,
                                      bytes_accessed=bytes_accessed),
    )(prep["b3"], idx, a_idx, s_last,
      prep["wih_t"], prep["whh_t"], prep["bl"],
      prep["w1s"], prep["w1a"], prep["b1"],
      prep["w2t"], prep["b2"], prep["w3"])

    # TODO(synk): if many independent shield queries are batched per call in
    # PPO, add a leading grid axis with dimension_semantics=("parallel",) so a
    # v7x chip can use both TensorCores and dispatch overhead is amortized.
    return out[:, 0]   # == sigmoid(fc3(x)).squeeze(-1).squeeze(-1) for B > 1


def shield_forward_reference(params, s, last_informative_layers, a):
    """Pure-JAX f32 reference mirroring the PyTorch forward exactly."""
    hp = jax.lax.Precision.HIGHEST
    B, T, D = s.shape
    H = params["hidden_dim"]
    A = params["action_dim"]
    a_emb = jax.nn.one_hot(a, A, dtype=jnp.float32)

    wih, whh = params["weight_ih"], params["weight_hh"]
    bias = params["bias_ih"] + params["bias_hh"]
    h = jnp.zeros((B, H), jnp.float32)
    c = jnp.zeros((B, H), jnp.float32)
    outs = []
    for t in range(T):
        g = (jnp.dot(s[:, t, :], wih.T, precision=hp)
             + jnp.dot(h, whh.T, precision=hp) + bias)
        i_g = jax.nn.sigmoid(g[:, 0:H])
        f_g = jax.nn.sigmoid(g[:, H:2 * H])
        g_g = jnp.tanh(g[:, 2 * H:3 * H])
        o_g = jax.nn.sigmoid(g[:, 3 * H:4 * H])
        c = f_g * c + i_g * g_g
        h = o_g * jnp.tanh(c)
        outs.append(h)
    lstm_out = jnp.stack(outs, axis=1)                               # (B, T, H)
    idx = last_informative_layers.astype(jnp.int32)
    lstm_last = lstm_out[B - 1, idx, :]                              # (B, H) <- original quirk
    x = jnp.concatenate([lstm_last, a_emb], axis=-1)
    x = jax.nn.relu(jnp.dot(x, params["w_fc1"].T, precision=hp) + params["b_fc1"])
    x = jax.nn.relu(jnp.dot(x, params["w_fc2"].T, precision=hp) + params["b_fc2"])
    y = jax.nn.sigmoid(jnp.dot(x, params["w_fc3"].T, precision=hp) + params["b_fc3"])
    return jnp.squeeze(y, axis=-1)


if __name__ == "__main__":
    B, T = 2, 8           # batch, k_last_states (sequence length)
    STATE_DIM = 8
    ACTION_DIM = 6        # discrete action space -> identity embedding

    key = jax.random.PRNGKey(0)
    k_param, k_s, k_idx, k_a = jax.random.split(key, 4)

    params = init_params(k_param, STATE_DIM, ACTION_DIM)
    prep = prepare_shield_params(params)   # one-time weight prep, not per call

    s = jax.random.normal(k_s, (B, T, STATE_DIM), jnp.float32)
    last_informative_layers = jax.random.randint(k_idx, (B,), 0, T, jnp.int32)
    a = jax.random.randint(k_a, (B,), 0, ACTION_DIM, jnp.int32)

    y_kernel = shield_forward_pallas(prep, s, last_informative_layers, a)
    y_kernel = jax.block_until_ready(y_kernel)

    y_ref = shield_forward_reference(params, s, last_informative_layers, a)
    assert y_kernel.shape == (B,)
    # f32 matmuls throughout the kernel -> tolerance tightened vs. the old
    # bf16-recurrence version (5e-3 leaves margin for MXU pass rounding).
    assert jnp.allclose(y_kernel, y_ref, atol=5e-3, rtol=5e-3), (y_kernel, y_ref)

    print("KERNEL_OK")
</pallas_src>

<mosaic_0001>
module attributes {stable_mosaic.version = 11 : i64} {
  func.func @shield_kernel(%arg0: memref<1xf32, #tpu.memory_space<smem>>, %arg1: memref<2x1xi32, #tpu.memory_space<vmem>>, %arg2: memref<2x1xi32, #tpu.memory_space<vmem>>, %arg3: memref<8x8xf32, #tpu.memory_space<vmem>>, %arg4: memref<8x1024xf32, #tpu.memory_space<vmem>>, %arg5: memref<256x1024xf32, #tpu.memory_space<vmem>>, %arg6: memref<1x1024xf32, #tpu.memory_space<vmem>>, %arg7: memref<256x256xf32, #tpu.memory_space<vmem>>, %arg8: memref<8x256xf32, #tpu.memory_space<vmem>>, %arg9: memref<1x256xf32, #tpu.memory_space<vmem>>, %arg10: memref<256x256xf32, #tpu.memory_space<vmem>>, %arg11: memref<1x256xf32, #tpu.memory_space<vmem>>, %arg12: memref<1x256xf32, #tpu.memory_space<vmem>>, %arg13: memref<2x128xf32, #tpu.memory_space<vmem>>) attributes {dimension_semantics = [], scalar_prefetch = 0 : i64, scratch_operands = 0 : i64, tpu.core_type = #tpu.core_type<tc>} {
    %c0 = arith.constant 0 : index
    %c0_0 = arith.constant 0 : index
    %0 = vector.load %arg3[%c0, %c0_0] : memref<8x8xf32, #tpu.memory_space<vmem>>, vector<8x8xf32>
    %c0_1 = arith.constant 0 : index
    %c0_2 = arith.constant 0 : index
    %1 = vector.load %arg4[%c0_1, %c0_2] : memref<8x1024xf32, #tpu.memory_space<vmem>>, vector<8x1024xf32>
    %cst = arith.constant dense<0.000000e+00> : vector<8x1024xf32>
    %2 = tpu.matmul %0, %1, %cst {dimension_numbers = #tpu.dot_dimension_numbers<[1], [0], [0], [1], [0, 0, 1, 1], [], []>} : vector<8x8xf32>, vector<8x1024xf32>, vector<8x1024xf32> -> vector<8x1024xf32>
    %c0_3 = arith.constant 0 : index
    %c0_4 = arith.constant 0 : index
    %3 = vector.load %arg6[%c0_3, %c0_4] : memref<1x1024xf32, #tpu.memory_space<vmem>>, vector<1x1024xf32>
    %4 = vector.broadcast %3 : vector<1x1024xf32> to vector<8x1024xf32>
    %5 = arith.addf %2, %4 : vector<8x1024xf32>
    %cst_5 = arith.constant 0.000000e+00 : f32
    %6 = vector.broadcast %cst_5 : f32 to vector<1x256xf32>
    %cst_6 = arith.constant 0.000000e+00 : f32
    %7 = vector.broadcast %cst_6 : f32 to vector<8x256xf32>
    %8 = tpu.iota {dimensions = array<i32: 0>} : vector<8x256xi32>
    %9 = vector.extract_strided_slice %5 {offsets = [0, 0], sizes = [1, 1024], strides = [1, 1]} : vector<8x1024xf32> to vector<1x1024xf32>
    %10 = vector.extract_strided_slice %9 {offsets = [0, 0], sizes = [1, 768], strides = [1, 1]} : vector<1x1024xf32> to vector<1x768xf32>
    %11 = arith.negf %10 : vector<1x768xf32>
    %12 = math.exp %11 : vector<1x768xf32>
    %cst_7 = arith.constant 1.000000e+00 : f32
    %13 = vector.broadcast %cst_7 : f32 to vector<1x768xf32>
    %14 = arith.addf %13, %12 : vector<1x768xf32>
    %15 = arith.divf %13, %14 : vector<1x768xf32>
    %16 = vector.extract_strided_slice %15 {offsets = [0, 0], sizes = [1, 256], strides = [1, 1]} : vector<1x768xf32> to vector<1x256xf32>
    %17 = vector.extract_strided_slice %15 {offsets = [0, 256], sizes = [1, 256], strides = [1, 1]} : vector<1x768xf32> to vector<1x256xf32>
    %18 = vector.extract_strided_slice %15 {offsets = [0, 512], sizes = [1, 256], strides = [1, 1]} : vector<1x768xf32> to vector<1x256xf32>
    %19 = vector.extract_strided_slice %9 {offsets = [0, 768], sizes = [1, 256], strides = [1, 1]} : vector<1x1024xf32> to vector<1x256xf32>
    %20 = math.tanh %19 : vector<1x256xf32>
    %21 = arith.mulf %17, %6 : vector<1x256xf32>
    %22 = arith.mulf %16, %20 : vector<1x256xf32>
    %23 = arith.addf %21, %22 : vector<1x256xf32>
    %24 = math.tanh %23 : vector<1x256xf32>
    %25 = arith.mulf %18, %24 : vector<1x256xf32>
    %c0_i32 = arith.constant 0 : i32
    %26 = vector.broadcast %c0_i32 : i32 to vector<8x256xi32>
    %27 = arith.cmpi eq, %8, %26 : vector<8x256xi32>
    %28 = vector.shape_cast %25 : vector<1x256xf32> to vector<1x256xf32>
    %29 = vector.broadcast %28 : vector<1x256xf32> to vector<8x256xf32>
    %30 = arith.select %27, %29, %7 : vector<8x256xi1>, vector<8x256xf32>
    %31 = vector.extract_strided_slice %5 {offsets = [1, 0], sizes = [1, 1024], strides = [1, 1]} : vector<8x1024xf32> to vector<1x1024xf32>
    %c0_8 = arith.constant 0 : index
    %c0_9 = arith.constant 0 : index
    %32 = vector.load %arg5[%c0_8, %c0_9] : memref<256x1024xf32, #tpu.memory_space<vmem>>, vector<256x1024xf32>
    %cst_10 = arith.constant dense<0.000000e+00> : vector<1x1024xf32>
    %33 = tpu.matmul %25, %32, %cst_10 {dimension_numbers = #tpu.dot_dimension_numbers<[1], [0], [0], [1], [0, 0, 1, 1], [], []>} : vector<1x256xf32>, vector<256x1024xf32>, vector<1x1024xf32> -> vector<1x1024xf32>
    %34 = arith.addf %31, %33 : vector<1x1024xf32>
    %35 = vector.extract_strided_slice %34 {offsets = [0, 0], sizes = [1, 768], strides = [1, 1]} : vector<1x1024xf32> to vector<1x768xf32>
    %36 = arith.negf %35 : vector<1x768xf32>
    %37 = math.exp %36 : vector<1x768xf32>
    %cst_11 = arith.constant 1.000000e+00 : f32
    %38 = vector.broadcast %cst_11 : f32 to vector<1x768xf32>
    %39 = arith.addf %38, %37 : vector<1x768xf32>
    %40 = arith.divf %38, %39 : vector<1x768xf32>
    %41 = vector.extract_strided_slice %40 {offsets = [0, 0], sizes = [1, 256], strides = [1, 1]} : vector<1x768xf32> to vector<1x256xf32>
    %42 = vector.extract_strided_slice %40 {offsets = [0, 256], sizes = [1, 256], strides = [1, 1]} : vector<1x768xf32> to vector<1x256xf32>
    %43 = vector.extract_strided_slice %40 {offsets = [0, 512], sizes = [1, 256], strides = [1, 1]} : vector<1x768xf32> to vector<1x256xf32>
    %44 = vector.extract_strided_slice %34 {offsets = [0, 768], sizes = [1, 256], strides = [1, 1]} : vector<1x1024xf32> to vector<1x256xf32>
    %45 = math.tanh %44 : vector<1x256xf32>
    %46 = arith.mulf %42, %23 : vector<1x256xf32>
    %47 = arith.mulf %41, %45 : vector<1x256xf32>
    %48 = arith.addf %46, %47 : vector<1x256xf32>
    %49 = math.tanh %48 : vector<1x256xf32>
    %50 = arith.mulf %43, %49 : vector<1x256xf32>
    %c1_i32 = arith.constant 1 : i32
    %51 = vector.broadcast %c1_i32 : i32 to vector<8x256xi32>
    %52 = arith.cmpi eq, %8, %51 : vector<8x256xi32>
    %53 = vector.shape_cast %50 : vector<1x256xf32> to vector<1x256xf32>
    %54 = vector.broadcast %53 : vector<1x256xf32> to vector<8x256xf32>
    %55 = arith.select %52, %54, %30 : vector<8x256xi1>, vector<8x256xf32>
    %56 = vector.extract_strided_slice %5 {offsets = [2, 0], sizes = [1, 1024], strides = [1, 1]} : vector<8x1024xf32> to vector<1x1024xf32>
    %c0_12 = arith.constant 0 : index
    %c0_13 = arith.constant 0 : index
    %57 = vector.load %arg5[%c0_12, %c0_13] : memref<256x1024xf32, #tpu.memory_space<vmem>>, vector<256x1024xf32>
    %cst_14 = arith.constant dense<0.000000e+00> : vector<1x1024xf32>
    %58 = tpu.matmul %50, %57, %cst_14 {dimension_numbers = #tpu.dot_dimension_numbers<[1], [0], [0], [1], [0, 0, 1, 1], [], []>} : vector<1x256xf32>, vector<256x1024xf32>, vector<1x1024xf32> -> vector<1x1024xf32>
    %59 = arith.addf %56, %58 : vector<1x1024xf32>
    %60 = vector.extract_strided_slice %59 {offsets = [0, 0], sizes = [1, 768], strides = [1, 1]} : vector<1x1024xf32> to vector<1x768xf32>
    %61 = arith.negf %60 : vector<1x768xf32>
    %62 = math.exp %61 : vector<1x768xf32>
    %cst_15 = arith.constant 1.000000e+00 : f32
    %63 = vector.broadcast %cst_15 : f32 to vector<1x768xf32>
    %64 = arith.addf %63, %62 : vector<1x768xf32>
    %65 = arith.divf %63, %64 : vector<1x768xf32>
    %66 = vector.extract_strided_slice %65 {offsets = [0, 0], sizes = [1, 256], strides = [1, 1]} : vector<1x768xf32> to vector<1x256xf32>
    %67 = vector.extract_strided_slice %65 {offsets = [0, 256], sizes = [1, 256], strides = [1, 1]} : vector<1x768xf32> to vector<1x256xf32>
    %68 = vector.extract_strided_slice %65 {offsets = [0, 512], sizes = [1, 256], strides = [1, 1]} : vector<1x768xf32> to vector<1x256xf32>
    %69 = vector.extract_strided_slice %59 {offsets = [0, 768], sizes = [1, 256], strides = [1, 1]} : vector<1x1024xf32> to vector<1x256xf32>
    %70 = math.tanh %69 : vector<1x256xf32>
    %71 = arith.mulf %67, %48 : vector<1x256xf32>
    %72 = arith.mulf %66, %70 : vector<1x256xf32>
    %73 = arith.addf %71, %72 : vector<1x256xf32>
    %74 = math.tanh %73 : vector<1x256xf32>
    %75 = arith.mulf %68, %74 : vector<1x256xf32>
    %c2_i32 = arith.constant 2 : i32
    %76 = vector.broadcast %c2_i32 : i32 to vector<8x256xi32>
    %77 = arith.cmpi eq, %8, %76 : vector<8x256xi32>
    %78 = vector.shape_cast %75 : vector<1x256xf32> to vector<1x256xf32>
    %79 = vector.broadcast %78 : vector<1x256xf32> to vector<8x256xf32>
    %80 = arith.select %77, %79, %55 : vector<8x256xi1>, vector<8x256xf32>
    %81 = vector.extract_strided_slice %5 {offsets = [3, 0], sizes = [1, 1024], strides = [1, 1]} : vector<8x1024xf32> to vector<1x1024xf32>
    %c0_16 = arith.constant 0 : index
    %c0_17 = arith.constant 0 : index
    %82 = vector.load %arg5[%c0_16, %c0_17] : memref<256x1024xf32, #tpu.memory_space<vmem>>, vector<256x1024xf32>
    %cst_18 = arith.constant dense<0.000000e+00> : vector<1x1024xf32>
    %83 = tpu.matmul %75, %82, %cst_18 {dimension_numbers = #tpu.dot_dimension_numbers<[1], [0], [0], [1], [0, 0, 1, 1], [], []>} : vector<1x256xf32>, vector<256x1024xf32>, vector<1x1024xf32> -> vector<1x1024xf32>
    %84 = arith.addf %81, %83 : vector<1x1024xf32>
    %85 = vector.extract_strided_slice %84 {offsets = [0, 0], sizes = [1, 768], strides = [1, 1]} : vector<1x1024xf32> to vector<1x768xf32>
    %86 = arith.negf %85 : vector<1x768xf32>
    %87 = math.exp %86 : vector<1x768xf32>
    %cst_19 = arith.constant 1.000000e+00 : f32
    %88 = vector.broadcast %cst_19 : f32 to vector<1x768xf32>
    %89 = arith.addf %88, %87 : vector<1x768xf32>
    %90 = arith.divf %88, %89 : vector<1x768xf32>
    %91 = vector.extract_strided_slice %90 {offsets = [0, 0], sizes = [1, 256], strides = [1, 1]} : vector<1x768xf32> to vector<1x256xf32>
    %92 = vector.extract_strided_slice %90 {offsets = [0, 256], sizes = [1, 256], strides = [1, 1]} : vector<1x768xf32> to vector<1x256xf32>
    %93 = vector.extract_strided_slice %90 {offsets = [0, 512], sizes = [1, 256], strides = [1, 1]} : vector<1x768xf32> to vector<1x256xf32>
    %94 = vector.extract_strided_slice %84 {offsets = [0, 768], sizes = [1, 256], strides = [1, 1]} : vector<1x1024xf32> to vector<1x256xf32>
    %95 = math.tanh %94 : vector<1x256xf32>
    %96 = arith.mulf %92, %73 : vector<1x256xf32>
    %97 = arith.mulf %91, %95 : vector<1x256xf32>
    %98 = arith.addf %96, %97 : vector<1x256xf32>
    %99 = math.tanh %98 : vector<1x256xf32>
    %100 = arith.mulf %93, %99 : vector<1x256xf32>
    %c3_i32 = arith.constant 3 : i32
    %101 = vector.broadcast %c3_i32 : i32 to vector<8x256xi32>
    %102 = arith.cmpi eq, %8, %101 : vector<8x256xi32>
    %103 = vector.shape_cast %100 : vector<1x256xf32> to vector<1x256xf32>
    %104 = vector.broadcast %103 : vector<1x256xf32> to vector<8x256xf32>
    %105 = arith.select %102, %104, %80 : vector<8x256xi1>, vector<8x256xf32>
    %106 = vector.extract_strided_slice %5 {offsets = [4, 0], sizes = [1, 1024], strides = [1, 1]} : vector<8x1024xf32> to vector<1x1024xf32>
    %c0_20 = arith.constant 0 : index
    %c0_21 = arith.constant 0 : index
    %107 = vector.load %arg5[%c0_20, %c0_21] : memref<256x1024xf32, #tpu.memory_space<vmem>>, vector<256x1024xf32>
    %cst_22 = arith.constant dense<0.000000e+00> : vector<1x1024xf32>
    %108 = tpu.matmul %100, %107, %cst_22 {dimension_numbers = #tpu.dot_dimension_numbers<[1], [0], [0], [1], [0, 0, 1, 1], [], []>} : vector<1x256xf32>, vector<256x1024xf32>, vector<1x1024xf32> -> vector<1x1024xf32>
    %109 = arith.addf %106, %108 : vector<1x1024xf32>
    %110 = vector.extract_strided_slice %109 {offsets = [0, 0], sizes = [1, 768], strides = [1, 1]} : vector<1x1024xf32> to vector<1x768xf32>
    %111 = arith.negf %110 : vector<1x768xf32>
    %112 = math.exp %111 : vector<1x768xf32>
    %cst_23 = arith.constant 1.000000e+00 : f32
    %113 = vector.broadcast %cst_23 : f32 to vector<1x768xf32>
    %114 = arith.addf %113, %112 : vector<1x768xf32>
    %115 = arith.divf %113, %114 : vector<1x768xf32>
    %116 = vector.extract_strided_slice %115 {offsets = [0, 0], sizes = [1, 256], strides = [1, 1]} : vector<1x768xf32> to vector<1x256xf32>
    %117 = vector.extract_strided_slice %115 {offsets = [0, 256], sizes = [1, 256], strides = [1, 1]} : vector<1x768xf32> to vector<1x256xf32>
    %118 = vector.extract_strided_slice %115 {offsets = [0, 512], sizes = [1, 256], strides = [1, 1]} : vector<1x768xf32> to vector<1x256xf32>
    %119 = vector.extract_strided_slice %109 {offsets = [0, 768], sizes = [1, 256], strides = [1, 1]} : vector<1x1024xf32> to vector<1x256xf32>
    %120 = math.tanh %119 : vector<1x256xf32>
    %121 = arith.mulf %117, %98 : vector<1x256xf32>
    %122 = arith.mulf %116, %120 : vector<1x256xf32>
    %123 = arith.addf %121, %122 : vector<1x256xf32>
    %124 = math.tanh %123 : vector<1x256xf32>
    %125 = arith.mulf %118, %124 : vector<1x256xf32>
    %c4_i32 = arith.constant 4 : i32
    %126 = vector.broadcast %c4_i32 : i32 to vector<8x256xi32>
    %127 = arith.cmpi eq, %8, %126 : vector<8x256xi32>
    %128 = vector.shape_cast %125 : vector<1x256xf32> to vector<1x256xf32>
    %129 = vector.broadcast %128 : vector<1x256xf32> to vector<8x256xf32>
    %130 = arith.select %127, %129, %105 : vector<8x256xi1>, vector<8x256xf32>
    %131 = vector.extract_strided_slice %5 {offsets = [5, 0], sizes = [1, 1024], strides = [1, 1]} : vector<8x1024xf32> to vector<1x1024xf32>
    %c0_24 = arith.constant 0 : index
    %c0_25 = arith.constant 0 : index
    %132 = vector.load %arg5[%c0_24, %c0_25] : memref<256x1024xf32, #tpu.memory_space<vmem>>, vector<256x1024xf32>
    %cst_26 = arith.constant dense<0.000000e+00> : vector<1x1024xf32>
    %133 = tpu.matmul %125, %132, %cst_26 {dimension_numbers = #tpu.dot_dimension_numbers<[1], [0], [0], [1], [0, 0, 1, 1], [], []>} : vector<1x256xf32>, vector<256x1024xf32>, vector<1x1024xf32> -> vector<1x1024xf32>
    %134 = arith.addf %131, %133 : vector<1x1024xf32>
    %135 = vector.extract_strided_slice %134 {offsets = [0, 0], sizes = [1, 768], strides = [1, 1]} : vector<1x1024xf32> to vector<1x768xf32>
    %136 = arith.negf %135 : vector<1x768xf32>
    %137 = math.exp %136 : vector<1x768xf32>
    %cst_27 = arith.constant 1.000000e+00 : f32
    %138 = vector.broadcast %cst_27 : f32 to vector<1x768xf32>
    %139 = arith.addf %138, %137 : vector<1x768xf32>
    %140 = arith.divf %138, %139 : vector<1x768xf32>
    %141 = vector.extract_strided_slice %140 {offsets = [0, 0], sizes = [1, 256], strides = [1, 1]} : vector<1x768xf32> to vector<1x256xf32>
    %142 = vector.extract_strided_slice %140 {offsets = [0, 256], sizes = [1, 256], strides = [1, 1]} : vector<1x768xf32> to vector<1x256xf32>
    %143 = vector.extract_strided_slice %140 {offsets = [0, 512], sizes = [1, 256], strides = [1, 1]} : vector<1x768xf32> to vector<1x256xf32>
    %144 = vector.extract_strided_slice %134 {offsets = [0, 768], sizes = [1, 256], strides = [1, 1]} : vector<1x1024xf32> to vector<1x256xf32>
    %145 = math.tanh %144 : vector<1x256xf32>
    %146 = arith.mulf %142, %123 : vector<1x256xf32>
    %147 = arith.mulf %141, %145 : vector<1x256xf32>
    %148 = arith.addf %146, %147 : vector<1x256xf32>
    %149 = math.tanh %148 : vector<1x256xf32>
    %150 = arith.mulf %143, %149 : vector<1x256xf32>
    %c5_i32 = arith.constant 5 : i32
    %151 = vector.broadcast %c5_i32 : i32 to vector<8x256xi32>
    %152 = arith.cmpi eq, %8, %151 : vector<8x256xi32>
    %153 = vector.shape_cast %150 : vector<1x256xf32> to vector<1x256xf32>
    %154 = vector.broadcast %153 : vector<1x256xf32> to vector<8x256xf32>
    %155 = arith.select %152, %154, %130 : vector<8x256xi1>, vector<8x256xf32>
    %156 = vector.extract_strided_slice %5 {offsets = [6, 0], sizes = [1, 1024], strides = [1, 1]} : vector<8x1024xf32> to vector<1x1024xf32>
    %c0_28 = arith.constant 0 : index
    %c0_29 = arith.constant 0 : index
    %157 = vector.load %arg5[%c0_28, %c0_29] : memref<256x1024xf32, #tpu.memory_space<vmem>>, vector<256x1024xf32>
    %cst_30 = arith.constant dense<0.000000e+00> : vector<1x1024xf32>
    %158 = tpu.matmul %150, %157, %cst_30 {dimension_numbers = #tpu.dot_dimension_numbers<[1], [0], [0], [1], [0, 0, 1, 1], [], []>} : vector<1x256xf32>, vector<256x1024xf32>, vector<1x1024xf32> -> vector<1x1024xf32>
    %159 = arith.addf %156, %158 : vector<1x1024xf32>
    %160 = vector.extract_strided_slice %159 {offsets = [0, 0], sizes = [1, 768], strides = [1, 1]} : vector<1x1024xf32> to vector<1x768xf32>
    %161 = arith.negf %160 : vector<1x768xf32>
    %162 = math.exp %161 : vector<1x768xf32>
    %cst_31 = arith.constant 1.000000e+00 : f32
    %163 = vector.broadcast %cst_31 : f32 to vector<1x768xf32>
    %164 = arith.addf %163, %162 : vector<1x768xf32>
    %165 = arith.divf %163, %164 : vector<1x768xf32>
    %166 = vector.extract_strided_slice %165 {offsets = [0, 0], sizes = [1, 256], strides = [1, 1]} : vector<1x768xf32> to vector<1x256xf32>
    %167 = vector.extract_strided_slice %165 {offsets = [0, 256], sizes = [1, 256], strides = [1, 1]} : vector<1x768xf32> to vector<1x256xf32>
    %168 = vector.extract_strided_slice %165 {offsets = [0, 512], sizes = [1, 256], strides = [1, 1]} : vector<1x768xf32> to vector<1x256xf32>
    %169 = vector.extract_strided_slice %159 {offsets = [0, 768], sizes = [1, 256], strides = [1, 1]} : vector<1x1024xf32> to vector<1x256xf32>
    %170 = math.tanh %169 : vector<1x256xf32>
    %171 = arith.mulf %167, %148 : vector<1x256xf32>
    %172 = arith.mulf %166, %170 : vector<1x256xf32>
    %173 = arith.addf %171, %172 : vector<1x256xf32>
    %174 = math.tanh %173 : vector<1x256xf32>
    %175 = arith.mulf %168, %174 : vector<1x256xf32>
    %c6_i32 = arith.constant 6 : i32
    %176 = vector.broadcast %c6_i32 : i32 to vector<8x256xi32>
    %177 = arith.cmpi eq, %8, %176 : vector<8x256xi32>
    %178 = vector.shape_cast %175 : vector<1x256xf32> to vector<1x256xf32>
    %179 = vector.broadcast %178 : vector<1x256xf32> to vector<8x256xf32>
    %180 = arith.select %177, %179, %155 : vector<8x256xi1>, vector<8x256xf32>
    %181 = vector.extract_strided_slice %5 {offsets = [7, 0], sizes = [1, 1024], strides = [1, 1]} : vector<8x1024xf32> to vector<1x1024xf32>
    %c0_32 = arith.constant 0 : index
    %c0_33 = arith.constant 0 : index
    %182 = vector.load %arg5[%c0_32, %c0_33] : memref<256x1024xf32, #tpu.memory_space<vmem>>, vector<256x1024xf32>
    %cst_34 = arith.constant dense<0.000000e+00> : vector<1x1024xf32>
    %183 = tpu.matmul %175, %182, %cst_34 {dimension_numbers = #tpu.dot_dimension_numbers<[1], [0], [0], [1], [0, 0, 1, 1], [], []>} : vector<1x256xf32>, vector<256x1024xf32>, vector<1x1024xf32> -> vector<1x1024xf32>
    %184 = arith.addf %181, %183 : vector<1x1024xf32>
    %185 = vector.extract_strided_slice %184 {offsets = [0, 0], sizes = [1, 768], strides = [1, 1]} : vector<1x1024xf32> to vector<1x768xf32>
    %186 = arith.negf %185 : vector<1x768xf32>
    %187 = math.exp %186 : vector<1x768xf32>
    %cst_35 = arith.constant 1.000000e+00 : f32
    %188 = vector.broadcast %cst_35 : f32 to vector<1x768xf32>
    %189 = arith.addf %188, %187 : vector<1x768xf32>
    %190 = arith.divf %188, %189 : vector<1x768xf32>
    %191 = vector.extract_strided_slice %190 {offsets = [0, 0], sizes = [1, 256], strides = [1, 1]} : vector<1x768xf32> to vector<1x256xf32>
    %192 = vector.extract_strided_slice %190 {offsets = [0, 256], sizes = [1, 256], strides = [1, 1]} : vector<1x768xf32> to vector<1x256xf32>
    %193 = vector.extract_strided_slice %190 {offsets = [0, 512], sizes = [1, 256], strides = [1, 1]} : vector<1x768xf32> to vector<1x256xf32>
    %194 = vector.extract_strided_slice %184 {offsets = [0, 768], sizes = [1, 256], strides = [1, 1]} : vector<1x1024xf32> to vector<1x256xf32>
    %195 = math.tanh %194 : vector<1x256xf32>
    %196 = arith.mulf %192, %173 : vector<1x256xf32>
    %197 = arith.mulf %191, %195 : vector<1x256xf32>
    %198 = arith.addf %196, %197 : vector<1x256xf32>
    %199 = math.tanh %198 : vector<1x256xf32>
    %200 = arith.mulf %193, %199 : vector<1x256xf32>
    %c7_i32 = arith.constant 7 : i32
    %201 = vector.broadcast %c7_i32 : i32 to vector<8x256xi32>
    %202 = arith.cmpi eq, %8, %201 : vector<8x256xi32>
    %203 = vector.shape_cast %200 : vector<1x256xf32> to vector<1x256xf32>
    %204 = vector.broadcast %203 : vector<1x256xf32> to vector<8x256xf32>
    %205 = arith.select %202, %204, %180 : vector<8x256xi1>, vector<8x256xf32>
    %206 = tpu.iota {dimensions = array<i32: 1>} : vector<2x8xi32>
    %c0_36 = arith.constant 0 : index
    %c0_37 = arith.constant 0 : index
    %207 = vector.load %arg1[%c0_36, %c0_37] : memref<2x1xi32, #tpu.memory_space<vmem>>, vector<2x1xi32>
    %208 = vector.broadcast %207 : vector<2x1xi32> to vector<2x8xi32>
    %209 = arith.cmpi eq, %206, %208 : vector<2x8xi32>
    %210 = arith.extui %209 : vector<2x8xi1> to vector<2x8xi32>
    %211 = arith.sitofp %210 : vector<2x8xi32> to vector<2x8xf32>
    %cst_38 = arith.constant dense<0.000000e+00> : vector<2x256xf32>
    %212 = tpu.matmul %211, %205, %cst_38 {dimension_numbers = #tpu.dot_dimension_numbers<[1], [0], [0], [1], [0, 0, 1, 1], [], []>} : vector<2x8xf32>, vector<8x256xf32>, vector<2x256xf32> -> vector<2x256xf32>
    %213 = tpu.iota {dimensions = array<i32: 1>} : vector<2x8xi32>
    %c0_39 = arith.constant 0 : index
    %c0_40 = arith.constant 0 : index
    %214 = vector.load %arg2[%c0_39, %c0_40] : memref<2x1xi32, #tpu.memory_space<vmem>>, vector<2x1xi32>
    %215 = vector.broadcast %214 : vector<2x1xi32> to vector<2x8xi32>
    %216 = arith.cmpi eq, %213, %215 : vector<2x8xi32>
    %217 = arith.extui %216 : vector<2x8xi1> to vector<2x8xi32>
    %218 = arith.sitofp %217 : vector<2x8xi32> to vector<2x8xf32>
    %c0_41 = arith.constant 0 : index
    %c0_42 = arith.constant 0 : index
    %219 = vector.load %arg8[%c0_41, %c0_42] : memref<8x256xf32, #tpu.memory_space<vmem>>, vector<8x256xf32>
    %cst_43 = arith.constant dense<0.000000e+00> : vector<2x256xf32>
    %220 = tpu.matmul %218, %219, %cst_43 {dimension_numbers = #tpu.dot_dimension_numbers<[1], [0], [0], [1], [0, 0, 1, 1], [], []>} : vector<2x8xf32>, vector<8x256xf32>, vector<2x256xf32> -> vector<2x256xf32>
    %c0_44 = arith.constant 0 : index
    %c0_45 = arith.constant 0 : index
    %221 = vector.load %arg7[%c0_44, %c0_45] : memref<256x256xf32, #tpu.memory_space<vmem>>, vector<256x256xf32>
    %cst_46 = arith.constant dense<0.000000e+00> : vector<2x256xf32>
    %222 = tpu.matmul %212, %221, %cst_46 {dimension_numbers = #tpu.dot_dimension_numbers<[1], [0], [0], [1], [0, 0, 1, 1], [], []>} : vector<2x256xf32>, vector<256x256xf32>, vector<2x256xf32> -> vector<2x256xf32>
    %223 = arith.addf %222, %220 : vector<2x256xf32>
    %c0_47 = arith.constant 0 : index
    %c0_48 = arith.constant 0 : index
    %224 = vector.load %arg9[%c0_47, %c0_48] : memref<1x256xf32, #tpu.memory_space<vmem>>, vector<1x256xf32>
    %225 = vector.broadcast %224 : vector<1x256xf32> to vector<2x256xf32>
    %226 = arith.addf %223, %225 : vector<2x256xf32>
    %cst_49 = arith.constant 0.000000e+00 : f32
    %227 = vector.broadcast %cst_49 : f32 to vector<2x256xf32>
    %228 = arith.maximumf %226, %227 : vector<2x256xf32>
    %c0_50 = arith.constant 0 : index
    %c0_51 = arith.constant 0 : index
    %229 = vector.load %arg10[%c0_50, %c0_51] : memref<256x256xf32, #tpu.memory_space<vmem>>, vector<256x256xf32>
    %cst_52 = arith.constant dense<0.000000e+00> : vector<2x256xf32>
    %230 = tpu.matmul %228, %229, %cst_52 {dimension_numbers = #tpu.dot_dimension_numbers<[1], [0], [0], [1], [0, 0, 1, 1], [], []>} : vector<2x256xf32>, vector<256x256xf32>, vector<2x256xf32> -> vector<2x256xf32>
    %c0_53 = arith.constant 0 : index
    %c0_54 = arith.constant 0 : index
    %231 = vector.load %arg11[%c0_53, %c0_54] : memref<1x256xf32, #tpu.memory_space<vmem>>, vector<1x256xf32>
    %232 = vector.broadcast %231 : vector<1x256xf32> to vector<2x256xf32>
    %233 = arith.addf %230, %232 : vector<2x256xf32>
    %cst_55 = arith.constant 0.000000e+00 : f32
    %234 = vector.broadcast %cst_55 : f32 to vector<2x256xf32>
    %235 = arith.maximumf %233, %234 : vector<2x256xf32>
    %c0_56 = arith.constant 0 : index
    %c0_57 = arith.constant 0 : index
    %236 = vector.load %arg12[%c0_56, %c0_57] : memref<1x256xf32, #tpu.memory_space<vmem>>, vector<1x256xf32>
    %237 = vector.broadcast %236 : vector<1x256xf32> to vector<2x256xf32>
    %238 = arith.mulf %235, %237 : vector<2x256xf32>
    %cst_58 = arith.constant dense<0.000000e+00> : vector<2xf32>
    %239 = vector.multi_reduction <add>, %238, %cst_58 [1] : vector<2x256xf32> to vector<2xf32>
    %240 = vector.shape_cast %239 : vector<2xf32> to vector<2x1xf32>
    %c0_59 = arith.constant 0 : index
    %241 = memref.load %arg0[%c0_59] : memref<1xf32, #tpu.memory_space<smem>>
    %242 = vector.broadcast %241 : f32 to vector<2x1xf32>
    %243 = arith.addf %240, %242 : vector<2x1xf32>
    %244 = arith.negf %243 : vector<2x1xf32>
    %245 = math.exp %244 : vector<2x1xf32>
    %cst_60 = arith.constant 1.000000e+00 : f32
    %246 = vector.broadcast %cst_60 : f32 to vector<2x1xf32>
    %247 = arith.addf %246, %245 : vector<2x1xf32>
    %248 = arith.divf %246, %247 : vector<2x1xf32>
    %249 = vector.shape_cast %248 : vector<2x1xf32> to vector<2x1xf32>
    %250 = vector.broadcast %249 : vector<2x1xf32> to vector<2x128xf32>
    %c0_61 = arith.constant 0 : index
    %c0_62 = arith.constant 0 : index
    %251 = vector.load %arg13[%c0_61, %c0_62] : memref<2x128xf32, #tpu.memory_space<vmem>>, vector<2x128xf32>
    tpu.vector_store %arg13[%c0_61, %c0_62], %250 {strides = array<i32>} : memref<2x128xf32, #tpu.memory_space<vmem>>, vector<2x128xf32>,
    return
  }
}

</mosaic_0001>

<llo_original>
// kernel: shield_forward_pallas.1
$region0: #{shield_forward_pallas.1}
  #allocation0 [shape = 'u32[]', space=smem, size = 0x4, offset = 0x4, fixed_abs, tag = 'smem constant byte address 0x4 - core index']
  #allocation1 [shape = 'u32[72,128]{1,0:T(1,128)}', space=vmem, size = 0x9000, scoped, tag = 'internal scratch']
  #allocation2 [shape = 'f32[1]{0:T(128)S(6)}', space=smem, size = 0x200, scoped, tag = 'scoped memory for shield_forward_pallas.1']
  %s0 = inlined_call_operand.<no memory space> [shape: f32[1], index: 0, kind: input, shape index: {}]
  %s1 = inlined_call_operand.vmem [shape: s32[2,1], index: 1, kind: input, shape index: {}]
  %s2 = inlined_call_operand.vmem [shape: s32[2,1], index: 2, kind: input, shape index: {}]
  %s3 = inlined_call_operand.vmem [shape: f32[8,8], index: 3, kind: input, shape index: {}]
  %s4 = inlined_call_operand.hbm [shape: f32[8,1024], index: 4, kind: input, shape index: {}]
  %s5 = inlined_call_operand.hbm [shape: f32[256,1024], index: 5, kind: input, shape index: {}]
  %s6 = inlined_call_operand.vmem [shape: f32[1,1024], index: 6, kind: input, shape index: {}]
  %s7 = inlined_call_operand.hbm [shape: f32[256,256], index: 7, kind: input, shape index: {}]
  %s8 = inlined_call_operand.vmem [shape: f32[8,256], index: 8, kind: input, shape index: {}]
  %s9 = inlined_call_operand.vmem [shape: f32[1,256], index: 9, kind: input, shape index: {}]
  %s10 = inlined_call_operand.hbm [shape: f32[256,256], index: 10, kind: input, shape index: {}]
  %s11 = inlined_call_operand.vmem [shape: f32[1,256], index: 11, kind: input, shape index: {}]
  %s12 = inlined_call_operand.vmem [shape: f32[1,256], index: 12, kind: input, shape index: {}]
  %s13 = inlined_call_operand.vmem [shape: f32[2,128], index: 13, kind: output, shape index: {}]
  %s14 = sld [smem:[#allocation0]]
  $region78: #{shield_forward_pallas.1} parent=0
    _
  %s16 = ssub.s32 1, %s14
  %s17 = scalar_select 0, %s16, %s14
  %18 = sst [smem:[#allocation2]] %s0
  $region1: #{shield_forward_pallas.1} parent=0
    #allocation3 [shape = 'u8[32768]{0}', space=vmem, size = 0x8000, scoped, tag = 'input window, operand 4, single buffered']
    #allocation4 [shape = 's32[1]{0}', space=sflag, size = 0x4, scoped, tag = 'scoped memory for shield_forward_pallas.1']
    #allocation5 [shape = 'u8[1048576]{0}', space=vmem, size = 0x100000, scoped, tag = 'input window, operand 5, single buffered']
    #allocation6 [shape = 's32[1]{0}', space=sflag, size = 0x4, scoped, tag = 'scoped memory for shield_forward_pallas.1']
    #allocation7 [shape = 'u8[262144]{0}', space=vmem, size = 0x40000, scoped, tag = 'input window, operand 7, single buffered']
    #allocation8 [shape = 'u8[262144]{0}', space=vmem, size = 0x40000, scoped, tag = 'input window, operand 10, single buffered']
    #allocation9 [shape = 's32[1]{0}', space=sflag, size = 0x4, scoped, tag = 'scoped memory for shield_forward_pallas.1']
    %19 = vsyncpa [#allocation4], 0
    %20 = vsyncpa [#allocation6], 0
    %21 = vsyncpa [#allocation9], 0
    // Predicated region
    $region2: #{shield_forward_pallas.1} parent=1 // pred_check
      _
    $region3: #{shield_forward_pallas.1} parent=1 // pred_check_branch
      %23 = sbr.rel (0) target = $region5
    $region4: #{shield_forward_pallas.1} parent=1 // pred_region
      _
    $region5: #{shield_forward_pallas.1} parent=1 // pred_fallthru
      _
    // Predicated region
    $region6: #{shield_forward_pallas.1} parent=1 // pred_check
      _
    $region7: #{shield_forward_pallas.1} parent=1 // pred_check_branch
      %25 = sbr.rel (0) target = $region9
    $region8: #{shield_forward_pallas.1} parent=1 // pred_region
      _
    $region9: #{shield_forward_pallas.1} parent=1 // pred_fallthru
      _
    // Predicated region
    $region10: #{shield_forward_pallas.1} parent=1 // pred_check
      _
    $region11: #{shield_forward_pallas.1} parent=1 // pred_check_branch
      %27 = sbr.rel (0) target = $region13
    $region12: #{shield_forward_pallas.1} parent=1 // pred_region
      _
    $region13: #{shield_forward_pallas.1} parent=1 // pred_fallthru
      _
    // Predicated region
    $region14: #{shield_forward_pallas.1} parent=1 // pred_check
      _
    $region15: #{shield_forward_pallas.1} parent=1 // pred_check_branch
      %29 = sbr.rel (0) target = $region17
    $region16: #{shield_forward_pallas.1} parent=1 // pred_region
      _
    $region17: #{shield_forward_pallas.1} parent=1 // pred_fallthru
      _
    // Predicated region
    $region18: #{shield_forward_pallas.1} parent=1 // pred_check
      _
    $region19: #{shield_forward_pallas.1} parent=1 // pred_check_branch
      %31 = sbr.rel (0) target = $region21
    $region20: #{shield_forward_pallas.1} parent=1 // pred_region
      %33 = vsyncadd [#allocation4], 0
      %s35 = sshll.u32 %s4, 4
      %s36 = int_to_ptr.hbm [resolvable:$true] %s35
      %s37 = sshll.u32 [#allocation3], 4
      %s38 = int_to_ptr.vmem [resolvable:$true] %s37
      %40 = dma.hbm_to_vmem [thread:$0]  %s36, 1024, %s38, [#allocation4]
    $region21: #{shield_forward_pallas.1} parent=1 // pred_fallthru
      _
    // Predicated region
    $region22: #{shield_forward_pallas.1} parent=1 // pred_check
      _
    $region23: #{shield_forward_pallas.1} parent=1 // pred_check_branch
      %42 = sbr.rel (0) target = $region25
    $region24: #{shield_forward_pallas.1} parent=1 // pred_region
      %44 = vsyncadd [#allocation6], 0
      %s45 = sshll.u32 %s5, 4
      %s46 = int_to_ptr.hbm [resolvable:$true] %s45
      %s47 = sshll.u32 [#allocation5], 4
      %s48 = int_to_ptr.vmem [resolvable:$true] %s47
      %53 = dma.hbm_to_vmem [thread:$0]  %s46, 32768, %s48, [#allocation6], 1024, 1024, 64
    $region25: #{shield_forward_pallas.1} parent=1 // pred_fallthru
      _
    // Predicated region
    $region26: #{shield_forward_pallas.1} parent=1 // pred_check
      _
    $region27: #{shield_forward_pallas.1} parent=1 // pred_check_branch
      %55 = sbr.rel (0) target = $region29
    $region28: #{shield_forward_pallas.1} parent=1 // pred_region
      _
    $region29: #{shield_forward_pallas.1} parent=1 // pred_fallthru
      _
    // Predicated region
    $region30: #{shield_forward_pallas.1} parent=1 // pred_check
      _
    $region31: #{shield_forward_pallas.1} parent=1 // pred_check_branch
      %57 = sbr.rel (0) target = $region33
    $region32: #{shield_forward_pallas.1} parent=1 // pred_region
      %59 = vsyncadd [#allocation6], 0
      %s60 = sshll.u32 %s7, 4
      %s61 = int_to_ptr.hbm [resolvable:$true] %s60
      %s62 = sshll.u32 [#allocation7], 4
      %s63 = int_to_ptr.vmem [resolvable:$true] %s62
      %68 = dma.hbm_to_vmem [thread:$0]  %s61, 8192, %s63, [#allocation6], 256, 256, 16
    $region33: #{shield_forward_pallas.1} parent=1 // pred_fallthru
      _
    // Predicated region
    $region34: #{shield_forward_pallas.1} parent=1 // pred_check
      _
    $region35: #{shield_forward_pallas.1} parent=1 // pred_check_branch
      %70 = sbr.rel (0) target = $region37
    $region36: #{shield_forward_pallas.1} parent=1 // pred_region
      _
    $region37: #{shield_forward_pallas.1} parent=1 // pred_fallthru
      _
    // Predicated region
    $region38: #{shield_forward_pallas.1} parent=1 // pred_check
      _
    $region39: #{shield_forward_pallas.1} parent=1 // pred_check_branch
      %72 = sbr.rel (0) target = $region41
    $region40: #{shield_forward_pallas.1} parent=1 // pred_region
      _
    $region41: #{shield_forward_pallas.1} parent=1 // pred_fallthru
      _
    // Predicated region
    $region42: #{shield_forward_pallas.1} parent=1 // pred_check
      _
    $region43: #{shield_forward_pallas.1} parent=1 // pred_check_branch
      %74 = sbr.rel (0) target = $region45
    $region44: #{shield_forward_pallas.1} parent=1 // pred_region
      %76 = vsyncadd [#allocation9], 0
      %s77 = sshll.u32 %s10, 4
      %s78 = int_to_ptr.hbm [resolvable:$true] %s77
      %s79 = sshll.u32 [#allocation8], 4
      %s80 = int_to_ptr.vmem [resolvable:$true] %s79
      %85 = dma.hbm_to_vmem [thread:$0]  %s78, 8192, %s80, [#allocation9], 256, 256, 16
    $region45: #{shield_forward_pallas.1} parent=1 // pred_fallthru
      _
    // Predicated region
    $region46: #{shield_forward_pallas.1} parent=1 // pred_check
      _
    $region47: #{shield_forward_pallas.1} parent=1 // pred_check_branch
      %87 = sbr.rel (0) target = $region49
    $region48: #{shield_forward_pallas.1} parent=1 // pred_region
      _
    $region49: #{shield_forward_pallas.1} parent=1 // pred_fallthru
      _
    // Predicated region
    $region50: #{shield_forward_pallas.1} parent=1 // pred_check
      _
    $region51: #{shield_forward_pallas.1} parent=1 // pred_check_branch
      %89 = sbr.rel (0) target = $region53
    $region52: #{shield_forward_pallas.1} parent=1 // pred_region
      _
    $region53: #{shield_forward_pallas.1} parent=1 // pred_fallthru
      _
    // Predicated region
    $region54: #{shield_forward_pallas.1} parent=1 // pred_check
      _
    $region55: #{shield_forward_pallas.1} parent=1 // pred_check_branch
      %91 = sbr.rel (0) target = $region57
    $region56: #{shield_forward_pallas.1} parent=1 // pred_region
      %93 = dma.done [#allocation4], 1024
    $region57: #{shield_forward_pallas.1} parent=1 // pred_fallthru
      _
    // Predicated region
    $region58: #{shield_forward_pallas.1} parent=1 // pred_check
      _
    $region59: #{shield_forward_pallas.1} parent=1 // pred_check_branch
      %95 = sbr.rel (0) target = $region61
    $region60: #{shield_forward_pallas.1} parent=1 // pred_region
      %97 = dma.done [#allocation6], 32768
    $region61: #{shield_forward_pallas.1} parent=1 // pred_fallthru
      _
    // Predicated region
    $region62: #{shield_forward_pallas.1} parent=1 // pred_check
      _
    $region63: #{shield_forward_pallas.1} parent=1 // pred_check_branch
      %99 = sbr.rel (0) target = $region65
    $region64: #{shield_forward_pallas.1} parent=1 // pred_region
      %101 = dma.done [#allocation6], 8192
    $region65: #{shield_forward_pallas.1} parent=1 // pred_fallthru
      _
    // Predicated region
    $region66: #{shield_forward_pallas.1} parent=1 // pred_check
      _
    $region67: #{shield_forward_pallas.1} parent=1 // pred_check_branch
      %103 = sbr.rel (0) target = $region69
    $region68: #{shield_forward_pallas.1} parent=1 // pred_region
      %105 = dma.done [#allocation9], 8192
    $region69: #{shield_forward_pallas.1} parent=1 // pred_fallthru
      _
    %v106 = vld [vmem:[%s3] sm:$0xff]
    %v107 = vld [vmem:[#allocation3] sm:$0xff]
    %v108 = vld [vmem:[#allocation3 + $0x8] sm:$0xff]
    %v109 = vld [vmem:[#allocation3 + $0x10] sm:$0xff]
    %v110 = vld [vmem:[#allocation3 + $0x18] sm:$0xff]
    %v111 = vld [vmem:[#allocation3 + $0x20] sm:$0xff]
    %v112 = vld [vmem:[#allocation3 + $0x28] sm:$0xff]
    %v113 = vld [vmem:[#allocation3 + $0x30] sm:$0xff]
    %v114 = vld [vmem:[#allocation3 + $0x38] sm:$0xff]
    %v115 = vld [vmem:[%s6] sm:$0xff]
    %v117 = vperm.slane %v115, 0
    %v118 = vperm.slane %v115, 1
    %v119 = vperm.slane %v115, 2
    %v120 = vperm.slane %v115, 3
    %v121 = vperm.slane %v115, 4
    %v122 = vperm.slane %v115, 5
    %v123 = vperm.slane %v115, 6
    %v124 = vperm.slane %v115, 7
    %vm133 = vcmask 64512
    %v135 = vsel %vm133, %v106, 0
    %137 = vmatpush.msra.mxu0 0.0
    %138 = vmatpush.msra.mxu0 0.0
    %139 = vmatpush.msra.mxu0 0.0
    %140 = vmatpush.msra.mxu0 0.0
    %141 = vmatpush.msra.mxu0 0.0
    %142 = vmatpush.msra.mxu0 0.0
    %143 = vmatpush.msra.mxu0 0.0
    %144 = vmatpush.msra.mxu0 0.0
    %145 = vmatpush.msra.mxu0 0.0
    %146 = vmatpush.msra.mxu0 0.0
    %147 = vmatpush.msra.mxu0 0.0
    %148 = vmatpush.msra.mxu0 0.0
    %149 = vmatpush.msra.mxu0 0.0
    %150 = vmatpush.msra.mxu0 0.0
    %151 = vmatpush.msra.mxu0 0.0
    %152 = vmatpush.msra.mxu0 %v107
    %153 = vmatmul.f32.gmra.mxu0 %v135
    %v154 = vpop.f32.mrf.mxu0
    %v155 = vadd.f32 %v117, %v154
    %156 = vdwg.mxu0
    %157 = vmatpush.msra.mxu0 0.0
    %158 = vmatpush.msra.mxu0 0.0
    %159 = vmatpush.msra.mxu0 0.0
    %160 = vmatpush.msra.mxu0 0.0
    %161 = vmatpush.msra.mxu0 0.0
    %162 = vmatpush.msra.mxu0 0.0
    %163 = vmatpush.msra.mxu0 0.0
    %164 = vmatpush.msra.mxu0 0.0
    %165 = vmatpush.msra.mxu0 0.0
    %166 = vmatpush.msra.mxu0 0.0
    %167 = vmatpush.msra.mxu0 0.0
    %168 = vmatpush.msra.mxu0 0.0
    %169 = vmatpush.msra.mxu0 0.0
    %170 = vmatpush.msra.mxu0 0.0
    %171 = vmatpush.msra.mxu0 0.0
    %172 = vmatpush.msra.mxu0 %v108
    %173 = vmatmul.f32.gmra.mxu0 %v135
    %v174 = vpop.f32.mrf.mxu0
    %v175 = vadd.f32 %v118, %v174
    %176 = vdwg.mxu0
    %177 = vmatpush.msra.mxu0 0.0
    %178 = vmatpush.msra.mxu0 0.0
    %179 = vmatpush.msra.mxu0 0.0
    %180 = vmatpush.msra.mxu0 0.0
    %181 = vmatpush.msra.mxu0 0.0
    %182 = vmatpush.msra.mxu0 0.0
    %183 = vmatpush.msra.mxu0 0.0
    %184 = vmatpush.msra.mxu0 0.0
    %185 = vmatpush.msra.mxu0 0.0
    %186 = vmatpush.msra.mxu0 0.0
    %187 = vmatpush.msra.mxu0 0.0
    %188 = vmatpush.msra.mxu0 0.0
    %189 = vmatpush.msra.mxu0 0.0
    %190 = vmatpush.msra.mxu0 0.0
    %191 = vmatpush.msra.mxu0 0.0
    %192 = vmatpush.msra.mxu0 %v109
    %193 = vmatmul.f32.gmra.mxu0 %v135
    %v194 = vpop.f32.mrf.mxu0
    %v195 = vadd.f32 %v119, %v194
    %196 = vdwg.mxu0
    %197 = vmatpush.msra.mxu0 0.0
    %198 = vmatpush.msra.mxu0 0.0
    %199 = vmatpush.msra.mxu0 0.0
    %200 = vmatpush.msra.mxu0 0.0
    %201 = vmatpush.msra.mxu0 0.0
    %202 = vmatpush.msra.mxu0 0.0
    %203 = vmatpush.msra.mxu0 0.0
    %204 = vmatpush.msra.mxu0 0.0
    %205 = vmatpush.msra.mxu0 0.0
    %206 = vmatpush.msra.mxu0 0.0
    %207 = vmatpush.msra.mxu0 0.0
    %208 = vmatpush.msra.mxu0 0.0
    %209 = vmatpush.msra.mxu0 0.0
    %210 = vmatpush.msra.mxu0 0.0
    %211 = vmatpush.msra.mxu0 0.0
    %212 = vmatpush.msra.mxu0 %v110
    %213 = vmatmul.f32.gmra.mxu0 %v135
    %v214 = vpop.f32.mrf.mxu0
    %v215 = vadd.f32 %v120, %v214
    %216 = vdwg.mxu0
    %217 = vmatpush.msra.mxu0 0.0
    %218 = vmatpush.msra.mxu0 0.0
    %219 = vmatpush.msra.mxu0 0.0
    %220 = vmatpush.msra.mxu0 0.0
    %221 = vmatpush.msra.mxu0 0.0
    %222 = vmatpush.msra.mxu0 0.0
    %223 = vmatpush.msra.mxu0 0.0
    %224 = vmatpush.msra.mxu0 0.0
    %225 = vmatpush.msra.mxu0 0.0
    %226 = vmatpush.msra.mxu0 0.0
    %227 = vmatpush.msra.mxu0 0.0
    %228 = vmatpush.msra.mxu0 0.0
    %229 = vmatpush.msra.mxu0 0.0
    %230 = vmatpush.msra.mxu0 0.0
    %231 = vmatpush.msra.mxu0 0.0
    %232 = vmatpush.msra.mxu0 %v111
    %233 = vmatmul.f32.gmra.mxu0 %v135
    %v234 = vpop.f32.mrf.mxu0
    %v235 = vadd.f32 %v121, %v234
    %236 = vdwg.mxu0
    %237 = vmatpush.msra.mxu0 0.0
    %238 = vmatpush.msra.mxu0 0.0
    %239 = vmatpush.msra.mxu0 0.0
    %240 = vmatpush.msra.mxu0 0.0
    %241 = vmatpush.msra.mxu0 0.0
    %242 = vmatpush.msra.mxu0 0.0
    %243 = vmatpush.msra.mxu0 0.0
    %244 = vmatpush.msra.mxu0 0.0
    %245 = vmatpush.msra.mxu0 0.0
    %246 = vmatpush.msra.mxu0 0.0
    %247 = vmatpush.msra.mxu0 0.0
    %248 = vmatpush.msra.mxu0 0.0
    %249 = vmatpush.msra.mxu0 0.0
    %250 = vmatpush.msra.mxu0 0.0
    %251 = vmatpush.msra.mxu0 0.0
    %252 = vmatpush.msra.mxu0 %v112
    %253 = vmatmul.f32.gmra.mxu0 %v135
    %v254 = vpop.f32.mrf.mxu0
    %v255 = vadd.f32 %v122, %v254
    %256 = vdwg.mxu0
    %257 = vmatpush.msra.mxu0 0.0
    %258 = vmatpush.msra.mxu0 0.0
    %259 = vmatpush.msra.mxu0 0.0
    %260 = vmatpush.msra.mxu0 0.0
    %261 = vmatpush.msra.mxu0 0.0
    %262 = vmatpush.msra.mxu0 0.0
    %263 = vmatpush.msra.mxu0 0.0
    %264 = vmatpush.msra.mxu0 0.0
    %265 = vmatpush.msra.mxu0 0.0
    %266 = vmatpush.msra.mxu0 0.0
    %267 = vmatpush.msra.mxu0 0.0
    %268 = vmatpush.msra.mxu0 0.0
    %269 = vmatpush.msra.mxu0 0.0
    %270 = vmatpush.msra.mxu0 0.0
    %271 = vmatpush.msra.mxu0 0.0
    %272 = vmatpush.msra.mxu0 %v113
    %273 = vmatmul.f32.gmra.mxu0 %v135
    %v274 = vpop.f32.mrf.mxu0
    %v275 = vadd.f32 %v123, %v274
    %276 = vdwg.mxu0
    %277 = vmatpush.msra.mxu0 0.0
    %278 = vmatpush.msra.mxu0 0.0
    %279 = vmatpush.msra.mxu0 0.0
    %280 = vmatpush.msra.mxu0 0.0
    %281 = vmatpush.msra.mxu0 0.0
    %282 = vmatpush.msra.mxu0 0.0
    %283 = vmatpush.msra.mxu0 0.0
    %284 = vmatpush.msra.mxu0 0.0
    %285 = vmatpush.msra.mxu0 0.0
    %286 = vmatpush.msra.mxu0 0.0
    %287 = vmatpush.msra.mxu0 0.0
    %288 = vmatpush.msra.mxu0 0.0
    %289 = vmatpush.msra.mxu0 0.0
    %290 = vmatpush.msra.mxu0 0.0
    %291 = vmatpush.msra.mxu0 0.0
    %292 = vmatpush.msra.mxu0 %v114
    %293 = vmatmul.f32.gmra.mxu0 %v135
    %v294 = vpop.f32.mrf.mxu0
    %v295 = vadd.f32 %v124, %v294
    %296 = vdwg.mxu0
    %v297 = vlaneseq
    %v298 = vshrl.u32 %v297, 7
    %v299 = vxor.u32 %v155, 2147483648
    %v300 = vxor.u32 %v175, 2147483648
    %v301 = vxor.u32 %v195, 2147483648
    %v302 = vxor.u32 %v215, 2147483648
    %v303 = vxor.u32 %v235, 2147483648
    %v304 = vxor.u32 %v255, 2147483648
    %v305 = vmul.f32 %v299, 1.442695
    %v306 = vpow.pop %v305
    %v307 = vmul.f32 %v300, 1.442695
    %v308 = vpow.pop %v307
    %v309 = vmul.f32 %v301, 1.442695
    %v310 = vpow.pop %v309
    %v311 = vmul.f32 %v302, 1.442695
    %v312 = vpow.pop %v311
    %v313 = vmul.f32 %v303, 1.442695
    %v314 = vpow.pop %v313
    %v315 = vmul.f32 %v304, 1.442695
    %v316 = vpow.pop %v315
    %v317 = vadd.f32 %v306, 1.0
    %v318 = vadd.f32 %v308, 1.0
    %v319 = vadd.f32 %v310, 1.0
    %v320 = vadd.f32 %v312, 1.0
    %v321 = vadd.f32 %v314, 1.0
    %v322 = vadd.f32 %v316, 1.0
    %v323 = vrcp.pop %v317
    %v324 = vmul.f32 %v317, %v323
    %v325 = vsub.f32 1.0, %v324
    %v326 = vmul.f32 %v323, %v325
    %v327 = vadd.f32 %v323, %v326
    %vm328 = vweird.f32 %v317
    %vm329 = vweird.f32 %v323
    %vm330 = vmor %vm328, %vm329
    %v331 = vsel %vm330, %v323, %v327
    %v332 = vand.u32 2147483647, %v317
    %vm333 = vcmp.eq.f32.partialorder %v332, 8.507059e+37
    %v334 = vand.u32 %v317, 2147483648
    %v335 = vor.u32 1.1754944e-38, %v334
    %v336 = vsel %vm333, %v335, %v331
    %v337 = vmul.f32 1.0, %v336
    %v338 = vrcp.pop %v318
    %v339 = vmul.f32 %v318, %v338
    %v340 = vsub.f32 1.0, %v339
    %v341 = vmul.f32 %v338, %v340
    %v342 = vadd.f32 %v338, %v341
    %vm343 = vweird.f32 %v318
    %vm344 = vweird.f32 %v338
    %vm345 = vmor %vm343, %vm344
    %v346 = vsel %vm345, %v338, %v342
    %v347 = vand.u32 2147483647, %v318
    %vm348 = vcmp.eq.f32.partialorder %v347, 8.507059e+37
    %v349 = vand.u32 %v318, 2147483648
    %v350 = vor.u32 1.1754944e-38, %v349
    %v351 = vsel %vm348, %v350, %v346
    %v352 = vmul.f32 1.0, %v351
    %v353 = vrcp.pop %v319
    %v354 = vmul.f32 %v319, %v353
    %v355 = vsub.f32 1.0, %v354
    %v356 = vmul.f32 %v353, %v355
    %v357 = vadd.f32 %v353, %v356
    %vm358 = vweird.f32 %v319
    %vm359 = vweird.f32 %v353
    %vm360 = vmor %vm358, %vm359
    %v361 = vsel %vm360, %v353, %v357
    %v362 = vand.u32 2147483647, %v319
    %vm363 = vcmp.eq.f32.partialorder %v362, 8.507059e+37
    %v364 = vand.u32 %v319, 2147483648
    %v365 = vor.u32 1.1754944e-38, %v364
    %v366 = vsel %vm363, %v365, %v361
    %v367 = vmul.f32 1.0, %v366
    %v368 = vrcp.pop %v320
    %v369 = vmul.f32 %v320, %v368
    %v370 = vsub.f32 1.0, %v369
    %v371 = vmul.f32 %v368, %v370
    %v372 = vadd.f32 %v368, %v371
    %vm373 = vweird.f32 %v320
    %vm374 = vweird.f32 %v368
    %vm375 = vmor %vm373, %vm374
    %v376 = vsel %vm375, %v368, %v372
    %v377 = vand.u32 2147483647, %v320
    %vm378 = vcmp.eq.f32.partialorder %v377, 8.507059e+37
    %v379 = vand.u32 %v320, 2147483648
    %v380 = vor.u32 1.1754944e-38, %v379
    %v381 = vsel %vm378, %v380, %v376
    %v382 = vmul.f32 1.0, %v381
    %v383 = vrcp.pop %v321
    %v384 = vmul.f32 %v321, %v383
    %v385 = vsub.f32 1.0, %v384
    %v386 = vmul.f32 %v383, %v385
    %v387 = vadd.f32 %v383, %v386
    %vm388 = vweird.f32 %v321
    %vm389 = vweird.f32 %v383
    %vm390 = vmor %vm388, %vm389
    %v391 = vsel %vm390, %v383, %v387
    %v392 = vand.u32 2147483647, %v321
    %vm393 = vcmp.eq.f32.partialorder %v392, 8.507059e+37
    %v394 = vand.u32 %v321, 2147483648
    %v395 = vor.u32 1.1754944e-38, %v394
    %v396 = vsel %vm393, %v395, %v391
    %v397 = vmul.f32 1.0, %v396
    %v398 = vrcp.pop %v322
    %v399 = vmul.f32 %v322, %v398
    %v400 = vsub.f32 1.0, %v399
    %v401 = vmul.f32 %v398, %v400
    %v402 = vadd.f32 %v398, %v401
    %vm403 = vweird.f32 %v322
    %vm404 = vweird.f32 %v398
    %vm405 = vmor %vm403, %vm404
    %v406 = vsel %vm405, %v398, %v402
    %v407 = vand.u32 2147483647, %v322
    %vm408 = vcmp.eq.f32.partialorder %v407, 8.507059e+37
    %v409 = vand.u32 %v322, 2147483648
    %v410 = vor.u32 1.1754944e-38, %v409
    %v411 = vsel %vm408, %v410, %v406
    %v412 = vmul.f32 1.0, %v411
    %v413 = vtanh.pop %v275
    %v414 = vtanh.pop %v295
    %v415 = vmul.f32 %v367, 0.0
    %v416 = vmul.f32 %v382, 0.0
    %v417 = vmul.f32 %v337, %v413
    %v418 = vmul.f32 %v352, %v414
    %v419 = vadd.f32 %v415, %v417
    %v420 = vadd.f32 %v416, %v418
    %v421 = vtanh.pop %v419
    %v422 = vtanh.pop %v420
    %v423 = vmul.f32 %v397, %v421
    %v424 = vmul.f32 %v412, %v422
    %vm425 = vcmp.eq.s32.totalorder %v298, 0
    %v426 = vperm.slane %v423, 0
    %v427 = vperm.slane %v424, 0
    %v428 = vsel %vm425, %v426, 0.0
    %v429 = vsel %vm425, %v427, 0.0
    %v430 = vld [vmem:[#allocation5] sm:$0xff]
    %v431 = vld [vmem:[#allocation5 + $0x8] sm:$0xff]
    %v432 = vld [vmem:[#allocation5 + $0x10] sm:$0xff]
    %v433 = vld [vmem:[#allocation5 + $0x18] sm:$0xff]
    %v434 = vld [vmem:[#allocation5 + $0x20] sm:$0xff]
    %v435 = vld [vmem:[#allocation5 + $0x28] sm:$0xff]
    %v436 = vld [vmem:[#allocation5 + $0x30] sm:$0xff]
    %v437 = vld [vmem:[#allocation5 + $0x38] sm:$0xff]
    %v438 = vld [vmem:[#allocation5 + $0x40] sm:$0xff]
    %v439 = vld [vmem:[#allocation5 + $0x48] sm:$0xff]
    %v440 = vld [vmem:[#allocation5 + $0x50] sm:$0xff]
    %v441 = vld [vmem:[#allocation5 + $0x58] sm:$0xff]
    %v442 = vld [vmem:[#allocation5 + $0x60] sm:$0xff]
    %v443 = vld [vmem:[#allocation5 + $0x68] sm:$0xff]
    %v444 = vld [vmem:[#allocation5 + $0x70] sm:$0xff]
    %v445 = vld [vmem:[#allocation5 + $0x78] sm:$0xff]
    %v446 = vld [vmem:[#allocation5 + $0x80] sm:$0xff]
    %v447 = vld [vmem:[#allocation5 + $0x88] sm:$0xff]
    %v448 = vld [vmem:[#allocation5 + $0x90] sm:$0xff]
    %v449 = vld [vmem:[#allocation5 + $0x98] sm:$0xff]
    %v450 = vld [vmem:[#allocation5 + $0xa0] sm:$0xff]
    %v451 = vld [vmem:[#allocation5 + $0xa8] sm:$0xff]
    %v452 = vld [vmem:[#allocation5 + $0xb0] sm:$0xff]
    %v453 = vld [vmem:[#allocation5 + $0xb8] sm:$0xff]
    %v454 = vld [vmem:[#allocation5 + $0xc0] sm:$0xff]
    %v455 = vld [vmem:[#allocation5 + $0xc8] sm:$0xff]
    %v456 = vld [vmem:[#allocation5 + $0xd0] sm:$0xff]
    %v457 = vld [vmem:[#allocation5 + $0xd8] sm:$0xff]
    %v458 = vld [vmem:[#allocation5 + $0xe0] sm:$0xff]
    %v459 = vld [vmem:[#allocation5 + $0xe8] sm:$0xff]
    %v460 = vld [vmem:[#allocation5 + $0xf0] sm:$0xff]
    %v461 = vld [vmem:[#allocation5 + $0xf8] sm:$0xff]
    %v462 = vld [vmem:[#allocation5 + $0x100] sm:$0xff]
    %v463 = vld [vmem:[#allocation5 + $0x108] sm:$0xff]
    %v464 = vld [vmem:[#allocation5 + $0x110] sm:$0xff]
    %v465 = vld [vmem:[#allocation5 + $0x118] sm:$0xff]
    %v466 = vld [vmem:[#allocation5 + $0x120] sm:$0xff]
    %v467 = vld [vmem:[#allocation5 + $0x128] sm:$0xff]
    %v468 = vld [vmem:[#allocation5 + $0x130] sm:$0xff]
    %v469 = vld [vmem:[#allocation5 + $0x138] sm:$0xff]
    %v470 = vld [vmem:[#allocation5 + $0x140] sm:$0xff]
    %v471 = vld [vmem:[#allocation5 + $0x148] sm:$0xff]
    %v472 = vld [vmem:[#allocation5 + $0x150] sm:$0xff]
    %v473 = vld [vmem:[#allocation5 + $0x158] sm:$0xff]
    %v474 = vld [vmem:[#allocation5 + $0x160] sm:$0xff]
    %v475 = vld [vmem:[#allocation5 + $0x168] sm:$0xff]
    %v476 = vld [vmem:[#allocation5 + $0x170] sm:$0xff]
    %v477 = vld [vmem:[#allocation5 + $0x178] sm:$0xff]
    %v478 = vld [vmem:[#allocation5 + $0x180] sm:$0xff]
    %v479 = vld [vmem:[#allocation5 + $0x188] sm:$0xff]
    %v480 = vld [vmem:[#allocation5 + $0x190] sm:$0xff]
    %v481 = vld [vmem:[#allocation5 + $0x198] sm:$0xff]
    %v482 = vld [vmem:[#allocation5 + $0x1a0] sm:$0xff]
    %v483 = vld [vmem:[#allocation5 + $0x1a8] sm:$0xff]
    %v484 = vld [vmem:[#allocation5 + $0x1b0] sm:$0xff]
    %v485 = vld [vmem:[#allocation5 + $0x1b8] sm:$0xff]
    %v486 = vld [vmem:[#allocation5 + $0x1c0] sm:$0xff]
    %v487 = vld [vmem:[#allocation5 + $0x1c8] sm:$0xff]
    %v488 = vld [vmem:[#allocation5 + $0x1d0] sm:$0xff]
    %v489 = vld [vmem:[#allocation5 + $0x1d8] sm:$0xff]
    %v490 = vld [vmem:[#allocation5 + $0x1e0] sm:$0xff]
    %v491 = vld [vmem:[#allocation5 + $0x1e8] sm:$0xff]
    %v492 = vld [vmem:[#allocation5 + $0x1f0] sm:$0xff]
    %v493 = vld [vmem:[#allocation5 + $0x1f8] sm:$0xff]
    %v494 = vld [vmem:[#allocation5 + $0x200] sm:$0xff]
    %v495 = vld [vmem:[#allocation5 + $0x208] sm:$0xff]
    %v496 = vld [vmem:[#allocation5 + $0x210] sm:$0xff]
    %v497 = vld [vmem:[#allocation5 + $0x218] sm:$0xff]
    %v498 = vld [vmem:[#allocation5 + $0x220] sm:$0xff]
    %v499 = vld [vmem:[#allocation5 + $0x228] sm:$0xff]
    %v500 = vld [vmem:[#allocation5 + $0x230] sm:$0xff]
    %v501 = vld [vmem:[#allocation5 + $0x238] sm:$0xff]
    %v502 = vld [vmem:[#allocation5 + $0x240] sm:$0xff]
    %v503 = vld [vmem:[#allocation5 + $0x248] sm:$0xff]
    %v504 = vld [vmem:[#allocation5 + $0x250] sm:$0xff]
    %v505 = vld [vmem:[#allocation5 + $0x258] sm:$0xff]
    %v506 = vld [vmem:[#allocation5 + $0x260] sm:$0xff]
    %v507 = vld [vmem:[#allocation5 + $0x268] sm:$0xff]
    %v508 = vld [vmem:[#allocation5 + $0x270] sm:$0xff]
    %v509 = vld [vmem:[#allocation5 + $0x278] sm:$0xff]
    %v510 = vld [vmem:[#allocation5 + $0x280] sm:$0xff]
    %v511 = vld [vmem:[#allocation5 + $0x288] sm:$0xff]
    %v512 = vld [vmem:[#allocation5 + $0x290] sm:$0xff]
    %v513 = vld [vmem:[#allocation5 + $0x298] sm:$0xff]
    %v514 = vld [vmem:[#allocation5 + $0x2a0] sm:$0xff]
    %v515 = vld [vmem:[#allocation5 + $0x2a8] sm:$0xff]
    %v516 = vld [vmem:[#allocation5 + $0x2b0] sm:$0xff]
    %v517 = vld [vmem:[#allocation5 + $0x2b8] sm:$0xff]
    %v518 = vld [vmem:[#allocation5 + $0x2c0] sm:$0xff]
    %v519 = vld [vmem:[#allocation5 + $0x2c8] sm:$0xff]
    %v520 = vld [vmem:[#allocation5 + $0x2d0] sm:$0xff]
    %v521 = vld [vmem:[#allocation5 + $0x2d8] sm:$0xff]
    %v522 = vld [vmem:[#allocation5 + $0x2e0] sm:$0xff]
    %v523 = vld [vmem:[#allocation5 + $0x2e8] sm:$0xff]
    %v524 = vld [vmem:[#allocation5 + $0x2f0] sm:$0xff]
    %v525 = vld [vmem:[#allocation5 + $0x2f8] sm:$0xff]
    %v526 = vld [vmem:[#allocation5 + $0x300] sm:$0xff]
    %v527 = vld [vmem:[#allocation5 + $0x308] sm:$0xff]
    %v528 = vld [vmem:[#allocation5 + $0x310] sm:$0xff]
    %v529 = vld [vmem:[#allocation5 + $0x318] sm:$0xff]
    %v530 = vld [vmem:[#allocation5 + $0x320] sm:$0xff]
    %v531 = vld [vmem:[#allocation5 + $0x328] sm:$0xff]
    %v532 = vld [vmem:[#allocation5 + $0x330] sm:$0xff]
    %v533 = vld [vmem:[#allocation5 + $0x338] sm:$0xff]
    %v534 = vld [vmem:[#allocation5 + $0x340] sm:$0xff]
    %v535 = vld [vmem:[#allocation5 + $0x348] sm:$0xff]
    %v536 = vld [vmem:[#allocation5 + $0x350] sm:$0xff]
    %v537 = vld [vmem:[#allocation5 + $0x358] sm:$0xff]
    %v538 = vld [vmem:[#allocation5 + $0x360] sm:$0xff]
    %v539 = vld [vmem:[#allocation5 + $0x368] sm:$0xff]
    %v540 = vld [vmem:[#allocation5 + $0x370] sm:$0xff]
    %v541 = vld [vmem:[#allocation5 + $0x378] sm:$0xff]
    %v542 = vld [vmem:[#allocation5 + $0x380] sm:$0xff]
    %v543 = vld [vmem:[#allocation5 + $0x388] sm:$0xff]
    %v544 = vld [vmem:[#allocation5 + $0x390] sm:$0xff]
    %v545 = vld [vmem:[#allocation5 + $0x398] sm:$0xff]
    %v546 = vld [vmem:[#allocation5 + $0x3a0] sm:$0xff]
    %v547 = vld [vmem:[#allocation5 + $0x3a8] sm:$0xff]
    %v548 = vld [vmem:[#allocation5 + $0x3b0] sm:$0xff]
    %v549 = vld [vmem:[#allocation5 + $0x3b8] sm:$0xff]
    %v550 = vld [vmem:[#allocation5 + $0x3c0] sm:$0xff]
    %v551 = vld [vmem:[#allocation5 + $0x3c8] sm:$0xff]
    %v552 = vld [vmem:[#allocation5 + $0x3d0] sm:$0xff]
    %v553 = vld [vmem:[#allocation5 + $0x3d8] sm:$0xff]
    %v554 = vld [vmem:[#allocation5 + $0x3e0] sm:$0xff]
    %v555 = vld [vmem:[#allocation5 + $0x3e8] sm:$0xff]
    %v556 = vld [vmem:[#allocation5 + $0x3f0] sm:$0xff]
    %v557 = vld [vmem:[#allocation5 + $0x3f8] sm:$0xff]
    %v558 = vld [vmem:[#allocation5 + $0x400] sm:$0xff]
    %v559 = vld [vmem:[#allocation5 + $0x408] sm:$0xff]
    %v560 = vld [vmem:[#allocation5 + $0x410] sm:$0xff]
    %v561 = vld [vmem:[#allocation5 + $0x418] sm:$0xff]
    %v562 = vld [vmem:[#allocation5 + $0x420] sm:$0xff]
    %v563 = vld [vmem:[#allocation5 + $0x428] sm:$0xff]
    %v564 = vld [vmem:[#allocation5 + $0x430] sm:$0xff]
    %v565 = vld [vmem:[#allocation5 + $0x438] sm:$0xff]
    %v566 = vld [vmem:[#allocation5 + $0x440] sm:$0xff]
    %v567 = vld [vmem:[#allocation5 + $0x448] sm:$0xff]
    %v568 = vld [vmem:[#allocation5 + $0x450] sm:$0xff]
    %v569 = vld [vmem:[#allocation5 + $0x458] sm:$0xff]
    %v570 = vld [vmem:[#allocation5 + $0x460] sm:$0xff]
    %v571 = vld [vmem:[#allocation5 + $0x468] sm:$0xff]
    %v572 = vld [vmem:[#allocation5 + $0x470] sm:$0xff]
    %v573 = vld [vmem:[#allocation5 + $0x478] sm:$0xff]
    %v574 = vld [vmem:[#allocation5 + $0x480] sm:$0xff]
    %v575 = vld [vmem:[#allocation5 + $0x488] sm:$0xff]
    %v576 = vld [vmem:[#allocation5 + $0x490] sm:$0xff]
    %v577 = vld [vmem:[#allocation5 + $0x498] sm:$0xff]
    %v578 = vld [vmem:[#allocation5 + $0x4a0] sm:$0xff]
    %v579 = vld [vmem:[#allocation5 + $0x4a8] sm:$0xff]
    %v580 = vld [vmem:[#allocation5 + $0x4b0] sm:$0xff]
    %v581 = vld [vmem:[#allocation5 + $0x4b8] sm:$0xff]
    %v582 = vld [vmem:[#allocation5 + $0x4c0] sm:$0xff]
    %v583 = vld [vmem:[#allocation5 + $0x4c8] sm:$0xff]
    %v584 = vld [vmem:[#allocation5 + $0x4d0] sm:$0xff]
    %v585 = vld [vmem:[#allocation5 + $0x4d8] sm:$0xff]
    %v586 = vld [vmem:[#allocation5 + $0x4e0] sm:$0xff]
    %v587 = vld [vmem:[#allocation5 + $0x4e8] sm:$0xff]
    %v588 = vld [vmem:[#allocation5 + $0x4f0] sm:$0xff]
    %v589 = vld [vmem:[#allocation5 + $0x4f8] sm:$0xff]
    %v590 = vld [vmem:[#allocation5 + $0x500] sm:$0xff]
    %v591 = vld [vmem:[#allocation5 + $0x508] sm:$0xff]
    %v592 = vld [vmem:[#allocation5 + $0x510] sm:$0xff]
    %v593 = vld [vmem:[#allocation5 + $0x518] sm:$0xff]
    %v594 = vld [vmem:[#allocation5 + $0x520] sm:$0xff]
    %v595 = vld [vmem:[#allocation5 + $0x528] sm:$0xff]
    %v596 = vld [vmem:[#allocation5 + $0x530] sm:$0xff]
    %v597 = vld [vmem:[#allocation5 + $0x538] sm:$0xff]
    %v598 = vld [vmem:[#allocation5 + $0x540] sm:$0xff]
    %v599 = vld [vmem:[#allocation5 + $0x548] sm:$0xff]
    %v600 = vld [vmem:[#allocation5 + $0x550] sm:$0xff]
    %v601 = vld [vmem:[#allocation5 + $0x558] sm:$0xff]
    %v602 = vld [vmem:[#allocation5 + $0x560] sm:$0xff]
    %v603 = vld [vmem:[#allocation5 + $0x568] sm:$0xff]
    %v604 = vld [vmem:[#allocation5 + $0x570] sm:$0xff]
    %v605 = vld [vmem:[#allocation5 + $0x578] sm:$0xff]
    %v606 = vld [vmem:[#allocation5 + $0x580] sm:$0xff]
    %v607 = vld [vmem:[#allocation5 + $0x588] sm:$0xff]
    %v608 = vld [vmem:[#allocation5 + $0x590] sm:$0xff]
    %v609 = vld [vmem:[#allocation5 + $0x598] sm:$0xff]
    %v610 = vld [vmem:[#allocation5 + $0x5a0] sm:$0xff]
    %v611 = vld [vmem:[#allocation5 + $0x5a8] sm:$0xff]
    %v612 = vld [vmem:[#allocation5 + $0x5b0] sm:$0xff]
    %v613 = vld [vmem:[#allocation5 + $0x5b8] sm:$0xff]
    %v614 = vld [vmem:[#allocation5 + $0x5c0] sm:$0xff]
    %v615 = vld [vmem:[#allocation5 + $0x5c8] sm:$0xff]
    %v616 = vld [vmem:[#allocation5 + $0x5d0] sm:$0xff]
    %v617 = vld [vmem:[#allocation5 + $0x5d8] sm:$0xff]
    %v618 = vld [vmem:[#allocation5 + $0x5e0] sm:$0xff]
    %v619 = vld [vmem:[#allocation5 + $0x5e8] sm:$0xff]
    %v620 = vld [vmem:[#allocation5 + $0x5f0] sm:$0xff]
    %v621 = vld [vmem:[#allocation5 + $0x5f8] sm:$0xff]
    %v622 = vld [vmem:[#allocation5 + $0x600] sm:$0xff]
    %v623 = vld [vmem:[#allocation5 + $0x608] sm:$0xff]
    %v624 = vld [vmem:[#allocation5 + $0x610] sm:$0xff]
    %v625 = vld [vmem:[#allocation5 + $0x618] sm:$0xff]
    %v626 = vld [vmem:[#allocation5 + $0x620] sm:$0xff]
    %v627 = vld [vmem:[#allocation5 + $0x628] sm:$0xff]
    %v628 = vld [vmem:[#allocation5 + $0x630] sm:$0xff]
    %v629 = vld [vmem:[#allocation5 + $0x638] sm:$0xff]
    %v630 = vld [vmem:[#allocation5 + $0x640] sm:$0xff]
    %v631 = vld [vmem:[#allocation5 + $0x648] sm:$0xff]
    %v632 = vld [vmem:[#allocation5 + $0x650] sm:$0xff]
    %v633 = vld [vmem:[#allocation5 + $0x658] sm:$0xff]
    %v634 = vld [vmem:[#allocation5 + $0x660] sm:$0xff]
    %v635 = vld [vmem:[#allocation5 + $0x668] sm:$0xff]
    %v636 = vld [vmem:[#allocation5 + $0x670] sm:$0xff]
    %v637 = vld [vmem:[#allocation5 + $0x678] sm:$0xff]
    %v638 = vld [vmem:[#allocation5 + $0x680] sm:$0xff]
    %v639 = vld [vmem:[#allocation5 + $0x688] sm:$0xff]
    %v640 = vld [vmem:[#allocation5 + $0x690] sm:$0xff]
    %v641 = vld [vmem:[#allocation5 + $0x698] sm:$0xff]
    %v642 = vld [vmem:[#allocation5 + $0x6a0] sm:$0xff]
    %v643 = vld [vmem:[#allocation5 + $0x6a8] sm:$0xff]
    %v644 = vld [vmem:[#allocation5 + $0x6b0] sm:$0xff]
    %v645 = vld [vmem:[#allocation5 + $0x6b8] sm:$0xff]
    %v646 = vld [vmem:[#allocation5 + $0x6c0] sm:$0xff]
    %v647 = vld [vmem:[#allocation5 + $0x6c8] sm:$0xff]
    %v648 = vld [vmem:[#allocation5 + $0x6d0] sm:$0xff]
    %v649 = vld [vmem:[#allocation5 + $0x6d8] sm:$0xff]
    %v650 = vld [vmem:[#allocation5 + $0x6e0] sm:$0xff]
    %v651 = vld [vmem:[#allocation5 + $0x6e8] sm:$0xff]
    %v652 = vld [vmem:[#allocation5 + $0x6f0] sm:$0xff]
    %v653 = vld [vmem:[#allocation5 + $0x6f8] sm:$0xff]
    %v654 = vld [vmem:[#allocation5 + $0x700] sm:$0xff]
    %v655 = vld [vmem:[#allocation5 + $0x708] sm:$0xff]
    %v656 = vld [vmem:[#allocation5 + $0x710] sm:$0xff]
    %v657 = vld [vmem:[#allocation5 + $0x718] sm:$0xff]
    %v658 = vld [vmem:[#allocation5 + $0x720] sm:$0xff]
    %v659 = vld [vmem:[#allocation5 + $0x728] sm:$0xff]
    %v660 = vld [vmem:[#allocation5 + $0x730] sm:$0xff]
    %v661 = vld [vmem:[#allocation5 + $0x738] sm:$0xff]
    %v662 = vld [vmem:[#allocation5 + $0x740] sm:$0xff]
    %v663 = vld [vmem:[#allocation5 + $0x748] sm:$0xff]
    %v664 = vld [vmem:[#allocation5 + $0x750] sm:$0xff]
    %v665 = vld [vmem:[#allocation5 + $0x758] sm:$0xff]
    %v666 = vld [vmem:[#allocation5 + $0x760] sm:$0xff]
    %v667 = vld [vmem:[#allocation5 + $0x768] sm:$0xff]
    %v668 = vld [vmem:[#allocation5 + $0x770] sm:$0xff]
    %v669 = vld [vmem:[#allocation5 + $0x778] sm:$0xff]
    %v670 = vld [vmem:[#allocation5 + $0x780] sm:$0xff]
    %v671 = vld [vmem:[#allocation5 + $0x788] sm:$0xff]
    %v672 = vld [vmem:[#allocation5 + $0x790] sm:$0xff]
    %v673 = vld [vmem:[#allocation5 + $0x798] sm:$0xff]
    %v674 = vld [vmem:[#allocation5 + $0x7a0] sm:$0xff]
    %v675 = vld [vmem:[#allocation5 + $0x7a8] sm:$0xff]
    %v676 = vld [vmem:[#allocation5 + $0x7b0] sm:$0xff]
    %v677 = vld [vmem:[#allocation5 + $0x7b8] sm:$0xff]
    %v678 = vld [vmem:[#allocation5 + $0x7c0] sm:$0xff]
    %v679 = vld [vmem:[#allocation5 + $0x7c8] sm:$0xff]
    %v680 = vld [vmem:[#allocation5 + $0x7d0] sm:$0xff]
    %v681 = vld [vmem:[#allocation5 + $0x7d8] sm:$0xff]
    %v682 = vld [vmem:[#allocation5 + $0x7e0] sm:$0xff]
    %v683 = vld [vmem:[#allocation5 + $0x7e8] sm:$0xff]
    %v684 = vld [vmem:[#allocation5 + $0x7f0] sm:$0xff]
    %v685 = vld [vmem:[#allocation5 + $0x7f8] sm:$0xff]
    %686 = vmatpush.msra.mxu0 %v550
    %687 = vmatpush.msra.mxu0 %v542
    %688 = vmatpush.msra.mxu0 %v534
    %689 = vmatpush.msra.mxu0 %v526
    %690 = vmatpush.msra.mxu0 %v518
    %691 = vmatpush.msra.mxu0 %v510
    %692 = vmatpush.msra.mxu0 %v502
    %693 = vmatpush.msra.mxu0 %v494
    %694 = vmatpush.msra.mxu0 %v486
    %695 = vmatpush.msra.mxu0 %v478
    %696 = vmatpush.msra.mxu0 %v470
    %697 = vmatpush.msra.mxu0 %v462
    %698 = vmatpush.msra.mxu0 %v454
    %699 = vmatpush.msra.mxu0 %v446
    %700 = vmatpush.msra.mxu0 %v438
    %701 = vmatpush.msra.mxu0 %v430
    %702 = vmatmul.f32.gmra.mxu0 %v423
    %v703 = vpop.f32.mrf.mxu0
    %v704 = vadd.f32 0.0, %v703
    %705 = vdwg.mxu0
    %706 = vmatpush.msra.mxu0 %v678
    %707 = vmatpush.msra.mxu0 %v670
    %708 = vmatpush.msra.mxu0 %v662
    %709 = vmatpush.msra.mxu0 %v654
    %710 = vmatpush.msra.mxu0 %v646
    %711 = vmatpush.msra.mxu0 %v638
    %712 = vmatpush.msra.mxu0 %v630
    %713 = vmatpush.msra.mxu0 %v622
    %714 = vmatpush.msra.mxu0 %v614
    %715 = vmatpush.msra.mxu0 %v606
    %716 = vmatpush.msra.mxu0 %v598
    %717 = vmatpush.msra.mxu0 %v590
    %718 = vmatpush.msra.mxu0 %v582
    %719 = vmatpush.msra.mxu0 %v574
    %720 = vmatpush.msra.mxu0 %v566
    %721 = vmatpush.msra.mxu0 %v558
    %722 = vmatmul.f32.gmra.mxu0 %v424
    %v723 = vpop.f32.mrf.mxu0
    %v724 = vadd.f32 %v704, %v723
    %725 = vdwg.mxu0
    %726 = vmatpush.msra.mxu0 %v551
    %727 = vmatpush.msra.mxu0 %v543
    %728 = vmatpush.msra.mxu0 %v535
    %729 = vmatpush.msra.mxu0 %v527
    %730 = vmatpush.msra.mxu0 %v519
    %731 = vmatpush.msra.mxu0 %v511
    %732 = vmatpush.msra.mxu0 %v503
    %733 = vmatpush.msra.mxu0 %v495
    %734 = vmatpush.msra.mxu0 %v487
    %735 = vmatpush.msra.mxu0 %v479
    %736 = vmatpush.msra.mxu0 %v471
    %737 = vmatpush.msra.mxu0 %v463
    %738 = vmatpush.msra.mxu0 %v455
    %739 = vmatpush.msra.mxu0 %v447
    %740 = vmatpush.msra.mxu0 %v439
    %741 = vmatpush.msra.mxu0 %v431
    %742 = vmatmul.f32.gmra.mxu0 %v423
    %v743 = vpop.f32.mrf.mxu0
    %v744 = vadd.f32 0.0, %v743
    %745 = vdwg.mxu0
    %746 = vmatpush.msra.mxu0 %v679
    %747 = vmatpush.msra.mxu0 %v671
    %748 = vmatpush.msra.mxu0 %v663
    %749 = vmatpush.msra.mxu0 %v655
    %750 = vmatpush.msra.mxu0 %v647
    %751 = vmatpush.msra.mxu0 %v639
    %752 = vmatpush.msra.mxu0 %v631
    %753 = vmatpush.msra.mxu0 %v623
    %754 = vmatpush.msra.mxu0 %v615
    %755 = vmatpush.msra.mxu0 %v607
    %756 = vmatpush.msra.mxu0 %v599
    %757 = vmatpush.msra.mxu0 %v591
    %758 = vmatpush.msra.mxu0 %v583
    %759 = vmatpush.msra.mxu0 %v575
    %760 = vmatpush.msra.mxu0 %v567
    %761 = vmatpush.msra.mxu0 %v559
    %762 = vmatmul.f32.gmra.mxu0 %v424
    %v763 = vpop.f32.mrf.mxu0
    %v764 = vadd.f32 %v744, %v763
    %765 = vdwg.mxu0
    %766 = vmatpush.msra.mxu0 %v552
    %767 = vmatpush.msra.mxu0 %v544
    %768 = vmatpush.msra.mxu0 %v536
    %769 = vmatpush.msra.mxu0 %v528
    %770 = vmatpush.msra.mxu0 %v520
    %771 = vmatpush.msra.mxu0 %v512
    %772 = vmatpush.msra.mxu0 %v504
    %773 = vmatpush.msra.mxu0 %v496
    %774 = vmatpush.msra.mxu0 %v488
    %775 = vmatpush.msra.mxu0 %v480
    %776 = vmatpush.msra.mxu0 %v472
    %777 = vmatpush.msra.mxu0 %v464
    %778 = vmatpush.msra.mxu0 %v456
    %779 = vmatpush.msra.mxu0 %v448
    %780 = vmatpush.msra.mxu0 %v440
    %781 = vmatpush.msra.mxu0 %v432
    %782 = vmatmul.f32.gmra.mxu0 %v423
    %v783 = vpop.f32.mrf.mxu0
    %v784 = vadd.f32 0.0, %v783
    %785 = vdwg.mxu0
    %786 = vmatpush.msra.mxu0 %v680
    %787 = vmatpush.msra.mxu0 %v672
    %788 = vmatpush.msra.mxu0 %v664
    %789 = vmatpush.msra.mxu0 %v656
    %790 = vmatpush.msra.mxu0 %v648
    %791 = vmatpush.msra.mxu0 %v640
    %792 = vmatpush.msra.mxu0 %v632
    %793 = vmatpush.msra.mxu0 %v624
    %794 = vmatpush.msra.mxu0 %v616
    %795 = vmatpush.msra.mxu0 %v608
    %796 = vmatpush.msra.mxu0 %v600
    %797 = vmatpush.msra.mxu0 %v592
    %798 = vmatpush.msra.mxu0 %v584
    %799 = vmatpush.msra.mxu0 %v576
    %800 = vmatpush.msra.mxu0 %v568
    %801 = vmatpush.msra.mxu0 %v560
    %802 = vmatmul.f32.gmra.mxu0 %v424
    %v803 = vpop.f32.mrf.mxu0
    %v804 = vadd.f32 %v784, %v803
    %805 = vdwg.mxu0
    %806 = vmatpush.msra.mxu0 %v553
    %807 = vmatpush.msra.mxu0 %v545
    %808 = vmatpush.msra.mxu0 %v537
    %809 = vmatpush.msra.mxu0 %v529
    %810 = vmatpush.msra.mxu0 %v521
    %811 = vmatpush.msra.mxu0 %v513
    %812 = vmatpush.msra.mxu0 %v505
    %813 = vmatpush.msra.mxu0 %v497
    %814 = vmatpush.msra.mxu0 %v489
    %815 = vmatpush.msra.mxu0 %v481
    %816 = vmatpush.msra.mxu0 %v473
    %817 = vmatpush.msra.mxu0 %v465
    %818 = vmatpush.msra.mxu0 %v457
    %819 = vmatpush.msra.mxu0 %v449
    %820 = vmatpush.msra.mxu0 %v441
    %821 = vmatpush.msra.mxu0 %v433
    %822 = vmatmul.f32.gmra.mxu0 %v423
    %v823 = vpop.f32.mrf.mxu0
    %v824 = vadd.f32 0.0, %v823
    %825 = vdwg.mxu0
    %826 = vmatpush.msra.mxu0 %v681
    %827 = vmatpush.msra.mxu0 %v673
    %828 = vmatpush.msra.mxu0 %v665
    %829 = vmatpush.msra.mxu0 %v657
    %830 = vmatpush.msra.mxu0 %v649
    %831 = vmatpush.msra.mxu0 %v641
    %832 = vmatpush.msra.mxu0 %v633
    %833 = vmatpush.msra.mxu0 %v625
    %834 = vmatpush.msra.mxu0 %v617
    %835 = vmatpush.msra.mxu0 %v609
    %836 = vmatpush.msra.mxu0 %v601
    %837 = vmatpush.msra.mxu0 %v593
    %838 = vmatpush.msra.mxu0 %v585
    %839 = vmatpush.msra.mxu0 %v577
    %840 = vmatpush.msra.mxu0 %v569
    %841 = vmatpush.msra.mxu0 %v561
    %842 = vmatmul.f32.gmra.mxu0 %v424
    %v843 = vpop.f32.mrf.mxu0
    %v844 = vadd.f32 %v824, %v843
    %845 = vdwg.mxu0
    %846 = vmatpush.msra.mxu0 %v554
    %847 = vmatpush.msra.mxu0 %v546
    %848 = vmatpush.msra.mxu0 %v538
    %849 = vmatpush.msra.mxu0 %v530
    %850 = vmatpush.msra.mxu0 %v522
    %851 = vmatpush.msra.mxu0 %v514
    %852 = vmatpush.msra.mxu0 %v506
    %853 = vmatpush.msra.mxu0 %v498
    %854 = vmatpush.msra.mxu0 %v490
    %855 = vmatpush.msra.mxu0 %v482
    %856 = vmatpush.msra.mxu0 %v474
    %857 = vmatpush.msra.mxu0 %v466
    %858 = vmatpush.msra.mxu0 %v458
    %859 = vmatpush.msra.mxu0 %v450
    %860 = vmatpush.msra.mxu0 %v442
    %861 = vmatpush.msra.mxu0 %v434
    %862 = vmatmul.f32.gmra.mxu0 %v423
    %v863 = vpop.f32.mrf.mxu0
    %v864 = vadd.f32 0.0, %v863
    %865 = vdwg.mxu0
    %866 = vmatpush.msra.mxu0 %v682
    %867 = vmatpush.msra.mxu0 %v674
    %868 = vmatpush.msra.mxu0 %v666
    %869 = vmatpush.msra.mxu0 %v658
    %870 = vmatpush.msra.mxu0 %v650
    %871 = vmatpush.msra.mxu0 %v642
    %872 = vmatpush.msra.mxu0 %v634
    %873 = vmatpush.msra.mxu0 %v626
    %874 = vmatpush.msra.mxu0 %v618
    %875 = vmatpush.msra.mxu0 %v610
    %876 = vmatpush.msra.mxu0 %v602
    %877 = vmatpush.msra.mxu0 %v594
    %878 = vmatpush.msra.mxu0 %v586
    %879 = vmatpush.msra.mxu0 %v578
    %880 = vmatpush.msra.mxu0 %v570
    %881 = vmatpush.msra.mxu0 %v562
    %882 = vmatmul.f32.gmra.mxu0 %v424
    %v883 = vpop.f32.mrf.mxu0
    %v884 = vadd.f32 %v864, %v883
    %885 = vdwg.mxu0
    %886 = vmatpush.msra.mxu0 %v555
    %887 = vmatpush.msra.mxu0 %v547
    %888 = vmatpush.msra.mxu0 %v539
    %889 = vmatpush.msra.mxu0 %v531
    %890 = vmatpush.msra.mxu0 %v523
    %891 = vmatpush.msra.mxu0 %v515
    %892 = vmatpush.msra.mxu0 %v507
    %893 = vmatpush.msra.mxu0 %v499
    %894 = vmatpush.msra.mxu0 %v491
    %895 = vmatpush.msra.mxu0 %v483
    %896 = vmatpush.msra.mxu0 %v475
    %897 = vmatpush.msra.mxu0 %v467
    %898 = vmatpush.msra.mxu0 %v459
    %899 = vmatpush.msra.mxu0 %v451
    %900 = vmatpush.msra.mxu0 %v443
    %901 = vmatpush.msra.mxu0 %v435
    %902 = vmatmul.f32.gmra.mxu0 %v423
    %v903 = vpop.f32.mrf.mxu0
    %v904 = vadd.f32 0.0, %v903
    %905 = vdwg.mxu0
    %906 = vmatpush.msra.mxu0 %v683
    %907 = vmatpush.msra.mxu0 %v675
    %908 = vmatpush.msra.mxu0 %v667
    %909 = vmatpush.msra.mxu0 %v659
    %910 = vmatpush.msra.mxu0 %v651
    %911 = vmatpush.msra.mxu0 %v643
    %912 = vmatpush.msra.mxu0 %v635
    %913 = vmatpush.msra.mxu0 %v627
    %914 = vmatpush.msra.mxu0 %v619
    %915 = vmatpush.msra.mxu0 %v611
    %916 = vmatpush.msra.mxu0 %v603
    %917 = vmatpush.msra.mxu0 %v595
    %918 = vmatpush.msra.mxu0 %v587
    %919 = vmatpush.msra.mxu0 %v579
    %920 = vmatpush.msra.mxu0 %v571
    %921 = vmatpush.msra.mxu0 %v563
    %922 = vmatmul.f32.gmra.mxu0 %v424
    %v923 = vpop.f32.mrf.mxu0
    %v924 = vadd.f32 %v904, %v923
    %925 = vdwg.mxu0
    %926 = vmatpush.msra.mxu0 %v556
    %927 = vmatpush.msra.mxu0 %v548
    %928 = vmatpush.msra.mxu0 %v540
    %929 = vmatpush.msra.mxu0 %v532
    %930 = vmatpush.msra.mxu0 %v524
    %931 = vmatpush.msra.mxu0 %v516
    %932 = vmatpush.msra.mxu0 %v508
    %933 = vmatpush.msra.mxu0 %v500
    %934 = vmatpush.msra.mxu0 %v492
    %935 = vmatpush.msra.mxu0 %v484
    %936 = vmatpush.msra.mxu0 %v476
    %937 = vmatpush.msra.mxu0 %v468
    %938 = vmatpush.msra.mxu0 %v460
    %939 = vmatpush.msra.mxu0 %v452
    %940 = vmatpush.msra.mxu0 %v444
    %941 = vmatpush.msra.mxu0 %v436
    %942 = vmatmul.f32.gmra.mxu0 %v423
    %v943 = vpop.f32.mrf.mxu0
    %v944 = vadd.f32 0.0, %v943
    %945 = vdwg.mxu0
    %946 = vmatpush.msra.mxu0 %v684
    %947 = vmatpush.msra.mxu0 %v676
    %948 = vmatpush.msra.mxu0 %v668
    %949 = vmatpush.msra.mxu0 %v660
    %950 = vmatpush.msra.mxu0 %v652
    %951 = vmatpush.msra.mxu0 %v644
    %952 = vmatpush.msra.mxu0 %v636
    %953 = vmatpush.msra.mxu0 %v628
    %954 = vmatpush.msra.mxu0 %v620
    %955 = vmatpush.msra.mxu0 %v612
    %956 = vmatpush.msra.mxu0 %v604
    %957 = vmatpush.msra.mxu0 %v596
    %958 = vmatpush.msra.mxu0 %v588
    %959 = vmatpush.msra.mxu0 %v580
    %960 = vmatpush.msra.mxu0 %v572
    %961 = vmatpush.msra.mxu0 %v564
    %962 = vmatmul.f32.gmra.mxu0 %v424
    %v963 = vpop.f32.mrf.mxu0
    %v964 = vadd.f32 %v944, %v963
    %965 = vdwg.mxu0
    %966 = vmatpush.msra.mxu0 %v557
    %967 = vmatpush.msra.mxu0 %v549
    %968 = vmatpush.msra.mxu0 %v541
    %969 = vmatpush.msra.mxu0 %v533
    %970 = vmatpush.msra.mxu0 %v525
    %971 = vmatpush.msra.mxu0 %v517
    %972 = vmatpush.msra.mxu0 %v509
    %973 = vmatpush.msra.mxu0 %v501
    %974 = vmatpush.msra.mxu0 %v493
    %975 = vmatpush.msra.mxu0 %v485
    %976 = vmatpush.msra.mxu0 %v477
    %977 = vmatpush.msra.mxu0 %v469
    %978 = vmatpush.msra.mxu0 %v461
    %979 = vmatpush.msra.mxu0 %v453
    %980 = vmatpush.msra.mxu0 %v445
    %981 = vmatpush.msra.mxu0 %v437
    %982 = vmatmul.f32.gmra.mxu0 %v423
    %v983 = vpop.f32.mrf.mxu0
    %v984 = vadd.f32 0.0, %v983
    %985 = vdwg.mxu0
    %986 = vmatpush.msra.mxu0 %v685
    %987 = vmatpush.msra.mxu0 %v677
    %988 = vmatpush.msra.mxu0 %v669
    %989 = vmatpush.msra.mxu0 %v661
    %990 = vmatpush.msra.mxu0 %v653
    %991 = vmatpush.msra.mxu0 %v645
    %992 = vmatpush.msra.mxu0 %v637
    %993 = vmatpush.msra.mxu0 %v629
    %994 = vmatpush.msra.mxu0 %v621
    %995 = vmatpush.msra.mxu0 %v613
    %996 = vmatpush.msra.mxu0 %v605
    %997 = vmatpush.msra.mxu0 %v597
    %998 = vmatpush.msra.mxu0 %v589
    %999 = vmatpush.msra.mxu0 %v581
    %1000 = vmatpush.msra.mxu0 %v573
    %1001 = vmatpush.msra.mxu0 %v565
    %1002 = vmatmul.f32.gmra.mxu0 %v424
    %v1003 = vpop.f32.mrf.mxu0
    %v1004 = vadd.f32 %v984, %v1003
    %1005 = vdwg.mxu0
    %v1014 = vrot.slane %v724, 7
    %v1015 = vrot.slane %v764, 7
    %v1016 = vrot.slane %v804, 7
    %v1017 = vrot.slane %v844, 7
    %v1018 = vrot.slane %v884, 7
    %v1019 = vrot.slane %v924, 7
    %v1020 = vrot.slane %v964, 7
    %v1021 = vrot.slane %v1004, 7
    %v1030 = vadd.f32 %v155, %v1014
    %v1031 = vadd.f32 %v175, %v1015
    %v1032 = vadd.f32 %v195, %v1016
    %v1033 = vadd.f32 %v215, %v1017
    %v1034 = vadd.f32 %v235, %v1018
    %v1035 = vadd.f32 %v255, %v1019
    %v1036 = vadd.f32 %v275, %v1020
    %v1037 = vadd.f32 %v295, %v1021
    %v1038 = vxor.u32 %v1030, 2147483648
    %v1039 = vxor.u32 %v1031, 2147483648
    %v1040 = vxor.u32 %v1032, 2147483648
    %v1041 = vxor.u32 %v1033, 2147483648
    %v1042 = vxor.u32 %v1034, 2147483648
    %v1043 = vxor.u32 %v1035, 2147483648
    %v1044 = vmul.f32 %v1038, 1.442695
    %v1045 = vpow.pop %v1044
    %v1046 = vmul.f32 %v1039, 1.442695
    %v1047 = vpow.pop %v1046
    %v1048 = vmul.f32 %v1040, 1.442695
    %v1049 = vpow.pop %v1048
    %v1050 = vmul.f32 %v1041, 1.442695
    %v1051 = vpow.pop %v1050
    %v1052 = vmul.f32 %v1042, 1.442695
    %v1053 = vpow.pop %v1052
    %v1054 = vmul.f32 %v1043, 1.442695
    %v1055 = vpow.pop %v1054
    %v1056 = vadd.f32 %v1045, 1.0
    %v1057 = vadd.f32 %v1047, 1.0
    %v1058 = vadd.f32 %v1049, 1.0
    %v1059 = vadd.f32 %v1051, 1.0
    %v1060 = vadd.f32 %v1053, 1.0
    %v1061 = vadd.f32 %v1055, 1.0
    %v1062 = vrcp.pop %v1056
    %v1063 = vmul.f32 %v1056, %v1062
    %v1064 = vsub.f32 1.0, %v1063
    %v1065 = vmul.f32 %v1062, %v1064
    %v1066 = vadd.f32 %v1062, %v1065
    %vm1067 = vweird.f32 %v1056
    %vm1068 = vweird.f32 %v1062
    %vm1069 = vmor %vm1067, %vm1068
    %v1070 = vsel %vm1069, %v1062, %v1066
    %v1071 = vand.u32 2147483647, %v1056
    %vm1072 = vcmp.eq.f32.partialorder %v1071, 8.507059e+37
    %v1073 = vand.u32 %v1056, 2147483648
    %v1074 = vor.u32 1.1754944e-38, %v1073
    %v1075 = vsel %vm1072, %v1074, %v1070
    %v1076 = vmul.f32 1.0, %v1075
    %v1077 = vrcp.pop %v1057
    %v1078 = vmul.f32 %v1057, %v1077
    %v1079 = vsub.f32 1.0, %v1078
    %v1080 = vmul.f32 %v1077, %v1079
    %v1081 = vadd.f32 %v1077, %v1080
    %vm1082 = vweird.f32 %v1057
    %vm1083 = vweird.f32 %v1077
    %vm1084 = vmor %vm1082, %vm1083
    %v1085 = vsel %vm1084, %v1077, %v1081
    %v1086 = vand.u32 2147483647, %v1057
    %vm1087 = vcmp.eq.f32.partialorder %v1086, 8.507059e+37
    %v1088 = vand.u32 %v1057, 2147483648
    %v1089 = vor.u32 1.1754944e-38, %v1088
    %v1090 = vsel %vm1087, %v1089, %v1085
    %v1091 = vmul.f32 1.0, %v1090
    %v1092 = vrcp.pop %v1058
    %v1093 = vmul.f32 %v1058, %v1092
    %v1094 = vsub.f32 1.0, %v1093
    %v1095 = vmul.f32 %v1092, %v1094
    %v1096 = vadd.f32 %v1092, %v1095
    %vm1097 = vweird.f32 %v1058
    %vm1098 = vweird.f32 %v1092
    %vm1099 = vmor %vm1097, %vm1098
    %v1100 = vsel %vm1099, %v1092, %v1096
    %v1101 = vand.u32 2147483647, %v1058
    %vm1102 = vcmp.eq.f32.partialorder %v1101, 8.507059e+37
    %v1103 = vand.u32 %v1058, 2147483648
    %v1104 = vor.u32 1.1754944e-38, %v1103
    %v1105 = vsel %vm1102, %v1104, %v1100
    %v1106 = vmul.f32 1.0, %v1105
    %v1107 = vrcp.pop %v1059
    %v1108 = vmul.f32 %v1059, %v1107
    %v1109 = vsub.f32 1.0, %v1108
    %v1110 = vmul.f32 %v1107, %v1109
    %v1111 = vadd.f32 %v1107, %v1110
    %vm1112 = vweird.f32 %v1059
    %vm1113 = vweird.f32 %v1107
    %vm1114 = vmor %vm1112, %vm1113
    %v1115 = vsel %vm1114, %v1107, %v1111
    %v1116 = vand.u32 2147483647, %v1059
    %vm1117 = vcmp.eq.f32.partialorder %v1116, 8.507059e+37
    %v1118 = vand.u32 %v1059, 2147483648
    %v1119 = vor.u32 1.1754944e-38, %v1118
    %v1120 = vsel %vm1117, %v1119, %v1115
    %v1121 = vmul.f32 1.0, %v1120
    %v1122 = vrcp.pop %v1060
    %v1123 = vmul.f32 %v1060, %v1122
    %v1124 = vsub.f32 1.0, %v1123
    %v1125 = vmul.f32 %v1122, %v1124
    %v1126 = vadd.f32 %v1122, %v1125
    %vm1127 = vweird.f32 %v1060
    %vm1128 = vweird.f32 %v1122
    %vm1129 = vmor %vm1127, %vm1128
    %v1130 = vsel %vm1129, %v1122, %v1126
    %v1131 = vand.u32 2147483647, %v1060
    %vm1132 = vcmp.eq.f32.partialorder %v1131, 8.507059e+37
    %v1133 = vand.u32 %v1060, 2147483648
    %v1134 = vor.u32 1.1754944e-38, %v1133
    %v1135 = vsel %vm1132, %v1134, %v1130
    %v1136 = vmul.f32 1.0, %v1135
    %v1137 = vrcp.pop %v1061
    %v1138 = vmul.f32 %v1061, %v1137
    %v1139 = vsub.f32 1.0, %v1138
    %v1140 = vmul.f32 %v1137, %v1139
    %v1141 = vadd.f32 %v1137, %v1140
    %vm1142 = vweird.f32 %v1061
    %vm1143 = vweird.f32 %v1137
    %vm1144 = vmor %vm1142, %vm1143
    %v1145 = vsel %vm1144, %v1137, %v1141
    %v1146 = vand.u32 2147483647, %v1061
    %vm1147 = vcmp.eq.f32.partialorder %v1146, 8.507059e+37
    %v1148 = vand.u32 %v1061, 2147483648
    %v1149 = vor.u32 1.1754944e-38, %v1148
    %v1150 = vsel %vm1147, %v1149, %v1145
    %v1151 = vmul.f32 1.0, %v1150
    %v1152 = vtanh.pop %v1036
    %v1153 = vtanh.pop %v1037
    %v1156 = vrot.slane %v419, 7
    %v1157 = vrot.slane %v420, 7
    %v1160 = vmul.f32 %v1106, %v1156
    %v1161 = vmul.f32 %v1121, %v1157
    %v1162 = vmul.f32 %v1076, %v1152
    %v1163 = vmul.f32 %v1091, %v1153
    %v1164 = vadd.f32 %v1160, %v1162
    %v1165 = vadd.f32 %v1161, %v1163
    %v1166 = vtanh.pop %v1164
    %v1167 = vtanh.pop %v1165
    %v1168 = vmul.f32 %v1136, %v1166
    %v1169 = vmul.f32 %v1151, %v1167
    %vm1170 = vcmp.eq.s32.totalorder %v298, 1
    %v1171 = vperm.slane %v1168, 1
    %v1172 = vperm.slane %v1169, 1
    %v1173 = vsel %vm1170, %v1171, %v428
    %v1174 = vsel %vm1170, %v1172, %v429
    %v1177 = vrot.slane %v1168, 1
    %v1178 = vrot.slane %v1169, 1
    %1181 = vmatpush.msra.mxu0 %v550
    %1182 = vmatpush.msra.mxu0 %v542
    %1183 = vmatpush.msra.mxu0 %v534
    %1184 = vmatpush.msra.mxu0 %v526
    %1185 = vmatpush.msra.mxu0 %v518
    %1186 = vmatpush.msra.mxu0 %v510
    %1187 = vmatpush.msra.mxu0 %v502
    %1188 = vmatpush.msra.mxu0 %v494
    %1189 = vmatpush.msra.mxu0 %v486
    %1190 = vmatpush.msra.mxu0 %v478
    %1191 = vmatpush.msra.mxu0 %v470
    %1192 = vmatpush.msra.mxu0 %v462
    %1193 = vmatpush.msra.mxu0 %v454
    %1194 = vmatpush.msra.mxu0 %v446
    %1195 = vmatpush.msra.mxu0 %v438
    %1196 = vmatpush.msra.mxu0 %v430
    %1197 = vmatmul.f32.gmra.mxu0 %v1177
    %v1198 = vpop.f32.mrf.mxu0
    %v1199 = vadd.f32 0.0, %v1198
    %1200 = vdwg.mxu0
    %1201 = vmatpush.msra.mxu0 %v678
    %1202 = vmatpush.msra.mxu0 %v670
    %1203 = vmatpush.msra.mxu0 %v662
    %1204 = vmatpush.msra.mxu0 %v654
    %1205 = vmatpush.msra.mxu0 %v646
    %1206 = vmatpush.msra.mxu0 %v638
    %1207 = vmatpush.msra.mxu0 %v630
    %1208 = vmatpush.msra.mxu0 %v622
    %1209 = vmatpush.msra.mxu0 %v614
    %1210 = vmatpush.msra.mxu0 %v606
    %1211 = vmatpush.msra.mxu0 %v598
    %1212 = vmatpush.msra.mxu0 %v590
    %1213 = vmatpush.msra.mxu0 %v582
    %1214 = vmatpush.msra.mxu0 %v574
    %1215 = vmatpush.msra.mxu0 %v566
    %1216 = vmatpush.msra.mxu0 %v558
    %1217 = vmatmul.f32.gmra.mxu0 %v1178
    %v1218 = vpop.f32.mrf.mxu0
    %v1219 = vadd.f32 %v1199, %v1218
    %1220 = vdwg.mxu0
    %1221 = vmatpush.msra.mxu0 %v551
    %1222 = vmatpush.msra.mxu0 %v543
    %1223 = vmatpush.msra.mxu0 %v535
    %1224 = vmatpush.msra.mxu0 %v527
    %1225 = vmatpush.msra.mxu0 %v519
    %1226 = vmatpush.msra.mxu0 %v511
    %1227 = vmatpush.msra.mxu0 %v503
    %1228 = vmatpush.msra.mxu0 %v495
    %1229 = vmatpush.msra.mxu0 %v487
    %1230 = vmatpush.msra.mxu0 %v479
    %1231 = vmatpush.msra.mxu0 %v471
    %1232 = vmatpush.msra.mxu0 %v463
    %1233 = vmatpush.msra.mxu0 %v455
    %1234 = vmatpush.msra.mxu0 %v447
    %1235 = vmatpush.msra.mxu0 %v439
    %1236 = vmatpush.msra.mxu0 %v431
    %1237 = vmatmul.f32.gmra.mxu0 %v1177
    %v1238 = vpop.f32.mrf.mxu0
    %v1239 = vadd.f32 0.0, %v1238
    %1240 = vdwg.mxu0
    %1241 = vmatpush.msra.mxu0 %v679
    %1242 = vmatpush.msra.mxu0 %v671
    %1243 = vmatpush.msra.mxu0 %v663
    %1244 = vmatpush.msra.mxu0 %v655
    %1245 = vmatpush.msra.mxu0 %v647
    %1246 = vmatpush.msra.mxu0 %v639
    %1247 = vmatpush.msra.mxu0 %v631
    %1248 = vmatpush.msra.mxu0 %v623
    %1249 = vmatpush.msra.mxu0 %v615
    %1250 = vmatpush.msra.mxu0 %v607
    %1251 = vmatpush.msra.mxu0 %v599
    %1252 = vmatpush.msra.mxu0 %v591
    %1253 = vmatpush.msra.mxu0 %v583
    %1254 = vmatpush.msra.mxu0 %v575
    %1255 = vmatpush.msra.mxu0 %v567
    %1256 = vmatpush.msra.mxu0 %v559
    %1257 = vmatmul.f32.gmra.mxu0 %v1178
    %v1258 = vpop.f32.mrf.mxu0
    %v1259 = vadd.f32 %v1239, %v1258
    %1260 = vdwg.mxu0
    %1261 = vmatpush.msra.mxu0 %v552
    %1262 = vmatpush.msra.mxu0 %v544
    %1263 = vmatpush.msra.mxu0 %v536
    %1264 = vmatpush.msra.mxu0 %v528
    %1265 = vmatpush.msra.mxu0 %v520
    %1266 = vmatpush.msra.mxu0 %v512
    %1267 = vmatpush.msra.mxu0 %v504
    %1268 = vmatpush.msra.mxu0 %v496
    %1269 = vmatpush.msra.mxu0 %v488
    %1270 = vmatpush.msra.mxu0 %v480
    %1271 = vmatpush.msra.mxu0 %v472
    %1272 = vmatpush.msra.mxu0 %v464
    %1273 = vmatpush.msra.mxu0 %v456
    %1274 = vmatpush.msra.mxu0 %v448
    %1275 = vmatpush.msra.mxu0 %v440
    %1276 = vmatpush.msra.mxu0 %v432
    %1277 = vmatmul.f32.gmra.mxu0 %v1177
    %v1278 = vpop.f32.mrf.mxu0
    %v1279 = vadd.f32 0.0, %v1278
    %1280 = vdwg.mxu0
    %1281 = vmatpush.msra.mxu0 %v680
    %1282 = vmatpush.msra.mxu0 %v672
    %1283 = vmatpush.msra.mxu0 %v664
    %1284 = vmatpush.msra.mxu0 %v656
    %1285 = vmatpush.msra.mxu0 %v648
    %1286 = vmatpush.msra.mxu0 %v640
    %1287 = vmatpush.msra.mxu0 %v632
    %1288 = vmatpush.msra.mxu0 %v624
    %1289 = vmatpush.msra.mxu0 %v616
    %1290 = vmatpush.msra.mxu0 %v608
    %1291 = vmatpush.msra.mxu0 %v600
    %1292 = vmatpush.msra.mxu0 %v592
    %1293 = vmatpush.msra.mxu0 %v584
    %1294 = vmatpush.msra.mxu0 %v576
    %1295 = vmatpush.msra.mxu0 %v568
    %1296 = vmatpush.msra.mxu0 %v560
    %1297 = vmatmul.f32.gmra.mxu0 %v1178
    %v1298 = vpop.f32.mrf.mxu0
    %v1299 = vadd.f32 %v1279, %v1298
    %1300 = vdwg.mxu0
    %1301 = vmatpush.msra.mxu0 %v553
    %1302 = vmatpush.msra.mxu0 %v545
    %1303 = vmatpush.msra.mxu0 %v537
    %1304 = vmatpush.msra.mxu0 %v529
    %1305 = vmatpush.msra.mxu0 %v521
    %1306 = vmatpush.msra.mxu0 %v513
    %1307 = vmatpush.msra.mxu0 %v505
    %1308 = vmatpush.msra.mxu0 %v497
    %1309 = vmatpush.msra.mxu0 %v489
    %1310 = vmatpush.msra.mxu0 %v481
    %1311 = vmatpush.msra.mxu0 %v473
    %1312 = vmatpush.msra.mxu0 %v465
    %1313 = vmatpush.msra.mxu0 %v457
    %1314 = vmatpush.msra.mxu0 %v449
    %1315 = vmatpush.msra.mxu0 %v441
    %1316 = vmatpush.msra.mxu0 %v433
    %1317 = vmatmul.f32.gmra.mxu0 %v1177
    %v1318 = vpop.f32.mrf.mxu0
    %v1319 = vadd.f32 0.0, %v1318
    %1320 = vdwg.mxu0
    %1321 = vmatpush.msra.mxu0 %v681
    %1322 = vmatpush.msra.mxu0 %v673
    %1323 = vmatpush.msra.mxu0 %v665
    %1324 = vmatpush.msra.mxu0 %v657
    %1325 = vmatpush.msra.mxu0 %v649
    %1326 = vmatpush.msra.mxu0 %v641
    %1327 = vmatpush.msra.mxu0 %v633
    %1328 = vmatpush.msra.mxu0 %v625
    %1329 = vmatpush.msra.mxu0 %v617
    %1330 = vmatpush.msra.mxu0 %v609
    %1331 = vmatpush.msra.mxu0 %v601
    %1332 = vmatpush.msra.mxu0 %v593
    %1333 = vmatpush.msra.mxu0 %v585
    %1334 = vmatpush.msra.mxu0 %v577
    %1335 = vmatpush.msra.mxu0 %v569
    %1336 = vmatpush.msra.mxu0 %v561
    %1337 = vmatmul.f32.gmra.mxu0 %v1178
    %v1338 = vpop.f32.mrf.mxu0
    %v1339 = vadd.f32 %v1319, %v1338
    %1340 = vdwg.mxu0
    %1341 = vmatpush.msra.mxu0 %v554
    %1342 = vmatpush.msra.mxu0 %v546
    %1343 = vmatpush.msra.mxu0 %v538
    %1344 = vmatpush.msra.mxu0 %v530
    %1345 = vmatpush.msra.mxu0 %v522
    %1346 = vmatpush.msra.mxu0 %v514
    %1347 = vmatpush.msra.mxu0 %v506
    %1348 = vmatpush.msra.mxu0 %v498
    %1349 = vmatpush.msra.mxu0 %v490
    %1350 = vmatpush.msra.mxu0 %v482
    %1351 = vmatpush.msra.mxu0 %v474
    %1352 = vmatpush.msra.mxu0 %v466
    %1353 = vmatpush.msra.mxu0 %v458
    %1354 = vmatpush.msra.mxu0 %v450
    %1355 = vmatpush.msra.mxu0 %v442
    %1356 = vmatpush.msra.mxu0 %v434
    %1357 = vmatmul.f32.gmra.mxu0 %v1177
    %v1358 = vpop.f32.mrf.mxu0
    %v1359 = vadd.f32 0.0, %v1358
    %1360 = vdwg.mxu0
    %1361 = vmatpush.msra.mxu0 %v682
    %1362 = vmatpush.msra.mxu0 %v674
    %1363 = vmatpush.msra.mxu0 %v666
    %1364 = vmatpush.msra.mxu0 %v658
    %1365 = vmatpush.msra.mxu0 %v650
    %1366 = vmatpush.msra.mxu0 %v642
    %1367 = vmatpush.msra.mxu0 %v634
    %1368 = vmatpush.msra.mxu0 %v626
    %1369 = vmatpush.msra.mxu0 %v618
    %1370 = vmatpush.msra.mxu0 %v610
    %1371 = vmatpush.msra.mxu0 %v602
    %1372 = vmatpush.msra.mxu0 %v594
    %1373 = vmatpush.msra.mxu0 %v586
    %1374 = vmatpush.msra.mxu0 %v578
    %1375 = vmatpush.msra.mxu0 %v570
    %1376 = vmatpush.msra.mxu0 %v562
    %1377 = vmatmul.f32.gmra.mxu0 %v1178
    %v1378 = vpop.f32.mrf.mxu0
    %v1379 = vadd.f32 %v1359, %v1378
    %1380 = vdwg.mxu0
    %1381 = vmatpush.msra.mxu0 %v555
    %1382 = vmatpush.msra.mxu0 %v547
    %1383 = vmatpush.msra.mxu0 %v539
    %1384 = vmatpush.msra.mxu0 %v531
    %1385 = vmatpush.msra.mxu0 %v523
    %1386 = vmatpush.msra.mxu0 %v515
    %1387 = vmatpush.msra.mxu0 %v507
    %1388 = vmatpush.msra.mxu0 %v499
    %1389 = vmatpush.msra.mxu0 %v491
    %1390 = vmatpush.msra.mxu0 %v483
    %1391 = vmatpush.msra.mxu0 %v475
    %1392 = vmatpush.msra.mxu0 %v467
    %1393 = vmatpush.msra.mxu0 %v459
    %1394 = vmatpush.msra.mxu0 %v451
    %1395 = vmatpush.msra.mxu0 %v443
    %1396 = vmatpush.msra.mxu0 %v435
    %1397 = vmatmul.f32.gmra.mxu0 %v1177
    %v1398 = vpop.f32.mrf.mxu0
    %v1399 = vadd.f32 0.0, %v1398
    %1400 = vdwg.mxu0
    %1401 = vmatpush.msra.mxu0 %v683
    %1402 = vmatpush.msra.mxu0 %v675
    %1403 = vmatpush.msra.mxu0 %v667
    %1404 = vmatpush.msra.mxu0 %v659
    %1405 = vmatpush.msra.mxu0 %v651
    %1406 = vmatpush.msra.mxu0 %v643
    %1407 = vmatpush.msra.mxu0 %v635
    %1408 = vmatpush.msra.mxu0 %v627
    %1409 = vmatpush.msra.mxu0 %v619
    %1410 = vmatpush.msra.mxu0 %v611
    %1411 = vmatpush.msra.mxu0 %v603
    %1412 = vmatpush.msra.mxu0 %v595
    %1413 = vmatpush.msra.mxu0 %v587
    %1414 = vmatpush.msra.mxu0 %v579
    %1415 = vmatpush.msra.mxu0 %v571
    %1416 = vmatpush.msra.mxu0 %v563
    %1417 = vmatmul.f32.gmra.mxu0 %v1178
    %v1418 = vpop.f32.mrf.mxu0
    %v1419 = vadd.f32 %v1399, %v1418
    %1420 = vdwg.mxu0
    %1421 = vmatpush.msra.mxu0 %v556
    %1422 = vmatpush.msra.mxu0 %v548
    %1423 = vmatpush.msra.mxu0 %v540
    %1424 = vmatpush.msra.mxu0 %v532
    %1425 = vmatpush.msra.mxu0 %v524
    %1426 = vmatpush.msra.mxu0 %v516
    %1427 = vmatpush.msra.mxu0 %v508
    %1428 = vmatpush.msra.mxu0 %v500
    %1429 = vmatpush.msra.mxu0 %v492
    %1430 = vmatpush.msra.mxu0 %v484
    %1431 = vmatpush.msra.mxu0 %v476
    %1432 = vmatpush.msra.mxu0 %v468
    %1433 = vmatpush.msra.mxu0 %v460
    %1434 = vmatpush.msra.mxu0 %v452
    %1435 = vmatpush.msra.mxu0 %v444
    %1436 = vmatpush.msra.mxu0 %v436
    %1437 = vmatmul.f32.gmra.mxu0 %v1177
    %v1438 = vpop.f32.mrf.mxu0
    %v1439 = vadd.f32 0.0, %v1438
    %1440 = vdwg.mxu0
    %1441 = vmatpush.msra.mxu0 %v684
    %1442 = vmatpush.msra.mxu0 %v676
    %1443 = vmatpush.msra.mxu0 %v668
    %1444 = vmatpush.msra.mxu0 %v660
    %1445 = vmatpush.msra.mxu0 %v652
    %1446 = vmatpush.msra.mxu0 %v644
    %1447 = vmatpush.msra.mxu0 %v636
    %1448 = vmatpush.msra.mxu0 %v628
    %1449 = vmatpush.msra.mxu0 %v620
    %1450 = vmatpush.msra.mxu0 %v612
    %1451 = vmatpush.msra.mxu0 %v604
    %1452 = vmatpush.msra.mxu0 %v596
    %1453 = vmatpush.msra.mxu0 %v588
    %1454 = vmatpush.msra.mxu0 %v580
    %1455 = vmatpush.msra.mxu0 %v572
    %1456 = vmatpush.msra.mxu0 %v564
    %1457 = vmatmul.f32.gmra.mxu0 %v1178
    %v1458 = vpop.f32.mrf.mxu0
    %v1459 = vadd.f32 %v1439, %v1458
    %1460 = vdwg.mxu0
    %1461 = vmatpush.msra.mxu0 %v557
    %1462 = vmatpush.msra.mxu0 %v549
    %1463 = vmatpush.msra.mxu0 %v541
    %1464 = vmatpush.msra.mxu0 %v533
    %1465 = vmatpush.msra.mxu0 %v525
    %1466 = vmatpush.msra.mxu0 %v517
    %1467 = vmatpush.msra.mxu0 %v509
    %1468 = vmatpush.msra.mxu0 %v501
    %1469 = vmatpush.msra.mxu0 %v493
    %1470 = vmatpush.msra.mxu0 %v485
    %1471 = vmatpush.msra.mxu0 %v477
    %1472 = vmatpush.msra.mxu0 %v469
    %1473 = vmatpush.msra.mxu0 %v461
    %1474 = vmatpush.msra.mxu0 %v453
    %1475 = vmatpush.msra.mxu0 %v445
    %1476 = vmatpush.msra.mxu0 %v437
    %1477 = vmatmul.f32.gmra.mxu0 %v1177
    %v1478 = vpop.f32.mrf.mxu0
    %v1479 = vadd.f32 0.0, %v1478
    %1480 = vdwg.mxu0
    %1481 = vmatpush.msra.mxu0 %v685
    %1482 = vmatpush.msra.mxu0 %v677
    %1483 = vmatpush.msra.mxu0 %v669
    %1484 = vmatpush.msra.mxu0 %v661
    %1485 = vmatpush.msra.mxu0 %v653
    %1486 = vmatpush.msra.mxu0 %v645
    %1487 = vmatpush.msra.mxu0 %v637
    %1488 = vmatpush.msra.mxu0 %v629
    %1489 = vmatpush.msra.mxu0 %v621
    %1490 = vmatpush.msra.mxu0 %v613
    %1491 = vmatpush.msra.mxu0 %v605
    %1492 = vmatpush.msra.mxu0 %v597
    %1493 = vmatpush.msra.mxu0 %v589
    %1494 = vmatpush.msra.mxu0 %v581
    %1495 = vmatpush.msra.mxu0 %v573
    %1496 = vmatpush.msra.mxu0 %v565
    %1497 = vmatmul.f32.gmra.mxu0 %v1178
    %v1498 = vpop.f32.mrf.mxu0
    %v1499 = vadd.f32 %v1479, %v1498
    %1500 = vdwg.mxu0
    %v1509 = vrot.slane %v1219, 6
    %v1510 = vrot.slane %v1259, 6
    %v1511 = vrot.slane %v1299, 6
    %v1512 = vrot.slane %v1339, 6
    %v1513 = vrot.slane %v1379, 6
    %v1514 = vrot.slane %v1419, 6
    %v1515 = vrot.slane %v1459, 6
    %v1516 = vrot.slane %v1499, 6
    %v1525 = vadd.f32 %v155, %v1509
    %v1526 = vadd.f32 %v175, %v1510
    %v1527 = vadd.f32 %v195, %v1511
    %v1528 = vadd.f32 %v215, %v1512
    %v1529 = vadd.f32 %v235, %v1513
    %v1530 = vadd.f32 %v255, %v1514
    %v1531 = vadd.f32 %v275, %v1515
    %v1532 = vadd.f32 %v295, %v1516
    %v1533 = vxor.u32 %v1525, 2147483648
    %v1534 = vxor.u32 %v1526, 2147483648
    %v1535 = vxor.u32 %v1527, 2147483648
    %v1536 = vxor.u32 %v1528, 2147483648
    %v1537 = vxor.u32 %v1529, 2147483648
    %v1538 = vxor.u32 %v1530, 2147483648
    %v1539 = vmul.f32 %v1533, 1.442695
    %v1540 = vpow.pop %v1539
    %v1541 = vmul.f32 %v1534, 1.442695
    %v1542 = vpow.pop %v1541
    %v1543 = vmul.f32 %v1535, 1.442695
    %v1544 = vpow.pop %v1543
    %v1545 = vmul.f32 %v1536, 1.442695
    %v1546 = vpow.pop %v1545
    %v1547 = vmul.f32 %v1537, 1.442695
    %v1548 = vpow.pop %v1547
    %v1549 = vmul.f32 %v1538, 1.442695
    %v1550 = vpow.pop %v1549
    %v1551 = vadd.f32 %v1540, 1.0
    %v1552 = vadd.f32 %v1542, 1.0
    %v1553 = vadd.f32 %v1544, 1.0
    %v1554 = vadd.f32 %v1546, 1.0
    %v1555 = vadd.f32 %v1548, 1.0
    %v1556 = vadd.f32 %v1550, 1.0
    %v1557 = vrcp.pop %v1551
    %v1558 = vmul.f32 %v1551, %v1557
    %v1559 = vsub.f32 1.0, %v1558
    %v1560 = vmul.f32 %v1557, %v1559
    %v1561 = vadd.f32 %v1557, %v1560
    %vm1562 = vweird.f32 %v1551
    %vm1563 = vweird.f32 %v1557
    %vm1564 = vmor %vm1562, %vm1563
    %v1565 = vsel %vm1564, %v1557, %v1561
    %v1566 = vand.u32 2147483647, %v1551
    %vm1567 = vcmp.eq.f32.partialorder %v1566, 8.507059e+37
    %v1568 = vand.u32 %v1551, 2147483648
    %v1569 = vor.u32 1.1754944e-38, %v1568
    %v1570 = vsel %vm1567, %v1569, %v1565
    %v1571 = vmul.f32 1.0, %v1570
    %v1572 = vrcp.pop %v1552
    %v1573 = vmul.f32 %v1552, %v1572
    %v1574 = vsub.f32 1.0, %v1573
    %v1575 = vmul.f32 %v1572, %v1574
    %v1576 = vadd.f32 %v1572, %v1575
    %vm1577 = vweird.f32 %v1552
    %vm1578 = vweird.f32 %v1572
    %vm1579 = vmor %vm1577, %vm1578
    %v1580 = vsel %vm1579, %v1572, %v1576
    %v1581 = vand.u32 2147483647, %v1552
    %vm1582 = vcmp.eq.f32.partialorder %v1581, 8.507059e+37
    %v1583 = vand.u32 %v1552, 2147483648
    %v1584 = vor.u32 1.1754944e-38, %v1583
    %v1585 = vsel %vm1582, %v1584, %v1580
    %v1586 = vmul.f32 1.0, %v1585
    %v1587 = vrcp.pop %v1553
    %v1588 = vmul.f32 %v1553, %v1587
    %v1589 = vsub.f32 1.0, %v1588
    %v1590 = vmul.f32 %v1587, %v1589
    %v1591 = vadd.f32 %v1587, %v1590
    %vm1592 = vweird.f32 %v1553
    %vm1593 = vweird.f32 %v1587
    %vm1594 = vmor %vm1592, %vm1593
    %v1595 = vsel %vm1594, %v1587, %v1591
    %v1596 = vand.u32 2147483647, %v1553
    %vm1597 = vcmp.eq.f32.partialorder %v1596, 8.507059e+37
    %v1598 = vand.u32 %v1553, 2147483648
    %v1599 = vor.u32 1.1754944e-38, %v1598
    %v1600 = vsel %vm1597, %v1599, %v1595
    %v1601 = vmul.f32 1.0, %v1600
    %v1602 = vrcp.pop %v1554
    %v1603 = vmul.f32 %v1554, %v1602
    %v1604 = vsub.f32 1.0, %v1603
    %v1605 = vmul.f32 %v1602, %v1604
    %v1606 = vadd.f32 %v1602, %v1605
    %vm1607 = vweird.f32 %v1554
    %vm1608 = vweird.f32 %v1602
    %vm1609 = vmor %vm1607, %vm1608
    %v1610 = vsel %vm1609, %v1602, %v1606
    %v1611 = vand.u32 2147483647, %v1554
    %vm1612 = vcmp.eq.f32.partialorder %v1611, 8.507059e+37
    %v1613 = vand.u32 %v1554, 2147483648
    %v1614 = vor.u32 1.1754944e-38, %v1613
    %v1615 = vsel %vm1612, %v1614, %v1610
    %v1616 = vmul.f32 1.0, %v1615
    %v1617 = vrcp.pop %v1555
    %v1618 = vmul.f32 %v1555, %v1617
    %v1619 = vsub.f32 1.0, %v1618
    %v1620 = vmul.f32 %v1617, %v1619
    %v1621 = vadd.f32 %v1617, %v1620
    %vm1622 = vweird.f32 %v1555
    %vm1623 = vweird.f32 %v1617
    %vm1624 = vmor %vm1622, %vm1623
    %v1625 = vsel %vm1624, %v1617, %v1621
    %v1626 = vand.u32 2147483647, %v1555
    %vm1627 = vcmp.eq.f32.partialorder %v1626, 8.507059e+37
    %v1628 = vand.u32 %v1555, 2147483648
    %v1629 = vor.u32 1.1754944e-38, %v1628
    %v1630 = vsel %vm1627, %v1629, %v1625
    %v1631 = vmul.f32 1.0, %v1630
    %v1632 = vrcp.pop %v1556
    %v1633 = vmul.f32 %v1556, %v1632
    %v1634 = vsub.f32 1.0, %v1633
    %v1635 = vmul.f32 %v1632, %v1634
    %v1636 = vadd.f32 %v1632, %v1635
    %vm1637 = vweird.f32 %v1556
    %vm1638 = vweird.f32 %v1632
    %vm1639 = vmor %vm1637, %vm1638
    %v1640 = vsel %vm1639, %v1632, %v1636
    %v1641 = vand.u32 2147483647, %v1556
    %vm1642 = vcmp.eq.f32.partialorder %v1641, 8.507059e+37
    %v1643 = vand.u32 %v1556, 2147483648
    %v1644 = vor.u32 1.1754944e-38, %v1643
    %v1645 = vsel %vm1642, %v1644, %v1640
    %v1646 = vmul.f32 1.0, %v1645
    %v1647 = vtanh.pop %v1531
    %v1648 = vtanh.pop %v1532
    %v1651 = vrot.slane %v1164, 7
    %v1652 = vrot.slane %v1165, 7
    %v1655 = vmul.f32 %v1601, %v1651
    %v1656 = vmul.f32 %v1616, %v1652
    %v1657 = vmul.f32 %v1571, %v1647
    %v1658 = vmul.f32 %v1586, %v1648
    %v1659 = vadd.f32 %v1655, %v1657
    %v1660 = vadd.f32 %v1656, %v1658
    %v1661 = vtanh.pop %v1659
    %v1662 = vtanh.pop %v1660
    %v1663 = vmul.f32 %v1631, %v1661
    %v1664 = vmul.f32 %v1646, %v1662
    %vm1665 = vcmp.eq.s32.totalorder %v298, 2
    %v1666 = vperm.slane %v1663, 2
    %v1667 = vperm.slane %v1664, 2
    %v1668 = vsel %vm1665, %v1666, %v1173
    %v1669 = vsel %vm1665, %v1667, %v1174
    %v1672 = vrot.slane %v1663, 2
    %v1673 = vrot.slane %v1664, 2
    %1676 = vmatpush.msra.mxu0 %v550
    %1677 = vmatpush.msra.mxu0 %v542
    %1678 = vmatpush.msra.mxu0 %v534
    %1679 = vmatpush.msra.mxu0 %v526
    %1680 = vmatpush.msra.mxu0 %v518
    %1681 = vmatpush.msra.mxu0 %v510
    %1682 = vmatpush.msra.mxu0 %v502
    %1683 = vmatpush.msra.mxu0 %v494
    %1684 = vmatpush.msra.mxu0 %v486
    %1685 = vmatpush.msra.mxu0 %v478
    %1686 = vmatpush.msra.mxu0 %v470
    %1687 = vmatpush.msra.mxu0 %v462
    %1688 = vmatpush.msra.mxu0 %v454
    %1689 = vmatpush.msra.mxu0 %v446
    %1690 = vmatpush.msra.mxu0 %v438
    %1691 = vmatpush.msra.mxu0 %v430
    %1692 = vmatmul.f32.gmra.mxu0 %v1672
    %v1693 = vpop.f32.mrf.mxu0
    %v1694 = vadd.f32 0.0, %v1693
    %1695 = vdwg.mxu0
    %1696 = vmatpush.msra.mxu0 %v678
    %1697 = vmatpush.msra.mxu0 %v670
    %1698 = vmatpush.msra.mxu0 %v662
    %1699 = vmatpush.msra.mxu0 %v654
    %1700 = vmatpush.msra.mxu0 %v646
    %1701 = vmatpush.msra.mxu0 %v638
    %1702 = vmatpush.msra.mxu0 %v630
    %1703 = vmatpush.msra.mxu0 %v622
    %1704 = vmatpush.msra.mxu0 %v614
    %1705 = vmatpush.msra.mxu0 %v606
    %1706 = vmatpush.msra.mxu0 %v598
    %1707 = vmatpush.msra.mxu0 %v590
    %1708 = vmatpush.msra.mxu0 %v582
    %1709 = vmatpush.msra.mxu0 %v574
    %1710 = vmatpush.msra.mxu0 %v566
    %1711 = vmatpush.msra.mxu0 %v558
    %1712 = vmatmul.f32.gmra.mxu0 %v1673
    %v1713 = vpop.f32.mrf.mxu0
    %v1714 = vadd.f32 %v1694, %v1713
    %1715 = vdwg.mxu0
    %1716 = vmatpush.msra.mxu0 %v551
    %1717 = vmatpush.msra.mxu0 %v543
    %1718 = vmatpush.msra.mxu0 %v535
    %1719 = vmatpush.msra.mxu0 %v527
    %1720 = vmatpush.msra.mxu0 %v519
    %1721 = vmatpush.msra.mxu0 %v511
    %1722 = vmatpush.msra.mxu0 %v503
    %1723 = vmatpush.msra.mxu0 %v495
    %1724 = vmatpush.msra.mxu0 %v487
    %1725 = vmatpush.msra.mxu0 %v479
    %1726 = vmatpush.msra.mxu0 %v471
    %1727 = vmatpush.msra.mxu0 %v463
    %1728 = vmatpush.msra.mxu0 %v455
    %1729 = vmatpush.msra.mxu0 %v447
    %1730 = vmatpush.msra.mxu0 %v439
    %1731 = vmatpush.msra.mxu0 %v431
    %1732 = vmatmul.f32.gmra.mxu0 %v1672
    %v1733 = vpop.f32.mrf.mxu0
    %v1734 = vadd.f32 0.0, %v1733
    %1735 = vdwg.mxu0
    %1736 = vmatpush.msra.mxu0 %v679
    %1737 = vmatpush.msra.mxu0 %v671
    %1738 = vmatpush.msra.mxu0 %v663
    %1739 = vmatpush.msra.mxu0 %v655
    %1740 = vmatpush.msra.mxu0 %v647
    %1741 = vmatpush.msra.mxu0 %v639
    %1742 = vmatpush.msra.mxu0 %v631
    %1743 = vmatpush.msra.mxu0 %v623
    %1744 = vmatpush.msra.mxu0 %v615
    %1745 = vmatpush.msra.mxu0 %v607
    %1746 = vmatpush.msra.mxu0 %v599
    %1747 = vmatpush.msra.mxu0 %v591
    %1748 = vmatpush.msra.mxu0 %v583
    %1749 = vmatpush.msra.mxu0 %v575
    %1750 = vmatpush.msra.mxu0 %v567
    %1751 = vmatpush.msra.mxu0 %v559
    %1752 = vmatmul.f32.gmra.mxu0 %v1673
    %v1753 = vpop.f32.mrf.mxu0
    %v1754 = vadd.f32 %v1734, %v1753
    %1755 = vdwg.mxu0
    %1756 = vmatpush.msra.mxu0 %v552
    %1757 = vmatpush.msra.mxu0 %v544
    %1758 = vmatpush.msra.mxu0 %v536
    %1759 = vmatpush.msra.mxu0 %v528
    %1760 = vmatpush.msra.mxu0 %v520
    %1761 = vmatpush.msra.mxu0 %v512
    %1762 = vmatpush.msra.mxu0 %v504
    %1763 = vmatpush.msra.mxu0 %v496
    %1764 = vmatpush.msra.mxu0 %v488
    %1765 = vmatpush.msra.mxu0 %v480
    %1766 = vmatpush.msra.mxu0 %v472
    %1767 = vmatpush.msra.mxu0 %v464
    %1768 = vmatpush.msra.mxu0 %v456
    %1769 = vmatpush.msra.mxu0 %v448
    %1770 = vmatpush.msra.mxu0 %v440
    %1771 = vmatpush.msra.mxu0 %v432
    %1772 = vmatmul.f32.gmra.mxu0 %v1672
    %v1773 = vpop.f32.mrf.mxu0
    %v1774 = vadd.f32 0.0, %v1773
    %1775 = vdwg.mxu0
    %1776 = vmatpush.msra.mxu0 %v680
    %1777 = vmatpush.msra.mxu0 %v672
    %1778 = vmatpush.msra.mxu0 %v664
    %1779 = vmatpush.msra.mxu0 %v656
    %1780 = vmatpush.msra.mxu0 %v648
    %1781 = vmatpush.msra.mxu0 %v640
    %1782 = vmatpush.msra.mxu0 %v632
    %1783 = vmatpush.msra.mxu0 %v624
    %1784 = vmatpush.msra.mxu0 %v616
    %1785 = vmatpush.msra.mxu0 %v608
    %1786 = vmatpush.msra.mxu0 %v600
    %1787 = vmatpush.msra.mxu0 %v592
    %1788 = vmatpush.msra.mxu0 %v584
    %1789 = vmatpush.msra.mxu0 %v576
    %1790 = vmatpush.msra.mxu0 %v568
    %1791 = vmatpush.msra.mxu0 %v560
    %1792 = vmatmul.f32.gmra.mxu0 %v1673
    %v1793 = vpop.f32.mrf.mxu0
    %v1794 = vadd.f32 %v1774, %v1793
    %1795 = vdwg.mxu0
    %1796 = vmatpush.msra.mxu0 %v553
    %1797 = vmatpush.msra.mxu0 %v545
    %1798 = vmatpush.msra.mxu0 %v537
    %1799 = vmatpush.msra.mxu0 %v529
    %1800 = vmatpush.msra.mxu0 %v521
    %1801 = vmatpush.msra.mxu0 %v513
    %1802 = vmatpush.msra.mxu0 %v505
    %1803 = vmatpush.msra.mxu0 %v497
    %1804 = vmatpush.msra.mxu0 %v489
    %1805 = vmatpush.msra.mxu0 %v481
    %1806 = vmatpush.msra.mxu0 %v473
    %1807 = vmatpush.msra.mxu0 %v465
    %1808 = vmatpush.msra.mxu0 %v457
    %1809 = vmatpush.msra.mxu0 %v449
    %1810 = vmatpush.msra.mxu0 %v441
    %1811 = vmatpush.msra.mxu0 %v433
    %1812 = vmatmul.f32.gmra.mxu0 %v1672
    %v1813 = vpop.f32.mrf.mxu0
    %v1814 = vadd.f32 0.0, %v1813
    %1815 = vdwg.mxu0
    %1816 = vmatpush.msra.mxu0 %v681
    %1817 = vmatpush.msra.mxu0 %v673
    %1818 = vmatpush.msra.mxu0 %v665
    %1819 = vmatpush.msra.mxu0 %v657
    %1820 = vmatpush.msra.mxu0 %v649
    %1821 = vmatpush.msra.mxu0 %v641
    %1822 = vmatpush.msra.mxu0 %v633
    %1823 = vmatpush.msra.mxu0 %v625
    %1824 = vmatpush.msra.mxu0 %v617
    %1825 = vmatpush.msra.mxu0 %v609
    %1826 = vmatpush.msra.mxu0 %v601
    %1827 = vmatpush.msra.mxu0 %v593
    %1828 = vmatpush.msra.mxu0 %v585
    %1829 = vmatpush.msra.mxu0 %v577
    %1830 = vmatpush.msra.mxu0 %v569
    %1831 = vmatpush.msra.mxu0 %v561
    %1832 = vmatmul.f32.gmra.mxu0 %v1673
    %v1833 = vpop.f32.mrf.mxu0
    %v1834 = vadd.f32 %v1814, %v1833
    %1835 = vdwg.mxu0
    %1836 = vmatpush.msra.mxu0 %v554
    %1837 = vmatpush.msra.mxu0 %v546
    %1838 = vmatpush.msra.mxu0 %v538
    %1839 = vmatpush.msra.mxu0 %v530
    %1840 = vmatpush.msra.mxu0 %v522
    %1841 = vmatpush.msra.mxu0 %v514
    %1842 = vmatpush.msra.mxu0 %v506
    %1843 = vmatpush.msra.mxu0 %v498
    %1844 = vmatpush.msra.mxu0 %v490
    %1845 = vmatpush.msra.mxu0 %v482
    %1846 = vmatpush.msra.mxu0 %v474
    %1847 = vmatpush.msra.mxu0 %v466
    %1848 = vmatpush.msra.mxu0 %v458
    %1849 = vmatpush.msra.mxu0 %v450
    %1850 = vmatpush.msra.mxu0 %v442
    %1851 = vmatpush.msra.mxu0 %v434
    %1852 = vmatmul.f32.gmra.mxu0 %v1672
    %v1853 = vpop.f32.mrf.mxu0
    %v1854 = vadd.f32 0.0, %v1853
    %1855 = vdwg.mxu0
    %1856 = vmatpush.msra.mxu0 %v682
    %1857 = vmatpush.msra.mxu0 %v674
    %1858 = vmatpush.msra.mxu0 %v666
    %1859 = vmatpush.msra.mxu0 %v658
    %1860 = vmatpush.msra.mxu0 %v650
    %1861 = vmatpush.msra.mxu0 %v642
    %1862 = vmatpush.msra.mxu0 %v634
    %1863 = vmatpush.msra.mxu0 %v626
    %1864 = vmatpush.msra.mxu0 %v618
    %1865 = vmatpush.msra.mxu0 %v610
    %1866 = vmatpush.msra.mxu0 %v602
    %1867 = vmatpush.msra.mxu0 %v594
    %1868 = vmatpush.msra.mxu0 %v586
    %1869 = vmatpush.msra.mxu0 %v578
    %1870 = vmatpush.msra.mxu0 %v570
    %1871 = vmatpush.msra.mxu0 %v562
    %1872 = vmatmul.f32.gmra.mxu0 %v1673
    %v1873 = vpop.f32.mrf.mxu0
    %v1874 = vadd.f32 %v1854, %v1873
    %1875 = vdwg.mxu0
    %1876 = vmatpush.msra.mxu0 %v555
    %1877 = vmatpush.msra.mxu0 %v547
    %1878 = vmatpush.msra.mxu0 %v539
    %1879 = vmatpush.msra.mxu0 %v531
    %1880 = vmatpush.msra.mxu0 %v523
    %1881 = vmatpush.msra.mxu0 %v515
    %1882 = vmatpush.msra.mxu0 %v507
    %1883 = vmatpush.msra.mxu0 %v499
    %1884 = vmatpush.msra.mxu0 %v491
    %1885 = vmatpush.msra.mxu0 %v483
    %1886 = vmatpush.msra.mxu0 %v475
    %1887 = vmatpush.msra.mxu0 %v467
    %1888 = vmatpush.msra.mxu0 %v459
    %1889 = vmatpush.msra.mxu0 %v451
    %1890 = vmatpush.msra.mxu0 %v443
    %1891 = vmatpush.msra.mxu0 %v435
    %1892 = vmatmul.f32.gmra.mxu0 %v1672
    %v1893 = vpop.f32.mrf.mxu0
    %v1894 = vadd.f32 0.0, %v1893
    %1895 = vdwg.mxu0
    %1896 = vmatpush.msra.mxu0 %v683
    %1897 = vmatpush.msra.mxu0 %v675
    %1898 = vmatpush.msra.mxu0 %v667
    %1899 = vmatpush.msra.mxu0 %v659
    %1900 = vmatpush.msra.mxu0 %v651
    %1901 = vmatpush.msra.mxu0 %v643
    %1902 = vmatpush.msra.mxu0 %v635
    %1903 = vmatpush.msra.mxu0 %v627
    %1904 = vmatpush.msra.mxu0 %v619
    %1905 = vmatpush.msra.mxu0 %v611
    %1906 = vmatpush.msra.mxu0 %v603
    %1907 = vmatpush.msra.mxu0 %v595
    %1908 = vmatpush.msra.mxu0 %v587
    %1909 = vmatpush.msra.mxu0 %v579
    %1910 = vmatpush.msra.mxu0 %v571
    %1911 = vmatpush.msra.mxu0 %v563
    %1912 = vmatmul.f32.gmra.mxu0 %v1673
    %v1913 = vpop.f32.mrf.mxu0
    %v1914 = vadd.f32 %v1894, %v1913
    %1915 = vdwg.mxu0
    %1916 = vmatpush.msra.mxu0 %v556
    %1917 = vmatpush.msra.mxu0 %v548
    %1918 = vmatpush.msra.mxu0 %v540
    %1919 = vmatpush.msra.mxu0 %v532
    %1920 = vmatpush.msra.mxu0 %v524
    %1921 = vmatpush.msra.mxu0 %v516
    %1922 = vmatpush.msra.mxu0 %v508
    %1923 = vmatpush.msra.mxu0 %v500
    %1924 = vmatpush.msra.mxu0 %v492
    %1925 = vmatpush.msra.mxu0 %v484
    %1926 = vmatpush.msra.mxu0 %v476
    %1927 = vmatpush.msra.mxu0 %v468
    %1928 = vmatpush.msra.mxu0 %v460
    %1929 = vmatpush.msra.mxu0 %v452
    %1930 = vmatpush.msra.mxu0 %v444
    %1931 = vmatpush.msra.mxu0 %v436
    %1932 = vmatmul.f32.gmra.mxu0 %v1672
    %v1933 = vpop.f32.mrf.mxu0
    %v1934 = vadd.f32 0.0, %v1933
    %1935 = vdwg.mxu0
    %1936 = vmatpush.msra.mxu0 %v684
    %1937 = vmatpush.msra.mxu0 %v676
    %1938 = vmatpush.msra.mxu0 %v668
    %1939 = vmatpush.msra.mxu0 %v660
    %1940 = vmatpush.msra.mxu0 %v652
    %1941 = vmatpush.msra.mxu0 %v644
    %1942 = vmatpush.msra.mxu0 %v636
    %1943 = vmatpush.msra.mxu0 %v628
    %1944 = vmatpush.msra.mxu0 %v620
    %1945 = vmatpush.msra.mxu0 %v612
    %1946 = vmatpush.msra.mxu0 %v604
    %1947 = vmatpush.msra.mxu0 %v596
    %1948 = vmatpush.msra.mxu0 %v588
    %1949 = vmatpush.msra.mxu0 %v580
    %1950 = vmatpush.msra.mxu0 %v572
    %1951 = vmatpush.msra.mxu0 %v564
    %1952 = vmatmul.f32.gmra.mxu0 %v1673
    %v1953 = vpop.f32.mrf.mxu0
    %v1954 = vadd.f32 %v1934, %v1953
    %1955 = vdwg.mxu0
    %1956 = vmatpush.msra.mxu0 %v557
    %1957 = vmatpush.msra.mxu0 %v549
    %1958 = vmatpush.msra.mxu0 %v541
    %1959 = vmatpush.msra.mxu0 %v533
    %1960 = vmatpush.msra.mxu0 %v525
    %1961 = vmatpush.msra.mxu0 %v517
    %1962 = vmatpush.msra.mxu0 %v509
    %1963 = vmatpush.msra.mxu0 %v501
    %1964 = vmatpush.msra.mxu0 %v493
    %1965 = vmatpush.msra.mxu0 %v485
    %1966 = vmatpush.msra.mxu0 %v477
    %1967 = vmatpush.msra.mxu0 %v469
    %1968 = vmatpush.msra.mxu0 %v461
    %1969 = vmatpush.msra.mxu0 %v453
    %1970 = vmatpush.msra.mxu0 %v445
    %1971 = vmatpush.msra.mxu0 %v437
    %1972 = vmatmul.f32.gmra.mxu0 %v1672
    %v1973 = vpop.f32.mrf.mxu0
    %v1974 = vadd.f32 0.0, %v1973
    %1975 = vdwg.mxu0
    %1976 = vmatpush.msra.mxu0 %v685
    %1977 = vmatpush.msra.mxu0 %v677
    %1978 = vmatpush.msra.mxu0 %v669
    %1979 = vmatpush.msra.mxu0 %v661
    %1980 = vmatpush.msra.mxu0 %v653
    %1981 = vmatpush.msra.mxu0 %v645
    %1982 = vmatpush.msra.mxu0 %v637
    %1983 = vmatpush.msra.mxu0 %v629
    %1984 = vmatpush.msra.mxu0 %v621
    %1985 = vmatpush.msra.mxu0 %v613
    %1986 = vmatpush.msra.mxu0 %v605
    %1987 = vmatpush.msra.mxu0 %v597
    %1988 = vmatpush.msra.mxu0 %v589
    %1989 = vmatpush.msra.mxu0 %v581
    %1990 = vmatpush.msra.mxu0 %v573
    %1991 = vmatpush.msra.mxu0 %v565
    %1992 = vmatmul.f32.gmra.mxu0 %v1673
    %v1993 = vpop.f32.mrf.mxu0
    %v1994 = vadd.f32 %v1974, %v1993
    %1995 = vdwg.mxu0
    %v2004 = vrot.slane %v1714, 5
    %v2005 = vrot.slane %v1754, 5
    %v2006 = vrot.slane %v1794, 5
    %v2007 = vrot.slane %v1834, 5
    %v2008 = vrot.slane %v1874, 5
    %v2009 = vrot.slane %v1914, 5
    %v2010 = vrot.slane %v1954, 5
    %v2011 = vrot.slane %v1994, 5
    %v2020 = vadd.f32 %v155, %v2004
    %v2021 = vadd.f32 %v175, %v2005
    %v2022 = vadd.f32 %v195, %v2006
    %v2023 = vadd.f32 %v215, %v2007
    %v2024 = vadd.f32 %v235, %v2008
    %v2025 = vadd.f32 %v255, %v2009
    %v2026 = vadd.f32 %v275, %v2010
    %v2027 = vadd.f32 %v295, %v2011
    %v2028 = vxor.u32 %v2020, 2147483648
    %v2029 = vxor.u32 %v2021, 2147483648
    %v2030 = vxor.u32 %v2022, 2147483648
    %v2031 = vxor.u32 %v2023, 2147483648
    %v2032 = vxor.u32 %v2024, 2147483648
    %v2033 = vxor.u32 %v2025, 2147483648
    %v2034 = vmul.f32 %v2028, 1.442695
    %v2035 = vpow.pop %v2034
    %v2036 = vmul.f32 %v2029, 1.442695
    %v2037 = vpow.pop %v2036
    %v2038 = vmul.f32 %v2030, 1.442695
    %v2039 = vpow.pop %v2038
    %v2040 = vmul.f32 %v2031, 1.442695
    %v2041 = vpow.pop %v2040
    %v2042 = vmul.f32 %v2032, 1.442695
    %v2043 = vpow.pop %v2042
    %v2044 = vmul.f32 %v2033, 1.442695
    %v2045 = vpow.pop %v2044
    %v2046 = vadd.f32 %v2035, 1.0
    %v2047 = vadd.f32 %v2037, 1.0
    %v2048 = vadd.f32 %v2039, 1.0
    %v2049 = vadd.f32 %v2041, 1.0
    %v2050 = vadd.f32 %v2043, 1.0
    %v2051 = vadd.f32 %v2045, 1.0
    %v2052 = vrcp.pop %v2046
    %v2053 = vmul.f32 %v2046, %v2052
    %v2054 = vsub.f32 1.0, %v2053
    %v2055 = vmul.f32 %v2052, %v2054
    %v2056 = vadd.f32 %v2052, %v2055
    %vm2057 = vweird.f32 %v2046
    %vm2058 = vweird.f32 %v2052
    %vm2059 = vmor %vm2057, %vm2058
    %v2060 = vsel %vm2059, %v2052, %v2056
    %v2061 = vand.u32 2147483647, %v2046
    %vm2062 = vcmp.eq.f32.partialorder %v2061, 8.507059e+37
    %v2063 = vand.u32 %v2046, 2147483648
    %v2064 = vor.u32 1.1754944e-38, %v2063
    %v2065 = vsel %vm2062, %v2064, %v2060
    %v2066 = vmul.f32 1.0, %v2065
    %v2067 = vrcp.pop %v2047
    %v2068 = vmul.f32 %v2047, %v2067
    %v2069 = vsub.f32 1.0, %v2068
    %v2070 = vmul.f32 %v2067, %v2069
    %v2071 = vadd.f32 %v2067, %v2070
    %vm2072 = vweird.f32 %v2047
    %vm2073 = vweird.f32 %v2067
    %vm2074 = vmor %vm2072, %vm2073
    %v2075 = vsel %vm2074, %v2067, %v2071
    %v2076 = vand.u32 2147483647, %v2047
    %vm2077 = vcmp.eq.f32.partialorder %v2076, 8.507059e+37
    %v2078 = vand.u32 %v2047, 2147483648
    %v2079 = vor.u32 1.1754944e-38, %v2078
    %v2080 = vsel %vm2077, %v2079, %v2075
    %v2081 = vmul.f32 1.0, %v2080
    %v2082 = vrcp.pop %v2048
    %v2083 = vmul.f32 %v2048, %v2082
    %v2084 = vsub.f32 1.0, %v2083
    %v2085 = vmul.f32 %v2082, %v2084
    %v2086 = vadd.f32 %v2082, %v2085
    %vm2087 = vweird.f32 %v2048
    %vm2088 = vweird.f32 %v2082
    %vm2089 = vmor %vm2087, %vm2088
    %v2090 = vsel %vm2089, %v2082, %v2086
    %v2091 = vand.u32 2147483647, %v2048
    %vm2092 = vcmp.eq.f32.partialorder %v2091, 8.507059e+37
    %v2093 = vand.u32 %v2048, 2147483648
    %v2094 = vor.u32 1.1754944e-38, %v2093
    %v2095 = vsel %vm2092, %v2094, %v2090
    %v2096 = vmul.f32 1.0, %v2095
    %v2097 = vrcp.pop %v2049
    %v2098 = vmul.f32 %v2049, %v2097
    %v2099 = vsub.f32 1.0, %v2098
    %v2100 = vmul.f32 %v2097, %v2099
    %v2101 = vadd.f32 %v2097, %v2100
    %vm2102 = vweird.f32 %v2049
    %vm2103 = vweird.f32 %v2097
    %vm2104 = vmor %vm2102, %vm2103
    %v2105 = vsel %vm2104, %v2097, %v2101
    %v2106 = vand.u32 2147483647, %v2049
    %vm2107 = vcmp.eq.f32.partialorder %v2106, 8.507059e+37
    %v2108 = vand.u32 %v2049, 2147483648
    %v2109 = vor.u32 1.1754944e-38, %v2108
    %v2110 = vsel %vm2107, %v2109, %v2105
    %v2111 = vmul.f32 1.0, %v2110
    %v2112 = vrcp.pop %v2050
    %v2113 = vmul.f32 %v2050, %v2112
    %v2114 = vsub.f32 1.0, %v2113
    %v2115 = vmul.f32 %v2112, %v2114
    %v2116 = vadd.f32 %v2112, %v2115
    %vm2117 = vweird.f32 %v2050
    %vm2118 = vweird.f32 %v2112
    %vm2119 = vmor %vm2117, %vm2118
    %v2120 = vsel %vm2119, %v2112, %v2116
    %v2121 = vand.u32 2147483647, %v2050
    %vm2122 = vcmp.eq.f32.partialorder %v2121, 8.507059e+37
    %v2123 = vand.u32 %v2050, 2147483648
    %v2124 = vor.u32 1.1754944e-38, %v2123
    %v2125 = vsel %vm2122, %v2124, %v2120
    %v2126 = vmul.f32 1.0, %v2125
    %v2127 = vrcp.pop %v2051
    %v2128 = vmul.f32 %v2051, %v2127
    %v2129 = vsub.f32 1.0, %v2128
    %v2130 = vmul.f32 %v2127, %v2129
    %v2131 = vadd.f32 %v2127, %v2130
    %vm2132 = vweird.f32 %v2051
    %vm2133 = vweird.f32 %v2127
    %vm2134 = vmor %vm2132, %vm2133
    %v2135 = vsel %vm2134, %v2127, %v2131
    %v2136 = vand.u32 2147483647, %v2051
    %vm2137 = vcmp.eq.f32.partialorder %v2136, 8.507059e+37
    %v2138 = vand.u32 %v2051, 2147483648
    %v2139 = vor.u32 1.1754944e-38, %v2138
    %v2140 = vsel %vm2137, %v2139, %v2135
    %v2141 = vmul.f32 1.0, %v2140
    %v2142 = vtanh.pop %v2026
    %v2143 = vtanh.pop %v2027
    %v2146 = vrot.slane %v1659, 7
    %v2147 = vrot.slane %v1660, 7
    %v2150 = vmul.f32 %v2096, %v2146
    %v2151 = vmul.f32 %v2111, %v2147
    %v2152 = vmul.f32 %v2066, %v2142
    %v2153 = vmul.f32 %v2081, %v2143
    %v2154 = vadd.f32 %v2150, %v2152
    %v2155 = vadd.f32 %v2151, %v2153
    %v2156 = vtanh.pop %v2154
    %v2157 = vtanh.pop %v2155
    %v2158 = vmul.f32 %v2126, %v2156
    %v2159 = vmul.f32 %v2141, %v2157
    %vm2160 = vcmp.eq.s32.totalorder %v298, 3
    %v2161 = vperm.slane %v2158, 3
    %v2162 = vperm.slane %v2159, 3
    %v2163 = vsel %vm2160, %v2161, %v1668
    %v2164 = vsel %vm2160, %v2162, %v1669
    %v2167 = vrot.slane %v2158, 3
    %v2168 = vrot.slane %v2159, 3
    %2171 = vmatpush.msra.mxu0 %v550
    %2172 = vmatpush.msra.mxu0 %v542
    %2173 = vmatpush.msra.mxu0 %v534
    %2174 = vmatpush.msra.mxu0 %v526
    %2175 = vmatpush.msra.mxu0 %v518
    %2176 = vmatpush.msra.mxu0 %v510
    %2177 = vmatpush.msra.mxu0 %v502
    %2178 = vmatpush.msra.mxu0 %v494
    %2179 = vmatpush.msra.mxu0 %v486
    %2180 = vmatpush.msra.mxu0 %v478
    %2181 = vmatpush.msra.mxu0 %v470
    %2182 = vmatpush.msra.mxu0 %v462
    %2183 = vmatpush.msra.mxu0 %v454
    %2184 = vmatpush.msra.mxu0 %v446
    %2185 = vmatpush.msra.mxu0 %v438
    %2186 = vmatpush.msra.mxu0 %v430
    %2187 = vmatmul.f32.gmra.mxu0 %v2167
    %v2188 = vpop.f32.mrf.mxu0
    %v2189 = vadd.f32 0.0, %v2188
    %2190 = vdwg.mxu0
    %2191 = vmatpush.msra.mxu0 %v678
    %2192 = vmatpush.msra.mxu0 %v670
    %2193 = vmatpush.msra.mxu0 %v662
    %2194 = vmatpush.msra.mxu0 %v654
    %2195 = vmatpush.msra.mxu0 %v646
    %2196 = vmatpush.msra.mxu0 %v638
    %2197 = vmatpush.msra.mxu0 %v630
    %2198 = vmatpush.msra.mxu0 %v622
    %2199 = vmatpush.msra.mxu0 %v614
    %2200 = vmatpush.msra.mxu0 %v606
    %2201 = vmatpush.msra.mxu0 %v598
    %2202 = vmatpush.msra.mxu0 %v590
    %2203 = vmatpush.msra.mxu0 %v582
    %2204 = vmatpush.msra.mxu0 %v574
    %2205 = vmatpush.msra.mxu0 %v566
    %2206 = vmatpush.msra.mxu0 %v558
    %2207 = vmatmul.f32.gmra.mxu0 %v2168
    %v2208 = vpop.f32.mrf.mxu0
    %v2209 = vadd.f32 %v2189, %v2208
    %2210 = vdwg.mxu0
    %2211 = vmatpush.msra.mxu0 %v551
    %2212 = vmatpush.msra.mxu0 %v543
    %2213 = vmatpush.msra.mxu0 %v535
    %2214 = vmatpush.msra.mxu0 %v527
    %2215 = vmatpush.msra.mxu0 %v519
    %2216 = vmatpush.msra.mxu0 %v511
    %2217 = vmatpush.msra.mxu0 %v503
    %2218 = vmatpush.msra.mxu0 %v495
    %2219 = vmatpush.msra.mxu0 %v487
    %2220 = vmatpush.msra.mxu0 %v479
    %2221 = vmatpush.msra.mxu0 %v471
    %2222 = vmatpush.msra.mxu0 %v463
    %2223 = vmatpush.msra.mxu0 %v455
    %2224 = vmatpush.msra.mxu0 %v447
    %2225 = vmatpush.msra.mxu0 %v439
    %2226 = vmatpush.msra.mxu0 %v431
    %2227 = vmatmul.f32.gmra.mxu0 %v2167
    %v2228 = vpop.f32.mrf.mxu0
    %v2229 = vadd.f32 0.0, %v2228
    %2230 = vdwg.mxu0
    %2231 = vmatpush.msra.mxu0 %v679
    %2232 = vmatpush.msra.mxu0 %v671
    %2233 = vmatpush.msra.mxu0 %v663
    %2234 = vmatpush.msra.mxu0 %v655
    %2235 = vmatpush.msra.mxu0 %v647
    %2236 = vmatpush.msra.mxu0 %v639
    %2237 = vmatpush.msra.mxu0 %v631
    %2238 = vmatpush.msra.mxu0 %v623
    %2239 = vmatpush.msra.mxu0 %v615
    %2240 = vmatpush.msra.mxu0 %v607
    %2241 = vmatpush.msra.mxu0 %v599
    %2242 = vmatpush.msra.mxu0 %v591
    %2243 = vmatpush.msra.mxu0 %v583
    %2244 = vmatpush.msra.mxu0 %v575
    %2245 = vmatpush.msra.mxu0 %v567
    %2246 = vmatpush.msra.mxu0 %v559
    %2247 = vmatmul.f32.gmra.mxu0 %v2168
    %v2248 = vpop.f32.mrf.mxu0
    %v2249 = vadd.f32 %v2229, %v2248
    %2250 = vdwg.mxu0
    %2251 = vmatpush.msra.mxu0 %v552
    %2252 = vmatpush.msra.mxu0 %v544
    %2253 = vmatpush.msra.mxu0 %v536
    %2254 = vmatpush.msra.mxu0 %v528
    %2255 = vmatpush.msra.mxu0 %v520
    %2256 = vmatpush.msra.mxu0 %v512
    %2257 = vmatpush.msra.mxu0 %v504
    %2258 = vmatpush.msra.mxu0 %v496
    %2259 = vmatpush.msra.mxu0 %v488
    %2260 = vmatpush.msra.mxu0 %v480
    %2261 = vmatpush.msra.mxu0 %v472
    %2262 = vmatpush.msra.mxu0 %v464
    %2263 = vmatpush.msra.mxu0 %v456
    %2264 = vmatpush.msra.mxu0 %v448
    %2265 = vmatpush.msra.mxu0 %v440
    %2266 = vmatpush.msra.mxu0 %v432
    %2267 = vmatmul.f32.gmra.mxu0 %v2167
    %v2268 = vpop.f32.mrf.mxu0
    %v2269 = vadd.f32 0.0, %v2268
    %2270 = vdwg.mxu0
    %2271 = vmatpush.msra.mxu0 %v680
    %2272 = vmatpush.msra.mxu0 %v672
    %2273 = vmatpush.msra.mxu0 %v664
    %2274 = vmatpush.msra.mxu0 %v656
    %2275 = vmatpush.msra.mxu0 %v648
    %2276 = vmatpush.msra.mxu0 %v640
    %2277 = vmatpush.msra.mxu0 %v632
    %2278 = vmatpush.msra.mxu0 %v624
    %2279 = vmatpush.msra.mxu0 %v616
    %2280 = vmatpush.msra.mxu0 %v608
    %2281 = vmatpush.msra.mxu0 %v600
    %2282 = vmatpush.msra.mxu0 %v592
    %2283 = vmatpush.msra.mxu0 %v584
    %2284 = vmatpush.msra.mxu0 %v576
    %2285 = vmatpush.msra.mxu0 %v568
    %2286 = vmatpush.msra.mxu0 %v560
    %2287 = vmatmul.f32.gmra.mxu0 %v2168
    %v2288 = vpop.f32.mrf.mxu0
    %v2289 = vadd.f32 %v2269, %v2288
    %2290 = vdwg.mxu0
    %2291 = vmatpush.msra.mxu0 %v553
    %2292 = vmatpush.msra.mxu0 %v545
    %2293 = vmatpush.msra.mxu0 %v537
    %2294 = vmatpush.msra.mxu0 %v529
    %2295 = vmatpush.msra.mxu0 %v521
    %2296 = vmatpush.msra.mxu0 %v513
    %2297 = vmatpush.msra.mxu0 %v505
    %2298 = vmatpush.msra.mxu0 %v497
    %2299 = vmatpush.msra.mxu0 %v489
    %2300 = vmatpush.msra.mxu0 %v481
    %2301 = vmatpush.msra.mxu0 %v473
    %2302 = vmatpush.msra.mxu0 %v465
    %2303 = vmatpush.msra.mxu0 %v457
    %2304 = vmatpush.msra.mxu0 %v449
    %2305 = vmatpush.msra.mxu0 %v441
    %2306 = vmatpush.msra.mxu0 %v433
    %2307 = vmatmul.f32.gmra.mxu0 %v2167
    %v2308 = vpop.f32.mrf.mxu0
    %v2309 = vadd.f32 0.0, %v2308
    %2310 = vdwg.mxu0
    %2311 = vmatpush.msra.mxu0 %v681
    %2312 = vmatpush.msra.mxu0 %v673
    %2313 = vmatpush.msra.mxu0 %v665
    %2314 = vmatpush.msra.mxu0 %v657
    %2315 = vmatpush.msra.mxu0 %v649
    %2316 = vmatpush.msra.mxu0 %v641
    %2317 = vmatpush.msra.mxu0 %v633
    %2318 = vmatpush.msra.mxu0 %v625
    %2319 = vmatpush.msra.mxu0 %v617
    %2320 = vmatpush.msra.mxu0 %v609
    %2321 = vmatpush.msra.mxu0 %v601
    %2322 = vmatpush.msra.mxu0 %v593
    %2323 = vmatpush.msra.mxu0 %v585
    %2324 = vmatpush.msra.mxu0 %v577
    %2325 = vmatpush.msra.mxu0 %v569
    %2326 = vmatpush.msra.mxu0 %v561
    %2327 = vmatmul.f32.gmra.mxu0 %v2168
    %v2328 = vpop.f32.mrf.mxu0
    %v2329 = vadd.f32 %v2309, %v2328
    %2330 = vdwg.mxu0
    %2331 = vmatpush.msra.mxu0 %v554
    %2332 = vmatpush.msra.mxu0 %v546
    %2333 = vmatpush.msra.mxu0 %v538
    %2334 = vmatpush.msra.mxu0 %v530
    %2335 = vmatpush.msra.mxu0 %v522
    %2336 = vmatpush.msra.mxu0 %v514
    %2337 = vmatpush.msra.mxu0 %v506
    %2338 = vmatpush.msra.mxu0 %v498
    %2339 = vmatpush.msra.mxu0 %v490
    %2340 = vmatpush.msra.mxu0 %v482
    %2341 = vmatpush.msra.mxu0 %v474
    %2342 = vmatpush.msra.mxu0 %v466
    %2343 = vmatpush.msra.mxu0 %v458
    %2344 = vmatpush.msra.mxu0 %v450
    %2345 = vmatpush.msra.mxu0 %v442
    %2346 = vmatpush.msra.mxu0 %v434
    %2347 = vmatmul.f32.gmra.mxu0 %v2167
    %v2348 = vpop.f32.mrf.mxu0
    %v2349 = vadd.f32 0.0, %v2348
    %2350 = vdwg.mxu0
    %2351 = vmatpush.msra.mxu0 %v682
    %2352 = vmatpush.msra.mxu0 %v674
    %2353 = vmatpush.msra.mxu0 %v666
    %2354 = vmatpush.msra.mxu0 %v658
    %2355 = vmatpush.msra.mxu0 %v650
    %2356 = vmatpush.msra.mxu0 %v642
    %2357 = vmatpush.msra.mxu0 %v634
    %2358 = vmatpush.msra.mxu0 %v626
    %2359 = vmatpush.msra.mxu0 %v618
    %2360 = vmatpush.msra.mxu0 %v610
    %2361 = vmatpush.msra.mxu0 %v602
    %2362 = vmatpush.msra.mxu0 %v594
    %2363 = vmatpush.msra.mxu0 %v586
    %2364 = vmatpush.msra.mxu0 %v578
    %2365 = vmatpush.msra.mxu0 %v570
    %2366 = vmatpush.msra.mxu0 %v562
    %2367 = vmatmul.f32.gmra.mxu0 %v2168
    %v2368 = vpop.f32.mrf.mxu0
    %v2369 = vadd.f32 %v2349, %v2368
    %2370 = vdwg.mxu0
    %2371 = vmatpush.msra.mxu0 %v555
    %2372 = vmatpush.msra.mxu0 %v547
    %2373 = vmatpush.msra.mxu0 %v539
    %2374 = vmatpush.msra.mxu0 %v531
    %2375 = vmatpush.msra.mxu0 %v523
    %2376 = vmatpush.msra.mxu0 %v515
    %2377 = vmatpush.msra.mxu0 %v507
    %2378 = vmatpush.msra.mxu0 %v499
    %2379 = vmatpush.msra.mxu0 %v491
    %2380 = vmatpush.msra.mxu0 %v483
    %2381 = vmatpush.msra.mxu0 %v475
    %2382 = vmatpush.msra.mxu0 %v467
    %2383 = vmatpush.msra.mxu0 %v459
    %2384 = vmatpush.msra.mxu0 %v451
    %2385 = vmatpush.msra.mxu0 %v443
    %2386 = vmatpush.msra.mxu0 %v435
    %2387 = vmatmul.f32.gmra.mxu0 %v2167
    %v2388 = vpop.f32.mrf.mxu0
    %v2389 = vadd.f32 0.0, %v2388
    %2390 = vdwg.mxu0
    %2391 = vmatpush.msra.mxu0 %v683
    %2392 = vmatpush.msra.mxu0 %v675
    %2393 = vmatpush.msra.mxu0 %v667
    %2394 = vmatpush.msra.mxu0 %v659
    %2395 = vmatpush.msra.mxu0 %v651
    %2396 = vmatpush.msra.mxu0 %v643
    %2397 = vmatpush.msra.mxu0 %v635
    %2398 = vmatpush.msra.mxu0 %v627
    %2399 = vmatpush.msra.mxu0 %v619
    %2400 = vmatpush.msra.mxu0 %v611
    %2401 = vmatpush.msra.mxu0 %v603
    %2402 = vmatpush.msra.mxu0 %v595
    %2403 = vmatpush.msra.mxu0 %v587
    %2404 = vmatpush.msra.mxu0 %v579
    %2405 = vmatpush.msra.mxu0 %v571
    %2406 = vmatpush.msra.mxu0 %v563
    %2407 = vmatmul.f32.gmra.mxu0 %v2168
    %v2408 = vpop.f32.mrf.mxu0
    %v2409 = vadd.f32 %v2389, %v2408
    %2410 = vdwg.mxu0
    %2411 = vmatpush.msra.mxu0 %v556
    %2412 = vmatpush.msra.mxu0 %v548
    %2413 = vmatpush.msra.mxu0 %v540
    %2414 = vmatpush.msra.mxu0 %v532
    %2415 = vmatpush.msra.mxu0 %v524
    %2416 = vmatpush.msra.mxu0 %v516
    %2417 = vmatpush.msra.mxu0 %v508
    %2418 = vmatpush.msra.mxu0 %v500
    %2419 = vmatpush.msra.mxu0 %v492
    %2420 = vmatpush.msra.mxu0 %v484
    %2421 = vmatpush.msra.mxu0 %v476
    %2422 = vmatpush.msra.mxu0 %v468
    %2423 = vmatpush.msra.mxu0 %v460
    %2424 = vmatpush.msra.mxu0 %v452
    %2425 = vmatpush.msra.mxu0 %v444
    %2426 = vmatpush.msra.mxu0 %v436
    %2427 = vmatmul.f32.gmra.mxu0 %v2167
    %v2428 = vpop.f32.mrf.mxu0
    %v2429 = vadd.f32 0.0, %v2428
    %2430 = vdwg.mxu0
    %2431 = vmatpush.msra.mxu0 %v684
    %2432 = vmatpush.msra.mxu0 %v676
    %2433 = vmatpush.msra.mxu0 %v668
    %2434 = vmatpush.msra.mxu0 %v660
    %2435 = vmatpush.msra.mxu0 %v652
    %2436 = vmatpush.msra.mxu0 %v644
    %2437 = vmatpush.msra.mxu0 %v636
    %2438 = vmatpush.msra.mxu0 %v628
    %2439 = vmatpush.msra.mxu0 %v620
    %2440 = vmatpush.msra.mxu0 %v612
    %2441 = vmatpush.msra.mxu0 %v604
    %2442 = vmatpush.msra.mxu0 %v596
    %2443 = vmatpush.msra.mxu0 %v588
    %2444 = vmatpush.msra.mxu0 %v580
    %2445 = vmatpush.msra.mxu0 %v572
    %2446 = vmatpush.msra.mxu0 %v564
    %2447 = vmatmul.f32.gmra.mxu0 %v2168
    %v2448 = vpop.f32.mrf.mxu0
    %v2449 = vadd.f32 %v2429, %v2448
    %2450 = vdwg.mxu0
    %2451 = vmatpush.msra.mxu0 %v557
    %2452 = vmatpush.msra.mxu0 %v549
    %2453 = vmatpush.msra.mxu0 %v541
    %2454 = vmatpush.msra.mxu0 %v533
    %2455 = vmatpush.msra.mxu0 %v525
    %2456 = vmatpush.msra.mxu0 %v517
    %2457 = vmatpush.msra.mxu0 %v509
    %2458 = vmatpush.msra.mxu0 %v501
    %2459 = vmatpush.msra.mxu0 %v493
    %2460 = vmatpush.msra.mxu0 %v485
    %2461 = vmatpush.msra.mxu0 %v477
    %2462 = vmatpush.msra.mxu0 %v469
    %2463 = vmatpush.msra.mxu0 %v461
    %2464 = vmatpush.msra.mxu0 %v453
    %2465 = vmatpush.msra.mxu0 %v445
    %2466 = vmatpush.msra.mxu0 %v437
    %2467 = vmatmul.f32.gmra.mxu0 %v2167
    %v2468 = vpop.f32.mrf.mxu0
    %v2469 = vadd.f32 0.0, %v2468
    %2470 = vdwg.mxu0
    %2471 = vmatpush.msra.mxu0 %v685
    %2472 = vmatpush.msra.mxu0 %v677
    %2473 = vmatpush.msra.mxu0 %v669
    %2474 = vmatpush.msra.mxu0 %v661
    %2475 = vmatpush.msra.mxu0 %v653
    %2476 = vmatpush.msra.mxu0 %v645
    %2477 = vmatpush.msra.mxu0 %v637
    %2478 = vmatpush.msra.mxu0 %v629
    %2479 = vmatpush.msra.mxu0 %v621
    %2480 = vmatpush.msra.mxu0 %v613
    %2481 = vmatpush.msra.mxu0 %v605
    %2482 = vmatpush.msra.mxu0 %v597
    %2483 = vmatpush.msra.mxu0 %v589
    %2484 = vmatpush.msra.mxu0 %v581
    %2485 = vmatpush.msra.mxu0 %v573
    %2486 = vmatpush.msra.mxu0 %v565
    %2487 = vmatmul.f32.gmra.mxu0 %v2168
    %v2488 = vpop.f32.mrf.mxu0
    %v2489 = vadd.f32 %v2469, %v2488
    %2490 = vdwg.mxu0
    %v2499 = vrot.slane %v2209, 4
    %v2500 = vrot.slane %v2249, 4
    %v2501 = vrot.slane %v2289, 4
    %v2502 = vrot.slane %v2329, 4
    %v2503 = vrot.slane %v2369, 4
    %v2504 = vrot.slane %v2409, 4
    %v2505 = vrot.slane %v2449, 4
    %v2506 = vrot.slane %v2489, 4
    %v2515 = vadd.f32 %v155, %v2499
    %v2516 = vadd.f32 %v175, %v2500
    %v2517 = vadd.f32 %v195, %v2501
    %v2518 = vadd.f32 %v215, %v2502
    %v2519 = vadd.f32 %v235, %v2503
    %v2520 = vadd.f32 %v255, %v2504
    %v2521 = vadd.f32 %v275, %v2505
    %v2522 = vadd.f32 %v295, %v2506
    %v2523 = vxor.u32 %v2515, 2147483648
    %v2524 = vxor.u32 %v2516, 2147483648
    %v2525 = vxor.u32 %v2517, 2147483648
    %v2526 = vxor.u32 %v2518, 2147483648
    %v2527 = vxor.u32 %v2519, 2147483648
    %v2528 = vxor.u32 %v2520, 2147483648
    %v2529 = vmul.f32 %v2523, 1.442695
    %v2530 = vpow.pop %v2529
    %v2531 = vmul.f32 %v2524, 1.442695
    %v2532 = vpow.pop %v2531
    %v2533 = vmul.f32 %v2525, 1.442695
    %v2534 = vpow.pop %v2533
    %v2535 = vmul.f32 %v2526, 1.442695
    %v2536 = vpow.pop %v2535
    %v2537 = vmul.f32 %v2527, 1.442695
    %v2538 = vpow.pop %v2537
    %v2539 = vmul.f32 %v2528, 1.442695
    %v2540 = vpow.pop %v2539
    %v2541 = vadd.f32 %v2530, 1.0
    %v2542 = vadd.f32 %v2532, 1.0
    %v2543 = vadd.f32 %v2534, 1.0
    %v2544 = vadd.f32 %v2536, 1.0
    %v2545 = vadd.f32 %v2538, 1.0
    %v2546 = vadd.f32 %v2540, 1.0
    %v2547 = vrcp.pop %v2541
    %v2548 = vmul.f32 %v2541, %v2547
    %v2549 = vsub.f32 1.0, %v2548
    %v2550 = vmul.f32 %v2547, %v2549
    %v2551 = vadd.f32 %v2547, %v2550
    %vm2552 = vweird.f32 %v2541
    %vm2553 = vweird.f32 %v2547
    %vm2554 = vmor %vm2552, %vm2553
    %v2555 = vsel %vm2554, %v2547, %v2551
    %v2556 = vand.u32 2147483647, %v2541
    %vm2557 = vcmp.eq.f32.partialorder %v2556, 8.507059e+37
    %v2558 = vand.u32 %v2541, 2147483648
    %v2559 = vor.u32 1.1754944e-38, %v2558
    %v2560 = vsel %vm2557, %v2559, %v2555
    %v2561 = vmul.f32 1.0, %v2560
    %v2562 = vrcp.pop %v2542
    %v2563 = vmul.f32 %v2542, %v2562
    %v2564 = vsub.f32 1.0, %v2563
    %v2565 = vmul.f32 %v2562, %v2564
    %v2566 = vadd.f32 %v2562, %v2565
    %vm2567 = vweird.f32 %v2542
    %vm2568 = vweird.f32 %v2562
    %vm2569 = vmor %vm2567, %vm2568
    %v2570 = vsel %vm2569, %v2562, %v2566
    %v2571 = vand.u32 2147483647, %v2542
    %vm2572 = vcmp.eq.f32.partialorder %v2571, 8.507059e+37
    %v2573 = vand.u32 %v2542, 2147483648
    %v2574 = vor.u32 1.1754944e-38, %v2573
    %v2575 = vsel %vm2572, %v2574, %v2570
    %v2576 = vmul.f32 1.0, %v2575
    %v2577 = vrcp.pop %v2543
    %v2578 = vmul.f32 %v2543, %v2577
    %v2579 = vsub.f32 1.0, %v2578
    %v2580 = vmul.f32 %v2577, %v2579
    %v2581 = vadd.f32 %v2577, %v2580
    %vm2582 = vweird.f32 %v2543
    %vm2583 = vweird.f32 %v2577
    %vm2584 = vmor %vm2582, %vm2583
    %v2585 = vsel %vm2584, %v2577, %v2581
    %v2586 = vand.u32 2147483647, %v2543
    %vm2587 = vcmp.eq.f32.partialorder %v2586, 8.507059e+37
    %v2588 = vand.u32 %v2543, 2147483648
    %v2589 = vor.u32 1.1754944e-38, %v2588
    %v2590 = vsel %vm2587, %v2589, %v2585
    %v2591 = vmul.f32 1.0, %v2590
    %v2592 = vrcp.pop %v2544
    %v2593 = vmul.f32 %v2544, %v2592
    %v2594 = vsub.f32 1.0, %v2593
    %v2595 = vmul.f32 %v2592, %v2594
    %v2596 = vadd.f32 %v2592, %v2595
    %vm2597 = vweird.f32 %v2544
    %vm2598 = vweird.f32 %v2592
    %vm2599 = vmor %vm2597, %vm2598
    %v2600 = vsel %vm2599, %v2592, %v2596
    %v2601 = vand.u32 2147483647, %v2544
    %vm2602 = vcmp.eq.f32.partialorder %v2601, 8.507059e+37
    %v2603 = vand.u32 %v2544, 2147483648
    %v2604 = vor.u32 1.1754944e-38, %v2603
    %v2605 = vsel %vm2602, %v2604, %v2600
    %v2606 = vmul.f32 1.0, %v2605
    %v2607 = vrcp.pop %v2545
    %v2608 = vmul.f32 %v2545, %v2607
    %v2609 = vsub.f32 1.0, %v2608
    %v2610 = vmul.f32 %v2607, %v2609
    %v2611 = vadd.f32 %v2607, %v2610
    %vm2612 = vweird.f32 %v2545
    %vm2613 = vweird.f32 %v2607
    %vm2614 = vmor %vm2612, %vm2613
    %v2615 = vsel %vm2614, %v2607, %v2611
    %v2616 = vand.u32 2147483647, %v2545
    %vm2617 = vcmp.eq.f32.partialorder %v2616, 8.507059e+37
    %v2618 = vand.u32 %v2545, 2147483648
    %v2619 = vor.u32 1.1754944e-38, %v2618
    %v2620 = vsel %vm2617, %v2619, %v2615
    %v2621 = vmul.f32 1.0, %v2620
    %v2622 = vrcp.pop %v2546
    %v2623 = vmul.f32 %v2546, %v2622
    %v2624 = vsub.f32 1.0, %v2623
    %v2625 = vmul.f32 %v2622, %v2624
    %v2626 = vadd.f32 %v2622, %v2625
    %vm2627 = vweird.f32 %v2546
    %vm2628 = vweird.f32 %v2622
    %vm2629 = vmor %vm2627, %vm2628
    %v2630 = vsel %vm2629, %v2622, %v2626
    %v2631 = vand.u32 2147483647, %v2546
    %vm2632 = vcmp.eq.f32.partialorder %v2631, 8.507059e+37
    %v2633 = vand.u32 %v2546, 2147483648
    %v2634 = vor.u32 1.1754944e-38, %v2633
    %v2635 = vsel %vm2632, %v2634, %v2630
    %v2636 = vmul.f32 1.0, %v2635
    %v2637 = vtanh.pop %v2521
    %v2638 = vtanh.pop %v2522
    %v2641 = vrot.slane %v2154, 7
    %v2642 = vrot.slane %v2155, 7
    %v2645 = vmul.f32 %v2591, %v2641
    %v2646 = vmul.f32 %v2606, %v2642
    %v2647 = vmul.f32 %v2561, %v2637
    %v2648 = vmul.f32 %v2576, %v2638
    %v2649 = vadd.f32 %v2645, %v2647
    %v2650 = vadd.f32 %v2646, %v2648
    %v2651 = vtanh.pop %v2649
    %v2652 = vtanh.pop %v2650
    %v2653 = vmul.f32 %v2621, %v2651
    %v2654 = vmul.f32 %v2636, %v2652
    %vm2655 = vcmp.eq.s32.totalorder %v298, 4
    %v2656 = vperm.slane %v2653, 4
    %v2657 = vperm.slane %v2654, 4
    %v2658 = vsel %vm2655, %v2656, %v2163
    %v2659 = vsel %vm2655, %v2657, %v2164
    %v2662 = vrot.slane %v2653, 4
    %v2663 = vrot.slane %v2654, 4
    %2666 = vmatpush.msra.mxu0 %v550
    %2667 = vmatpush.msra.mxu0 %v542
    %2668 = vmatpush.msra.mxu0 %v534
    %2669 = vmatpush.msra.mxu0 %v526
    %2670 = vmatpush.msra.mxu0 %v518
    %2671 = vmatpush.msra.mxu0 %v510
    %2672 = vmatpush.msra.mxu0 %v502
    %2673 = vmatpush.msra.mxu0 %v494
    %2674 = vmatpush.msra.mxu0 %v486
    %2675 = vmatpush.msra.mxu0 %v478
    %2676 = vmatpush.msra.mxu0 %v470
    %2677 = vmatpush.msra.mxu0 %v462
    %2678 = vmatpush.msra.mxu0 %v454
    %2679 = vmatpush.msra.mxu0 %v446
    %2680 = vmatpush.msra.mxu0 %v438
    %2681 = vmatpush.msra.mxu0 %v430
    %2682 = vmatmul.f32.gmra.mxu0 %v2662
    %v2683 = vpop.f32.mrf.mxu0
    %v2684 = vadd.f32 0.0, %v2683
    %2685 = vdwg.mxu0
    %2686 = vmatpush.msra.mxu0 %v678
    %2687 = vmatpush.msra.mxu0 %v670
    %2688 = vmatpush.msra.mxu0 %v662
    %2689 = vmatpush.msra.mxu0 %v654
    %2690 = vmatpush.msra.mxu0 %v646
    %2691 = vmatpush.msra.mxu0 %v638
    %2692 = vmatpush.msra.mxu0 %v630
    %2693 = vmatpush.msra.mxu0 %v622
    %2694 = vmatpush.msra.mxu0 %v614
    %2695 = vmatpush.msra.mxu0 %v606
    %2696 = vmatpush.msra.mxu0 %v598
    %2697 = vmatpush.msra.mxu0 %v590
    %2698 = vmatpush.msra.mxu0 %v582
    %2699 = vmatpush.msra.mxu0 %v574
    %2700 = vmatpush.msra.mxu0 %v566
    %2701 = vmatpush.msra.mxu0 %v558
    %2702 = vmatmul.f32.gmra.mxu0 %v2663
    %v2703 = vpop.f32.mrf.mxu0
    %v2704 = vadd.f32 %v2684, %v2703
    %2705 = vdwg.mxu0
    %2706 = vmatpush.msra.mxu0 %v551
    %2707 = vmatpush.msra.mxu0 %v543
    %2708 = vmatpush.msra.mxu0 %v535
    %2709 = vmatpush.msra.mxu0 %v527
    %2710 = vmatpush.msra.mxu0 %v519
    %2711 = vmatpush.msra.mxu0 %v511
    %2712 = vmatpush.msra.mxu0 %v503
    %2713 = vmatpush.msra.mxu0 %v495
    %2714 = vmatpush.msra.mxu0 %v487
    %2715 = vmatpush.msra.mxu0 %v479
    %2716 = vmatpush.msra.mxu0 %v471
    %2717 = vmatpush.msra.mxu0 %v463
    %2718 = vmatpush.msra.mxu0 %v455
    %2719 = vmatpush.msra.mxu0 %v447
    %2720 = vmatpush.msra.mxu0 %v439
    %2721 = vmatpush.msra.mxu0 %v431
    %2722 = vmatmul.f32.gmra.mxu0 %v2662
    %v2723 = vpop.f32.mrf.mxu0
    %v2724 = vadd.f32 0.0, %v2723
    %2725 = vdwg.mxu0
    %2726 = vmatpush.msra.mxu0 %v679
    %2727 = vmatpush.msra.mxu0 %v671
    %2728 = vmatpush.msra.mxu0 %v663
    %2729 = vmatpush.msra.mxu0 %v655
    %2730 = vmatpush.msra.mxu0 %v647
    %2731 = vmatpush.msra.mxu0 %v639
    %2732 = vmatpush.msra.mxu0 %v631
    %2733 = vmatpush.msra.mxu0 %v623
    %2734 = vmatpush.msra.mxu0 %v615
    %2735 = vmatpush.msra.mxu0 %v607
    %2736 = vmatpush.msra.mxu0 %v599
    %2737 = vmatpush.msra.mxu0 %v591
    %2738 = vmatpush.msra.mxu0 %v583
    %2739 = vmatpush.msra.mxu0 %v575
    %2740 = vmatpush.msra.mxu0 %v567
    %2741 = vmatpush.msra.mxu0 %v559
    %2742 = vmatmul.f32.gmra.mxu0 %v2663
    %v2743 = vpop.f32.mrf.mxu0
    %v2744 = vadd.f32 %v2724, %v2743
    %2745 = vdwg.mxu0
    %2746 = vmatpush.msra.mxu0 %v552
    %2747 = vmatpush.msra.mxu0 %v544
    %2748 = vmatpush.msra.mxu0 %v536
    %2749 = vmatpush.msra.mxu0 %v528
    %2750 = vmatpush.msra.mxu0 %v520
    %2751 = vmatpush.msra.mxu0 %v512
    %2752 = vmatpush.msra.mxu0 %v504
    %2753 = vmatpush.msra.mxu0 %v496
    %2754 = vmatpush.msra.mxu0 %v488
    %2755 = vmatpush.msra.mxu0 %v480
    %2756 = vmatpush.msra.mxu0 %v472
    %2757 = vmatpush.msra.mxu0 %v464
    %2758 = vmatpush.msra.mxu0 %v456
    %2759 = vmatpush.msra.mxu0 %v448
    %2760 = vmatpush.msra.mxu0 %v440
    %2761 = vmatpush.msra.mxu0 %v432
    %2762 = vmatmul.f32.gmra.mxu0 %v2662
    %v2763 = vpop.f32.mrf.mxu0
    %v2764 = vadd.f32 0.0, %v2763
    %2765 = vdwg.mxu0
    %2766 = vmatpush.msra.mxu0 %v680
    %2767 = vmatpush.msra.mxu0 %v672
    %2768 = vmatpush.msra.mxu0 %v664
    %2769 = vmatpush.msra.mxu0 %v656
    %2770 = vmatpush.msra.mxu0 %v648
    %2771 = vmatpush.msra.mxu0 %v640
    %2772 = vmatpush.msra.mxu0 %v632
    %2773 = vmatpush.msra.mxu0 %v624
    %2774 = vmatpush.msra.mxu0 %v616
    %2775 = vmatpush.msra.mxu0 %v608
    %2776 = vmatpush.msra.mxu0 %v600
    %2777 = vmatpush.msra.mxu0 %v592
    %2778 = vmatpush.msra.mxu0 %v584
    %2779 = vmatpush.msra.mxu0 %v576
    %2780 = vmatpush.msra.mxu0 %v568
    %2781 = vmatpush.msra.mxu0 %v560
    %2782 = vmatmul.f32.gmra.mxu0 %v2663
    %v2783 = vpop.f32.mrf.mxu0
    %v2784 = vadd.f32 %v2764, %v2783
    %2785 = vdwg.mxu0
    %2786 = vmatpush.msra.mxu0 %v553
    %2787 = vmatpush.msra.mxu0 %v545
    %2788 = vmatpush.msra.mxu0 %v537
    %2789 = vmatpush.msra.mxu0 %v529
    %2790 = vmatpush.msra.mxu0 %v521
    %2791 = vmatpush.msra.mxu0 %v513
    %2792 = vmatpush.msra.mxu0 %v505
    %2793 = vmatpush.msra.mxu0 %v497
    %2794 = vmatpush.msra.mxu0 %v489
    %2795 = vmatpush.msra.mxu0 %v481
    %2796 = vmatpush.msra.mxu0 %v473
    %2797 = vmatpush.msra.mxu0 %v465
    %2798 = vmatpush.msra.mxu0 %v457
    %2799 = vmatpush.msra.mxu0 %v449
    %2800 = vmatpush.msra.mxu0 %v441
    %2801 = vmatpush.msra.mxu0 %v433
    %2802 = vmatmul.f32.gmra.mxu0 %v2662
    %v2803 = vpop.f32.mrf.mxu0
    %v2804 = vadd.f32 0.0, %v2803
    %2805 = vdwg.mxu0
    %2806 = vmatpush.msra.mxu0 %v681
    %2807 = vmatpush.msra.mxu0 %v673
    %2808 = vmatpush.msra.mxu0 %v665
    %2809 = vmatpush.msra.mxu0 %v657
    %2810 = vmatpush.msra.mxu0 %v649
    %2811 = vmatpush.msra.mxu0 %v641
    %2812 = vmatpush.msra.mxu0 %v633
    %2813 = vmatpush.msra.mxu0 %v625
    %2814 = vmatpush.msra.mxu0 %v617
    %2815 = vmatpush.msra.mxu0 %v609
    %2816 = vmatpush.msra.mxu0 %v601
    %2817 = vmatpush.msra.mxu0 %v593
    %2818 = vmatpush.msra.mxu0 %v585
    %2819 = vmatpush.msra.mxu0 %v577
    %2820 = vmatpush.msra.mxu0 %v569
    %2821 = vmatpush.msra.mxu0 %v561
    %2822 = vmatmul.f32.gmra.mxu0 %v2663
    %v2823 = vpop.f32.mrf.mxu0
    %v2824 = vadd.f32 %v2804, %v2823
    %2825 = vdwg.mxu0
    %2826 = vmatpush.msra.mxu0 %v554
    %2827 = vmatpush.msra.mxu0 %v546
    %2828 = vmatpush.msra.mxu0 %v538
    %2829 = vmatpush.msra.mxu0 %v530
    %2830 = vmatpush.msra.mxu0 %v522
    %2831 = vmatpush.msra.mxu0 %v514
    %2832 = vmatpush.msra.mxu0 %v506
    %2833 = vmatpush.msra.mxu0 %v498
    %2834 = vmatpush.msra.mxu0 %v490
    %2835 = vmatpush.msra.mxu0 %v482
    %2836 = vmatpush.msra.mxu0 %v474
    %2837 = vmatpush.msra.mxu0 %v466
    %2838 = vmatpush.msra.mxu0 %v458
    %2839 = vmatpush.msra.mxu0 %v450
    %2840 = vmatpush.msra.mxu0 %v442
    %2841 = vmatpush.msra.mxu0 %v434
    %2842 = vmatmul.f32.gmra.mxu0 %v2662
    %v2843 = vpop.f32.mrf.mxu0
    %v2844 = vadd.f32 0.0, %v2843
    %2845 = vdwg.mxu0
    %2846 = vmatpush.msra.mxu0 %v682
    %2847 = vmatpush.msra.mxu0 %v674
    %2848 = vmatpush.msra.mxu0 %v666
    %2849 = vmatpush.msra.mxu0 %v658
    %2850 = vmatpush.msra.mxu0 %v650
    %2851 = vmatpush.msra.mxu0 %v642
    %2852 = vmatpush.msra.mxu0 %v634
    %2853 = vmatpush.msra.mxu0 %v626
    %2854 = vmatpush.msra.mxu0 %v618
    %2855 = vmatpush.msra.mxu0 %v610
    %2856 = vmatpush.msra.mxu0 %v602
    %2857 = vmatpush.msra.mxu0 %v594
    %2858 = vmatpush.msra.mxu0 %v586
    %2859 = vmatpush.msra.mxu0 %v578
    %2860 = vmatpush.msra.mxu0 %v570
    %2861 = vmatpush.msra.mxu0 %v562
    %2862 = vmatmul.f32.gmra.mxu0 %v2663
    %v2863 = vpop.f32.mrf.mxu0
    %v2864 = vadd.f32 %v2844, %v2863
    %2865 = vdwg.mxu0
    %2866 = vmatpush.msra.mxu0 %v555
    %2867 = vmatpush.msra.mxu0 %v547
    %2868 = vmatpush.msra.mxu0 %v539
    %2869 = vmatpush.msra.mxu0 %v531
    %2870 = vmatpush.msra.mxu0 %v523
    %2871 = vmatpush.msra.mxu0 %v515
    %2872 = vmatpush.msra.mxu0 %v507
    %2873 = vmatpush.msra.mxu0 %v499
    %2874 = vmatpush.msra.mxu0 %v491
    %2875 = vmatpush.msra.mxu0 %v483
    %2876 = vmatpush.msra.mxu0 %v475
    %2877 = vmatpush.msra.mxu0 %v467
    %2878 = vmatpush.msra.mxu0 %v459
    %2879 = vmatpush.msra.mxu0 %v451
    %2880 = vmatpush.msra.mxu0 %v443
    %2881 = vmatpush.msra.mxu0 %v435
    %2882 = vmatmul.f32.gmra.mxu0 %v2662
    %v2883 = vpop.f32.mrf.mxu0
    %v2884 = vadd.f32 0.0, %v2883
    %2885 = vdwg.mxu0
    %2886 = vmatpush.msra.mxu0 %v683
    %2887 = vmatpush.msra.mxu0 %v675
    %2888 = vmatpush.msra.mxu0 %v667
    %2889 = vmatpush.msra.mxu0 %v659
    %2890 = vmatpush.msra.mxu0 %v651
    %2891 = vmatpush.msra.mxu0 %v643
    %2892 = vmatpush.msra.mxu0 %v635
    %2893 = vmatpush.msra.mxu0 %v627
    %2894 = vmatpush.msra.mxu0 %v619
    %2895 = vmatpush.msra.mxu0 %v611
    %2896 = vmatpush.msra.mxu0 %v603
    %2897 = vmatpush.msra.mxu0 %v595
    %2898 = vmatpush.msra.mxu0 %v587
    %2899 = vmatpush.msra.mxu0 %v579
    %2900 = vmatpush.msra.mxu0 %v571
    %2901 = vmatpush.msra.mxu0 %v563
    %2902 = vmatmul.f32.gmra.mxu0 %v2663
    %v2903 = vpop.f32.mrf.mxu0
    %v2904 = vadd.f32 %v2884, %v2903
    %2905 = vdwg.mxu0
    %2906 = vmatpush.msra.mxu0 %v556
    %2907 = vmatpush.msra.mxu0 %v548
    %2908 = vmatpush.msra.mxu0 %v540
    %2909 = vmatpush.msra.mxu0 %v532
    %2910 = vmatpush.msra.mxu0 %v524
    %2911 = vmatpush.msra.mxu0 %v516
    %2912 = vmatpush.msra.mxu0 %v508
    %2913 = vmatpush.msra.mxu0 %v500
    %2914 = vmatpush.msra.mxu0 %v492
    %2915 = vmatpush.msra.mxu0 %v484
    %2916 = vmatpush.msra.mxu0 %v476
    %2917 = vmatpush.msra.mxu0 %v468
    %2918 = vmatpush.msra.mxu0 %v460
    %2919 = vmatpush.msra.mxu0 %v452
    %2920 = vmatpush.msra.mxu0 %v444
    %2921 = vmatpush.msra.mxu0 %v436
    %2922 = vmatmul.f32.gmra.mxu0 %v2662
    %v2923 = vpop.f32.mrf.mxu0
    %v2924 = vadd.f32 0.0, %v2923
    %2925 = vdwg.mxu0
    %2926 = vmatpush.msra.mxu0 %v684
    %2927 = vmatpush.msra.mxu0 %v676
    %2928 = vmatpush.msra.mxu0 %v668
    %2929 = vmatpush.msra.mxu0 %v660
    %2930 = vmatpush.msra.mxu0 %v652
    %2931 = vmatpush.msra.mxu0 %v644
    %2932 = vmatpush.msra.mxu0 %v636
    %2933 = vmatpush.msra.mxu0 %v628
    %2934 = vmatpush.msra.mxu0 %v620
    %2935 = vmatpush.msra.mxu0 %v612
    %2936 = vmatpush.msra.mxu0 %v604
    %2937 = vmatpush.msra.mxu0 %v596
    %2938 = vmatpush.msra.mxu0 %v588
    %2939 = vmatpush.msra.mxu0 %v580
    %2940 = vmatpush.msra.mxu0 %v572
    %2941 = vmatpush.msra.mxu0 %v564
    %2942 = vmatmul.f32.gmra.mxu0 %v2663
    %v2943 = vpop.f32.mrf.mxu0
    %v2944 = vadd.f32 %v2924, %v2943
    %2945 = vdwg.mxu0
    %2946 = vmatpush.msra.mxu0 %v557
    %2947 = vmatpush.msra.mxu0 %v549
    %2948 = vmatpush.msra.mxu0 %v541
    %2949 = vmatpush.msra.mxu0 %v533
    %2950 = vmatpush.msra.mxu0 %v525
    %2951 = vmatpush.msra.mxu0 %v517
    %2952 = vmatpush.msra.mxu0 %v509
    %2953 = vmatpush.msra.mxu0 %v501
    %2954 = vmatpush.msra.mxu0 %v493
    %2955 = vmatpush.msra.mxu0 %v485
    %2956 = vmatpush.msra.mxu0 %v477
    %2957 = vmatpush.msra.mxu0 %v469
    %2958 = vmatpush.msra.mxu0 %v461
    %2959 = vmatpush.msra.mxu0 %v453
    %2960 = vmatpush.msra.mxu0 %v445
    %2961 = vmatpush.msra.mxu0 %v437
    %2962 = vmatmul.f32.gmra.mxu0 %v2662
    %v2963 = vpop.f32.mrf.mxu0
    %v2964 = vadd.f32 0.0, %v2963
    %2965 = vdwg.mxu0
    %2966 = vmatpush.msra.mxu0 %v685
    %2967 = vmatpush.msra.mxu0 %v677
    %2968 = vmatpush.msra.mxu0 %v669
    %2969 = vmatpush.msra.mxu0 %v661
    %2970 = vmatpush.msra.mxu0 %v653
    %2971 = vmatpush.msra.mxu0 %v645
    %2972 = vmatpush.msra.mxu0 %v637
    %2973 = vmatpush.msra.mxu0 %v629
    %2974 = vmatpush.msra.mxu0 %v621
    %2975 = vmatpush.msra.mxu0 %v613
    %2976 = vmatpush.msra.mxu0 %v605
    %2977 = vmatpush.msra.mxu0 %v597
    %2978 = vmatpush.msra.mxu0 %v589
    %2979 = vmatpush.msra.mxu0 %v581
    %2980 = vmatpush.msra.mxu0 %v573
    %2981 = vmatpush.msra.mxu0 %v565
    %2982 = vmatmul.f32.gmra.mxu0 %v2663
    %v2983 = vpop.f32.mrf.mxu0
    %v2984 = vadd.f32 %v2964, %v2983
    %2985 = vdwg.mxu0
    %v2994 = vrot.slane %v2704, 3
    %v2995 = vrot.slane %v2744, 3
    %v2996 = vrot.slane %v2784, 3
    %v2997 = vrot.slane %v2824, 3
    %v2998 = vrot.slane %v2864, 3
    %v2999 = vrot.slane %v2904, 3
    %v3000 = vrot.slane %v2944, 3
    %v3001 = vrot.slane %v2984, 3
    %v3010 = vadd.f32 %v155, %v2994
    %v3011 = vadd.f32 %v175, %v2995
    %v3012 = vadd.f32 %v195, %v2996
    %v3013 = vadd.f32 %v215, %v2997
    %v3014 = vadd.f32 %v235, %v2998
    %v3015 = vadd.f32 %v255, %v2999
    %v3016 = vadd.f32 %v275, %v3000
    %v3017 = vadd.f32 %v295, %v3001
    %v3018 = vxor.u32 %v3010, 2147483648
    %v3019 = vxor.u32 %v3011, 2147483648
    %v3020 = vxor.u32 %v3012, 2147483648
    %v3021 = vxor.u32 %v3013, 2147483648
    %v3022 = vxor.u32 %v3014, 2147483648
    %v3023 = vxor.u32 %v3015, 2147483648
    %v3024 = vmul.f32 %v3018, 1.442695
    %v3025 = vpow.pop %v3024
    %v3026 = vmul.f32 %v3019, 1.442695
    %v3027 = vpow.pop %v3026
    %v3028 = vmul.f32 %v3020, 1.442695
    %v3029 = vpow.pop %v3028
    %v3030 = vmul.f32 %v3021, 1.442695
    %v3031 = vpow.pop %v3030
    %v3032 = vmul.f32 %v3022, 1.442695
    %v3033 = vpow.pop %v3032
    %v3034 = vmul.f32 %v3023, 1.442695
    %v3035 = vpow.pop %v3034
    %v3036 = vadd.f32 %v3025, 1.0
    %v3037 = vadd.f32 %v3027, 1.0
    %v3038 = vadd.f32 %v3029, 1.0
    %v3039 = vadd.f32 %v3031, 1.0
    %v3040 = vadd.f32 %v3033, 1.0
    %v3041 = vadd.f32 %v3035, 1.0
    %v3042 = vrcp.pop %v3036
    %v3043 = vmul.f32 %v3036, %v3042
    %v3044 = vsub.f32 1.0, %v3043
    %v3045 = vmul.f32 %v3042, %v3044
    %v3046 = vadd.f32 %v3042, %v3045
    %vm3047 = vweird.f32 %v3036
    %vm3048 = vweird.f32 %v3042
    %vm3049 = vmor %vm3047, %vm3048
    %v3050 = vsel %vm3049, %v3042, %v3046
    %v3051 = vand.u32 2147483647, %v3036
    %vm3052 = vcmp.eq.f32.partialorder %v3051, 8.507059e+37
    %v3053 = vand.u32 %v3036, 2147483648
    %v3054 = vor.u32 1.1754944e-38, %v3053
    %v3055 = vsel %vm3052, %v3054, %v3050
    %v3056 = vmul.f32 1.0, %v3055
    %v3057 = vrcp.pop %v3037
    %v3058 = vmul.f32 %v3037, %v3057
    %v3059 = vsub.f32 1.0, %v3058
    %v3060 = vmul.f32 %v3057, %v3059
    %v3061 = vadd.f32 %v3057, %v3060
    %vm3062 = vweird.f32 %v3037
    %vm3063 = vweird.f32 %v3057
    %vm3064 = vmor %vm3062, %vm3063
    %v3065 = vsel %vm3064, %v3057, %v3061
    %v3066 = vand.u32 2147483647, %v3037
    %vm3067 = vcmp.eq.f32.partialorder %v3066, 8.507059e+37
    %v3068 = vand.u32 %v3037, 2147483648
    %v3069 = vor.u32 1.1754944e-38, %v3068
    %v3070 = vsel %vm3067, %v3069, %v3065
    %v3071 = vmul.f32 1.0, %v3070
    %v3072 = vrcp.pop %v3038
    %v3073 = vmul.f32 %v3038, %v3072
    %v3074 = vsub.f32 1.0, %v3073
    %v3075 = vmul.f32 %v3072, %v3074
    %v3076 = vadd.f32 %v3072, %v3075
    %vm3077 = vweird.f32 %v3038
    %vm3078 = vweird.f32 %v3072
    %vm3079 = vmor %vm3077, %vm3078
    %v3080 = vsel %vm3079, %v3072, %v3076
    %v3081 = vand.u32 2147483647, %v3038
    %vm3082 = vcmp.eq.f32.partialorder %v3081, 8.507059e+37
    %v3083 = vand.u32 %v3038, 2147483648
    %v3084 = vor.u32 1.1754944e-38, %v3083
    %v3085 = vsel %vm3082, %v3084, %v3080
    %v3086 = vmul.f32 1.0, %v3085
    %v3087 = vrcp.pop %v3039
    %v3088 = vmul.f32 %v3039, %v3087
    %v3089 = vsub.f32 1.0, %v3088
    %v3090 = vmul.f32 %v3087, %v3089
    %v3091 = vadd.f32 %v3087, %v3090
    %vm3092 = vweird.f32 %v3039
    %vm3093 = vweird.f32 %v3087
    %vm3094 = vmor %vm3092, %vm3093
    %v3095 = vsel %vm3094, %v3087, %v3091
    %v3096 = vand.u32 2147483647, %v3039
    %vm3097 = vcmp.eq.f32.partialorder %v3096, 8.507059e+37
    %v3098 = vand.u32 %v3039, 2147483648
    %v3099 = vor.u32 1.1754944e-38, %v3098
    %v3100 = vsel %vm3097, %v3099, %v3095
    %v3101 = vmul.f32 1.0, %v3100
    %v3102 = vrcp.pop %v3040
    %v3103 = vmul.f32 %v3040, %v3102
    %v3104 = vsub.f32 1.0, %v3103
    %v3105 = vmul.f32 %v3102, %v3104
    %v3106 = vadd.f32 %v3102, %v3105
    %vm3107 = vweird.f32 %v3040
    %vm3108 = vweird.f32 %v3102
    %vm3109 = vmor %vm3107, %vm3108
    %v3110 = vsel %vm3109, %v3102, %v3106
    %v3111 = vand.u32 2147483647, %v3040
    %vm3112 = vcmp.eq.f32.partialorder %v3111, 8.507059e+37
    %v3113 = vand.u32 %v3040, 2147483648
    %v3114 = vor.u32 1.1754944e-38, %v3113
    %v3115 = vsel %vm3112, %v3114, %v3110
    %v3116 = vmul.f32 1.0, %v3115
    %v3117 = vrcp.pop %v3041
    %v3118 = vmul.f32 %v3041, %v3117
    %v3119 = vsub.f32 1.0, %v3118
    %v3120 = vmul.f32 %v3117, %v3119
    %v3121 = vadd.f32 %v3117, %v3120
    %vm3122 = vweird.f32 %v3041
    %vm3123 = vweird.f32 %v3117
    %vm3124 = vmor %vm3122, %vm3123
    %v3125 = vsel %vm3124, %v3117, %v3121
    %v3126 = vand.u32 2147483647, %v3041
    %vm3127 = vcmp.eq.f32.partialorder %v3126, 8.507059e+37
    %v3128 = vand.u32 %v3041, 2147483648
    %v3129 = vor.u32 1.1754944e-38, %v3128
    %v3130 = vsel %vm3127, %v3129, %v3125
    %v3131 = vmul.f32 1.0, %v3130
    %v3132 = vtanh.pop %v3016
    %v3133 = vtanh.pop %v3017
    %v3136 = vrot.slane %v2649, 7
    %v3137 = vrot.slane %v2650, 7
    %v3140 = vmul.f32 %v3086, %v3136
    %v3141 = vmul.f32 %v3101, %v3137
    %v3142 = vmul.f32 %v3056, %v3132
    %v3143 = vmul.f32 %v3071, %v3133
    %v3144 = vadd.f32 %v3140, %v3142
    %v3145 = vadd.f32 %v3141, %v3143
    %v3146 = vtanh.pop %v3144
    %v3147 = vtanh.pop %v3145
    %v3148 = vmul.f32 %v3116, %v3146
    %v3149 = vmul.f32 %v3131, %v3147
    %vm3150 = vcmp.eq.s32.totalorder %v298, 5
    %v3151 = vperm.slane %v3148, 5
    %v3152 = vperm.slane %v3149, 5
    %v3153 = vsel %vm3150, %v3151, %v2658
    %v3154 = vsel %vm3150, %v3152, %v2659
    %v3157 = vrot.slane %v3148, 5
    %v3158 = vrot.slane %v3149, 5
    %3161 = vmatpush.msra.mxu0 %v550
    %3162 = vmatpush.msra.mxu0 %v542
    %3163 = vmatpush.msra.mxu0 %v534
    %3164 = vmatpush.msra.mxu0 %v526
    %3165 = vmatpush.msra.mxu0 %v518
    %3166 = vmatpush.msra.mxu0 %v510
    %3167 = vmatpush.msra.mxu0 %v502
    %3168 = vmatpush.msra.mxu0 %v494
    %3169 = vmatpush.msra.mxu0 %v486
    %3170 = vmatpush.msra.mxu0 %v478
    %3171 = vmatpush.msra.mxu0 %v470
    %3172 = vmatpush.msra.mxu0 %v462
    %3173 = vmatpush.msra.mxu0 %v454
    %3174 = vmatpush.msra.mxu0 %v446
    %3175 = vmatpush.msra.mxu0 %v438
    %3176 = vmatpush.msra.mxu0 %v430
    %3177 = vmatmul.f32.gmra.mxu0 %v3157
    %v3178 = vpop.f32.mrf.mxu0
    %v3179 = vadd.f32 0.0, %v3178
    %3180 = vdwg.mxu0
    %3181 = vmatpush.msra.mxu0 %v678
    %3182 = vmatpush.msra.mxu0 %v670
    %3183 = vmatpush.msra.mxu0 %v662
    %3184 = vmatpush.msra.mxu0 %v654
    %3185 = vmatpush.msra.mxu0 %v646
    %3186 = vmatpush.msra.mxu0 %v638
    %3187 = vmatpush.msra.mxu0 %v630
    %3188 = vmatpush.msra.mxu0 %v622
    %3189 = vmatpush.msra.mxu0 %v614
    %3190 = vmatpush.msra.mxu0 %v606
    %3191 = vmatpush.msra.mxu0 %v598
    %3192 = vmatpush.msra.mxu0 %v590
    %3193 = vmatpush.msra.mxu0 %v582
    %3194 = vmatpush.msra.mxu0 %v574
    %3195 = vmatpush.msra.mxu0 %v566
    %3196 = vmatpush.msra.mxu0 %v558
    %3197 = vmatmul.f32.gmra.mxu0 %v3158
    %v3198 = vpop.f32.mrf.mxu0
    %v3199 = vadd.f32 %v3179, %v3198
    %3200 = vdwg.mxu0
    %3201 = vmatpush.msra.mxu0 %v551
    %3202 = vmatpush.msra.mxu0 %v543
    %3203 = vmatpush.msra.mxu0 %v535
    %3204 = vmatpush.msra.mxu0 %v527
    %3205 = vmatpush.msra.mxu0 %v519
    %3206 = vmatpush.msra.mxu0 %v511
    %3207 = vmatpush.msra.mxu0 %v503
    %3208 = vmatpush.msra.mxu0 %v495
    %3209 = vmatpush.msra.mxu0 %v487
    %3210 = vmatpush.msra.mxu0 %v479
    %3211 = vmatpush.msra.mxu0 %v471
    %3212 = vmatpush.msra.mxu0 %v463
    %3213 = vmatpush.msra.mxu0 %v455
    %3214 = vmatpush.msra.mxu0 %v447
    %3215 = vmatpush.msra.mxu0 %v439
    %3216 = vmatpush.msra.mxu0 %v431
    %3217 = vmatmul.f32.gmra.mxu0 %v3157
    %v3218 = vpop.f32.mrf.mxu0
    %v3219 = vadd.f32 0.0, %v3218
    %3220 = vdwg.mxu0
    %3221 = vmatpush.msra.mxu0 %v679
    %3222 = vmatpush.msra.mxu0 %v671
    %3223 = vmatpush.msra.mxu0 %v663
    %3224 = vmatpush.msra.mxu0 %v655
    %3225 = vmatpush.msra.mxu0 %v647
    %3226 = vmatpush.msra.mxu0 %v639
    %3227 = vmatpush.msra.mxu0 %v631
    %3228 = vmatpush.msra.mxu0 %v623
    %3229 = vmatpush.msra.mxu0 %v615
    %3230 = vmatpush.msra.mxu0 %v607
    %3231 = vmatpush.msra.mxu0 %v599
    %3232 = vmatpush.msra.mxu0 %v591
    %3233 = vmatpush.msra.mxu0 %v583
    %3234 = vmatpush.msra.mxu0 %v575
    %3235 = vmatpush.msra.mxu0 %v567
    %3236 = vmatpush.msra.mxu0 %v559
    %3237 = vmatmul.f32.gmra.mxu0 %v3158
    %v3238 = vpop.f32.mrf.mxu0
    %v3239 = vadd.f32 %v3219, %v3238
    %3240 = vdwg.mxu0
    %3241 = vmatpush.msra.mxu0 %v552
    %3242 = vmatpush.msra.mxu0 %v544
    %3243 = vmatpush.msra.mxu0 %v536
    %3244 = vmatpush.msra.mxu0 %v528
    %3245 = vmatpush.msra.mxu0 %v520
    %3246 = vmatpush.msra.mxu0 %v512
    %3247 = vmatpush.msra.mxu0 %v504
    %3248 = vmatpush.msra.mxu0 %v496
    %3249 = vmatpush.msra.mxu0 %v488
    %3250 = vmatpush.msra.mxu0 %v480
    %3251 = vmatpush.msra.mxu0 %v472
    %3252 = vmatpush.msra.mxu0 %v464
    %3253 = vmatpush.msra.mxu0 %v456
    %3254 = vmatpush.msra.mxu0 %v448
    %3255 = vmatpush.msra.mxu0 %v440
    %3256 = vmatpush.msra.mxu0 %v432
    %3257 = vmatmul.f32.gmra.mxu0 %v3157
    %v3258 = vpop.f32.mrf.mxu0
    %v3259 = vadd.f32 0.0, %v3258
    %3260 = vdwg.mxu0
    %3261 = vmatpush.msra.mxu0 %v680
    %3262 = vmatpush.msra.mxu0 %v672
    %3263 = vmatpush.msra.mxu0 %v664
    %3264 = vmatpush.msra.mxu0 %v656
    %3265 = vmatpush.msra.mxu0 %v648
    %3266 = vmatpush.msra.mxu0 %v640
    %3267 = vmatpush.msra.mxu0 %v632
    %3268 = vmatpush.msra.mxu0 %v624
    %3269 = vmatpush.msra.mxu0 %v616
    %3270 = vmatpush.msra.mxu0 %v608
    %3271 = vmatpush.msra.mxu0 %v600
    %3272 = vmatpush.msra.mxu0 %v592
    %3273 = vmatpush.msra.mxu0 %v584
    %3274 = vmatpush.msra.mxu0 %v576
    %3275 = vmatpush.msra.mxu0 %v568
    %3276 = vmatpush.msra.mxu0 %v560
    %3277 = vmatmul.f32.gmra.mxu0 %v3158
    %v3278 = vpop.f32.mrf.mxu0
    %v3279 = vadd.f32 %v3259, %v3278
    %3280 = vdwg.mxu0
    %3281 = vmatpush.msra.mxu0 %v553
    %3282 = vmatpush.msra.mxu0 %v545
    %3283 = vmatpush.msra.mxu0 %v537
    %3284 = vmatpush.msra.mxu0 %v529
    %3285 = vmatpush.msra.mxu0 %v521
    %3286 = vmatpush.msra.mxu0 %v513
    %3287 = vmatpush.msra.mxu0 %v505
    %3288 = vmatpush.msra.mxu0 %v497
    %3289 = vmatpush.msra.mxu0 %v489
    %3290 = vmatpush.msra.mxu0 %v481
    %3291 = vmatpush.msra.mxu0 %v473
    %3292 = vmatpush.msra.mxu0 %v465
    %3293 = vmatpush.msra.mxu0 %v457
    %3294 = vmatpush.msra.mxu0 %v449
    %3295 = vmatpush.msra.mxu0 %v441
    %3296 = vmatpush.msra.mxu0 %v433
    %3297 = vmatmul.f32.gmra.mxu0 %v3157
    %v3298 = vpop.f32.mrf.mxu0
    %v3299 = vadd.f32 0.0, %v3298
    %3300 = vdwg.mxu0
    %3301 = vmatpush.msra.mxu0 %v681
    %3302 = vmatpush.msra.mxu0 %v673
    %3303 = vmatpush.msra.mxu0 %v665
    %3304 = vmatpush.msra.mxu0 %v657
    %3305 = vmatpush.msra.mxu0 %v649
    %3306 = vmatpush.msra.mxu0 %v641
    %3307 = vmatpush.msra.mxu0 %v633
    %3308 = vmatpush.msra.mxu0 %v625
    %3309 = vmatpush.msra.mxu0 %v617
    %3310 = vmatpush.msra.mxu0 %v609
    %3311 = vmatpush.msra.mxu0 %v601
    %3312 = vmatpush.msra.mxu0 %v593
    %3313 = vmatpush.msra.mxu0 %v585
    %3314 = vmatpush.msra.mxu0 %v577
    %3315 = vmatpush.msra.mxu0 %v569
    %3316 = vmatpush.msra.mxu0 %v561
    %3317 = vmatmul.f32.gmra.mxu0 %v3158
    %v3318 = vpop.f32.mrf.mxu0
    %v3319 = vadd.f32 %v3299, %v3318
    %3320 = vdwg.mxu0
    %3321 = vmatpush.msra.mxu0 %v554
    %3322 = vmatpush.msra.mxu0 %v546
    %3323 = vmatpush.msra.mxu0 %v538
    %3324 = vmatpush.msra.mxu0 %v530
    %3325 = vmatpush.msra.mxu0 %v522
    %3326 = vmatpush.msra.mxu0 %v514
    %3327 = vmatpush.msra.mxu0 %v506
    %3328 = vmatpush.msra.mxu0 %v498
    %3329 = vmatpush.msra.mxu0 %v490
    %3330 = vmatpush.msra.mxu0 %v482
    %3331 = vmatpush.msra.mxu0 %v474
    %3332 = vmatpush.msra.mxu0 %v466
    %3333 = vmatpush.msra.mxu0 %v458
    %3334 = vmatpush.msra.mxu0 %v450
    %3335 = vmatpush.msra.mxu0 %v442
    %3336 = vmatpush.msra.mxu0 %v434
    %3337 = vmatmul.f32.gmra.mxu0 %v3157
    %v3338 = vpop.f32.mrf.mxu0
    %v3339 = vadd.f32 0.0, %v3338
    %3340 = vdwg.mxu0
    %3341 = vmatpush.msra.mxu0 %v682
    %3342 = vmatpush.msra.mxu0 %v674
    %3343 = vmatpush.msra.mxu0 %v666
    %3344 = vmatpush.msra.mxu0 %v658
    %3345 = vmatpush.msra.mxu0 %v650
    %3346 = vmatpush.msra.mxu0 %v642
    %3347 = vmatpush.msra.mxu0 %v634
    %3348 = vmatpush.msra.mxu0 %v626
    %3349 = vmatpush.msra.mxu0 %v618
    %3350 = vmatpush.msra.mxu0 %v610
    %3351 = vmatpush.msra.mxu0 %v602
    %3352 = vmatpush.msra.mxu0 %v594
    %3353 = vmatpush.msra.mxu0 %v586
    %3354 = vmatpush.msra.mxu0 %v578
    %3355 = vmatpush.msra.mxu0 %v570
    %3356 = vmatpush.msra.mxu0 %v562
    %3357 = vmatmul.f32.gmra.mxu0 %v3158
    %v3358 = vpop.f32.mrf.mxu0
    %v3359 = vadd.f32 %v3339, %v3358
    %3360 = vdwg.mxu0
    %3361 = vmatpush.msra.mxu0 %v555
    %3362 = vmatpush.msra.mxu0 %v547
    %3363 = vmatpush.msra.mxu0 %v539
    %3364 = vmatpush.msra.mxu0 %v531
    %3365 = vmatpush.msra.mxu0 %v523
    %3366 = vmatpush.msra.mxu0 %v515
    %3367 = vmatpush.msra.mxu0 %v507
    %3368 = vmatpush.msra.mxu0 %v499
    %3369 = vmatpush.msra.mxu0 %v491
    %3370 = vmatpush.msra.mxu0 %v483
    %3371 = vmatpush.msra.mxu0 %v475
    %3372 = vmatpush.msra.mxu0 %v467
    %3373 = vmatpush.msra.mxu0 %v459
    %3374 = vmatpush.msra.mxu0 %v451
    %3375 = vmatpush.msra.mxu0 %v443
    %3376 = vmatpush.msra.mxu0 %v435
    %3377 = vmatmul.f32.gmra.mxu0 %v3157
    %v3378 = vpop.f32.mrf.mxu0
    %v3379 = vadd.f32 0.0, %v3378
    %3380 = vdwg.mxu0
    %3381 = vmatpush.msra.mxu0 %v683
    %3382 = vmatpush.msra.mxu0 %v675
    %3383 = vmatpush.msra.mxu0 %v667
    %3384 = vmatpush.msra.mxu0 %v659
    %3385 = vmatpush.msra.mxu0 %v651
    %3386 = vmatpush.msra.mxu0 %v643
    %3387 = vmatpush.msra.mxu0 %v635
    %3388 = vmatpush.msra.mxu0 %v627
    %3389 = vmatpush.msra.mxu0 %v619
    %3390 = vmatpush.msra.mxu0 %v611
    %3391 = vmatpush.msra.mxu0 %v603
    %3392 = vmatpush.msra.mxu0 %v595
    %3393 = vmatpush.msra.mxu0 %v587
    %3394 = vmatpush.msra.mxu0 %v579
    %3395 = vmatpush.msra.mxu0 %v571
    %3396 = vmatpush.msra.mxu0 %v563
    %3397 = vmatmul.f32.gmra.mxu0 %v3158
    %v3398 = vpop.f32.mrf.mxu0
    %v3399 = vadd.f32 %v3379, %v3398
    %3400 = vdwg.mxu0
    %3401 = vmatpush.msra.mxu0 %v556
    %3402 = vmatpush.msra.mxu0 %v548
    %3403 = vmatpush.msra.mxu0 %v540
    %3404 = vmatpush.msra.mxu0 %v532
    %3405 = vmatpush.msra.mxu0 %v524
    %3406 = vmatpush.msra.mxu0 %v516
    %3407 = vmatpush.msra.mxu0 %v508
    %3408 = vmatpush.msra.mxu0 %v500
    %3409 = vmatpush.msra.mxu0 %v492
    %3410 = vmatpush.msra.mxu0 %v484
    %3411 = vmatpush.msra.mxu0 %v476
    %3412 = vmatpush.msra.mxu0 %v468
    %3413 = vmatpush.msra.mxu0 %v460
    %3414 = vmatpush.msra.mxu0 %v452
    %3415 = vmatpush.msra.mxu0 %v444
    %3416 = vmatpush.msra.mxu0 %v436
    %3417 = vmatmul.f32.gmra.mxu0 %v3157
    %v3418 = vpop.f32.mrf.mxu0
    %v3419 = vadd.f32 0.0, %v3418
    %3420 = vdwg.mxu0
    %3421 = vmatpush.msra.mxu0 %v684
    %3422 = vmatpush.msra.mxu0 %v676
    %3423 = vmatpush.msra.mxu0 %v668
    %3424 = vmatpush.msra.mxu0 %v660
    %3425 = vmatpush.msra.mxu0 %v652
    %3426 = vmatpush.msra.mxu0 %v644
    %3427 = vmatpush.msra.mxu0 %v636
    %3428 = vmatpush.msra.mxu0 %v628
    %3429 = vmatpush.msra.mxu0 %v620
    %3430 = vmatpush.msra.mxu0 %v612
    %3431 = vmatpush.msra.mxu0 %v604
    %3432 = vmatpush.msra.mxu0 %v596
    %3433 = vmatpush.msra.mxu0 %v588
    %3434 = vmatpush.msra.mxu0 %v580
    %3435 = vmatpush.msra.mxu0 %v572
    %3436 = vmatpush.msra.mxu0 %v564
    %3437 = vmatmul.f32.gmra.mxu0 %v3158
    %v3438 = vpop.f32.mrf.mxu0
    %v3439 = vadd.f32 %v3419, %v3438
    %3440 = vdwg.mxu0
    %3441 = vmatpush.msra.mxu0 %v557
    %3442 = vmatpush.msra.mxu0 %v549
    %3443 = vmatpush.msra.mxu0 %v541
    %3444 = vmatpush.msra.mxu0 %v533
    %3445 = vmatpush.msra.mxu0 %v525
    %3446 = vmatpush.msra.mxu0 %v517
    %3447 = vmatpush.msra.mxu0 %v509
    %3448 = vmatpush.msra.mxu0 %v501
    %3449 = vmatpush.msra.mxu0 %v493
    %3450 = vmatpush.msra.mxu0 %v485
    %3451 = vmatpush.msra.mxu0 %v477
    %3452 = vmatpush.msra.mxu0 %v469
    %3453 = vmatpush.msra.mxu0 %v461
    %3454 = vmatpush.msra.mxu0 %v453
    %3455 = vmatpush.msra.mxu0 %v445
    %3456 = vmatpush.msra.mxu0 %v437
    %3457 = vmatmul.f32.gmra.mxu0 %v3157
    %v3458 = vpop.f32.mrf.mxu0
    %v3459 = vadd.f32 0.0, %v3458
    %3460 = vdwg.mxu0
    %3461 = vmatpush.msra.mxu0 %v685
    %3462 = vmatpush.msra.mxu0 %v677
    %3463 = vmatpush.msra.mxu0 %v669
    %3464 = vmatpush.msra.mxu0 %v661
    %3465 = vmatpush.msra.mxu0 %v653
    %3466 = vmatpush.msra.mxu0 %v645
    %3467 = vmatpush.msra.mxu0 %v637
    %3468 = vmatpush.msra.mxu0 %v629
    %3469 = vmatpush.msra.mxu0 %v621
    %3470 = vmatpush.msra.mxu0 %v613
    %3471 = vmatpush.msra.mxu0 %v605
    %3472 = vmatpush.msra.mxu0 %v597
    %3473 = vmatpush.msra.mxu0 %v589
    %3474 = vmatpush.msra.mxu0 %v581
    %3475 = vmatpush.msra.mxu0 %v573
    %3476 = vmatpush.msra.mxu0 %v565
    %3477 = vmatmul.f32.gmra.mxu0 %v3158
    %v3478 = vpop.f32.mrf.mxu0
    %v3479 = vadd.f32 %v3459, %v3478
    %3480 = vdwg.mxu0
    %v3489 = vrot.slane %v3199, 2
    %v3490 = vrot.slane %v3239, 2
    %v3491 = vrot.slane %v3279, 2
    %v3492 = vrot.slane %v3319, 2
    %v3493 = vrot.slane %v3359, 2
    %v3494 = vrot.slane %v3399, 2
    %v3495 = vrot.slane %v3439, 2
    %v3496 = vrot.slane %v3479, 2
    %v3505 = vadd.f32 %v155, %v3489
    %v3506 = vadd.f32 %v175, %v3490
    %v3507 = vadd.f32 %v195, %v3491
    %v3508 = vadd.f32 %v215, %v3492
    %v3509 = vadd.f32 %v235, %v3493
    %v3510 = vadd.f32 %v255, %v3494
    %v3511 = vadd.f32 %v275, %v3495
    %v3512 = vadd.f32 %v295, %v3496
    %v3513 = vxor.u32 %v3505, 2147483648
    %v3514 = vxor.u32 %v3506, 2147483648
    %v3515 = vxor.u32 %v3507, 2147483648
    %v3516 = vxor.u32 %v3508, 2147483648
    %v3517 = vxor.u32 %v3509, 2147483648
    %v3518 = vxor.u32 %v3510, 2147483648
    %v3519 = vmul.f32 %v3513, 1.442695
    %v3520 = vpow.pop %v3519
    %v3521 = vmul.f32 %v3514, 1.442695
    %v3522 = vpow.pop %v3521
    %v3523 = vmul.f32 %v3515, 1.442695
    %v3524 = vpow.pop %v3523
    %v3525 = vmul.f32 %v3516, 1.442695
    %v3526 = vpow.pop %v3525
    %v3527 = vmul.f32 %v3517, 1.442695
    %v3528 = vpow.pop %v3527
    %v3529 = vmul.f32 %v3518, 1.442695
    %v3530 = vpow.pop %v3529
    %v3531 = vadd.f32 %v3520, 1.0
    %v3532 = vadd.f32 %v3522, 1.0
    %v3533 = vadd.f32 %v3524, 1.0
    %v3534 = vadd.f32 %v3526, 1.0
    %v3535 = vadd.f32 %v3528, 1.0
    %v3536 = vadd.f32 %v3530, 1.0
    %v3537 = vrcp.pop %v3531
    %v3538 = vmul.f32 %v3531, %v3537
    %v3539 = vsub.f32 1.0, %v3538
    %v3540 = vmul.f32 %v3537, %v3539
    %v3541 = vadd.f32 %v3537, %v3540
    %vm3542 = vweird.f32 %v3531
    %vm3543 = vweird.f32 %v3537
    %vm3544 = vmor %vm3542, %vm3543
    %v3545 = vsel %vm3544, %v3537, %v3541
    %v3546 = vand.u32 2147483647, %v3531
    %vm3547 = vcmp.eq.f32.partialorder %v3546, 8.507059e+37
    %v3548 = vand.u32 %v3531, 2147483648
    %v3549 = vor.u32 1.1754944e-38, %v3548
    %v3550 = vsel %vm3547, %v3549, %v3545
    %v3551 = vmul.f32 1.0, %v3550
    %v3552 = vrcp.pop %v3532
    %v3553 = vmul.f32 %v3532, %v3552
    %v3554 = vsub.f32 1.0, %v3553
    %v3555 = vmul.f32 %v3552, %v3554
    %v3556 = vadd.f32 %v3552, %v3555
    %vm3557 = vweird.f32 %v3532
    %vm3558 = vweird.f32 %v3552
    %vm3559 = vmor %vm3557, %vm3558
    %v3560 = vsel %vm3559, %v3552, %v3556
    %v3561 = vand.u32 2147483647, %v3532
    %vm3562 = vcmp.eq.f32.partialorder %v3561, 8.507059e+37
    %v3563 = vand.u32 %v3532, 2147483648
    %v3564 = vor.u32 1.1754944e-38, %v3563
    %v3565 = vsel %vm3562, %v3564, %v3560
    %v3566 = vmul.f32 1.0, %v3565
    %v3567 = vrcp.pop %v3533
    %v3568 = vmul.f32 %v3533, %v3567
    %v3569 = vsub.f32 1.0, %v3568
    %v3570 = vmul.f32 %v3567, %v3569
    %v3571 = vadd.f32 %v3567, %v3570
    %vm3572 = vweird.f32 %v3533
    %vm3573 = vweird.f32 %v3567
    %vm3574 = vmor %vm3572, %vm3573
    %v3575 = vsel %vm3574, %v3567, %v3571
    %v3576 = vand.u32 2147483647, %v3533
    %vm3577 = vcmp.eq.f32.partialorder %v3576, 8.507059e+37
    %v3578 = vand.u32 %v3533, 2147483648
    %v3579 = vor.u32 1.1754944e-38, %v3578
    %v3580 = vsel %vm3577, %v3579, %v3575
    %v3581 = vmul.f32 1.0, %v3580
    %v3582 = vrcp.pop %v3534
    %v3583 = vmul.f32 %v3534, %v3582
    %v3584 = vsub.f32 1.0, %v3583
    %v3585 = vmul.f32 %v3582, %v3584
    %v3586 = vadd.f32 %v3582, %v3585
    %vm3587 = vweird.f32 %v3534
    %vm3588 = vweird.f32 %v3582
    %vm3589 = vmor %vm3587, %vm3588
    %v3590 = vsel %vm3589, %v3582, %v3586
    %v3591 = vand.u32 2147483647, %v3534
    %vm3592 = vcmp.eq.f32.partialorder %v3591, 8.507059e+37
    %v3593 = vand.u32 %v3534, 2147483648
    %v3594 = vor.u32 1.1754944e-38, %v3593
    %v3595 = vsel %vm3592, %v3594, %v3590
    %v3596 = vmul.f32 1.0, %v3595
    %v3597 = vrcp.pop %v3535
    %v3598 = vmul.f32 %v3535, %v3597
    %v3599 = vsub.f32 1.0, %v3598
    %v3600 = vmul.f32 %v3597, %v3599
    %v3601 = vadd.f32 %v3597, %v3600
    %vm3602 = vweird.f32 %v3535
    %vm3603 = vweird.f32 %v3597
    %vm3604 = vmor %vm3602, %vm3603
    %v3605 = vsel %vm3604, %v3597, %v3601
    %v3606 = vand.u32 2147483647, %v3535
    %vm3607 = vcmp.eq.f32.partialorder %v3606, 8.507059e+37
    %v3608 = vand.u32 %v3535, 2147483648
    %v3609 = vor.u32 1.1754944e-38, %v3608
    %v3610 = vsel %vm3607, %v3609, %v3605
    %v3611 = vmul.f32 1.0, %v3610
    %v3612 = vrcp.pop %v3536
    %v3613 = vmul.f32 %v3536, %v3612
    %v3614 = vsub.f32 1.0, %v3613
    %v3615 = vmul.f32 %v3612, %v3614
    %v3616 = vadd.f32 %v3612, %v3615
    %vm3617 = vweird.f32 %v3536
    %vm3618 = vweird.f32 %v3612
    %vm3619 = vmor %vm3617, %vm3618
    %v3620 = vsel %vm3619, %v3612, %v3616
    %v3621 = vand.u32 2147483647, %v3536
    %vm3622 = vcmp.eq.f32.partialorder %v3621, 8.507059e+37
    %v3623 = vand.u32 %v3536, 2147483648
    %v3624 = vor.u32 1.1754944e-38, %v3623
    %v3625 = vsel %vm3622, %v3624, %v3620
    %v3626 = vmul.f32 1.0, %v3625
    %v3627 = vtanh.pop %v3511
    %v3628 = vtanh.pop %v3512
    %v3631 = vrot.slane %v3144, 7
    %v3632 = vrot.slane %v3145, 7
    %v3635 = vmul.f32 %v3581, %v3631
    %v3636 = vmul.f32 %v3596, %v3632
    %v3637 = vmul.f32 %v3551, %v3627
    %v3638 = vmul.f32 %v3566, %v3628
    %v3639 = vadd.f32 %v3635, %v3637
    %v3640 = vadd.f32 %v3636, %v3638
    %v3641 = vtanh.pop %v3639
    %v3642 = vtanh.pop %v3640
    %v3643 = vmul.f32 %v3611, %v3641
    %v3644 = vmul.f32 %v3626, %v3642
    %vm3645 = vcmp.eq.s32.totalorder %v298, 6
    %v3646 = vperm.slane %v3643, 6
    %v3647 = vperm.slane %v3644, 6
    %v3648 = vsel %vm3645, %v3646, %v3153
    %v3649 = vsel %vm3645, %v3647, %v3154
    %v3652 = vrot.slane %v3643, 6
    %v3653 = vrot.slane %v3644, 6
    %3656 = vmatpush.msra.mxu0 %v550
    %3657 = vmatpush.msra.mxu0 %v542
    %3658 = vmatpush.msra.mxu0 %v534
    %3659 = vmatpush.msra.mxu0 %v526
    %3660 = vmatpush.msra.mxu0 %v518
    %3661 = vmatpush.msra.mxu0 %v510
    %3662 = vmatpush.msra.mxu0 %v502
    %3663 = vmatpush.msra.mxu0 %v494
    %3664 = vmatpush.msra.mxu0 %v486
    %3665 = vmatpush.msra.mxu0 %v478
    %3666 = vmatpush.msra.mxu0 %v470
    %3667 = vmatpush.msra.mxu0 %v462
    %3668 = vmatpush.msra.mxu0 %v454
    %3669 = vmatpush.msra.mxu0 %v446
    %3670 = vmatpush.msra.mxu0 %v438
    %3671 = vmatpush.msra.mxu0 %v430
    %3672 = vmatmul.f32.gmra.mxu0 %v3652
    %v3673 = vpop.f32.mrf.mxu0
    %v3674 = vadd.f32 0.0, %v3673
    %3675 = vdwg.mxu0
    %3676 = vmatpush.msra.mxu0 %v678
    %3677 = vmatpush.msra.mxu0 %v670
    %3678 = vmatpush.msra.mxu0 %v662
    %3679 = vmatpush.msra.mxu0 %v654
    %3680 = vmatpush.msra.mxu0 %v646
    %3681 = vmatpush.msra.mxu0 %v638
    %3682 = vmatpush.msra.mxu0 %v630
    %3683 = vmatpush.msra.mxu0 %v622
    %3684 = vmatpush.msra.mxu0 %v614
    %3685 = vmatpush.msra.mxu0 %v606
    %3686 = vmatpush.msra.mxu0 %v598
    %3687 = vmatpush.msra.mxu0 %v590
    %3688 = vmatpush.msra.mxu0 %v582
    %3689 = vmatpush.msra.mxu0 %v574
    %3690 = vmatpush.msra.mxu0 %v566
    %3691 = vmatpush.msra.mxu0 %v558
    %3692 = vmatmul.f32.gmra.mxu0 %v3653
    %v3693 = vpop.f32.mrf.mxu0
    %v3694 = vadd.f32 %v3674, %v3693
    %3695 = vdwg.mxu0
    %3696 = vmatpush.msra.mxu0 %v551
    %3697 = vmatpush.msra.mxu0 %v543
    %3698 = vmatpush.msra.mxu0 %v535
    %3699 = vmatpush.msra.mxu0 %v527
    %3700 = vmatpush.msra.mxu0 %v519
    %3701 = vmatpush.msra.mxu0 %v511
    %3702 = vmatpush.msra.mxu0 %v503
    %3703 = vmatpush.msra.mxu0 %v495
    %3704 = vmatpush.msra.mxu0 %v487
    %3705 = vmatpush.msra.mxu0 %v479
    %3706 = vmatpush.msra.mxu0 %v471
    %3707 = vmatpush.msra.mxu0 %v463
    %3708 = vmatpush.msra.mxu0 %v455
    %3709 = vmatpush.msra.mxu0 %v447
    %3710 = vmatpush.msra.mxu0 %v439
    %3711 = vmatpush.msra.mxu0 %v431
    %3712 = vmatmul.f32.gmra.mxu0 %v3652
    %v3713 = vpop.f32.mrf.mxu0
    %v3714 = vadd.f32 0.0, %v3713
    %3715 = vdwg.mxu0
    %3716 = vmatpush.msra.mxu0 %v679
    %3717 = vmatpush.msra.mxu0 %v671
    %3718 = vmatpush.msra.mxu0 %v663
    %3719 = vmatpush.msra.mxu0 %v655
    %3720 = vmatpush.msra.mxu0 %v647
    %3721 = vmatpush.msra.mxu0 %v639
    %3722 = vmatpush.msra.mxu0 %v631
    %3723 = vmatpush.msra.mxu0 %v623
    %3724 = vmatpush.msra.mxu0 %v615
    %3725 = vmatpush.msra.mxu0 %v607
    %3726 = vmatpush.msra.mxu0 %v599
    %3727 = vmatpush.msra.mxu0 %v591
    %3728 = vmatpush.msra.mxu0 %v583
    %3729 = vmatpush.msra.mxu0 %v575
    %3730 = vmatpush.msra.mxu0 %v567
    %3731 = vmatpush.msra.mxu0 %v559
    %3732 = vmatmul.f32.gmra.mxu0 %v3653
    %v3733 = vpop.f32.mrf.mxu0
    %v3734 = vadd.f32 %v3714, %v3733
    %3735 = vdwg.mxu0
    %3736 = vmatpush.msra.mxu0 %v552
    %3737 = vmatpush.msra.mxu0 %v544
    %3738 = vmatpush.msra.mxu0 %v536
    %3739 = vmatpush.msra.mxu0 %v528
    %3740 = vmatpush.msra.mxu0 %v520
    %3741 = vmatpush.msra.mxu0 %v512
    %3742 = vmatpush.msra.mxu0 %v504
    %3743 = vmatpush.msra.mxu0 %v496
    %3744 = vmatpush.msra.mxu0 %v488
    %3745 = vmatpush.msra.mxu0 %v480
    %3746 = vmatpush.msra.mxu0 %v472
    %3747 = vmatpush.msra.mxu0 %v464
    %3748 = vmatpush.msra.mxu0 %v456
    %3749 = vmatpush.msra.mxu0 %v448
    %3750 = vmatpush.msra.mxu0 %v440
    %3751 = vmatpush.msra.mxu0 %v432
    %3752 = vmatmul.f32.gmra.mxu0 %v3652
    %v3753 = vpop.f32.mrf.mxu0
    %v3754 = vadd.f32 0.0, %v3753
    %3755 = vdwg.mxu0
    %3756 = vmatpush.msra.mxu0 %v680
    %3757 = vmatpush.msra.mxu0 %v672
    %3758 = vmatpush.msra.mxu0 %v664
    %3759 = vmatpush.msra.mxu0 %v656
    %3760 = vmatpush.msra.mxu0 %v648
    %3761 = vmatpush.msra.mxu0 %v640
    %3762 = vmatpush.msra.mxu0 %v632
    %3763 = vmatpush.msra.mxu0 %v624
    %3764 = vmatpush.msra.mxu0 %v616
    %3765 = vmatpush.msra.mxu0 %v608
    %3766 = vmatpush.msra.mxu0 %v600
    %3767 = vmatpush.msra.mxu0 %v592
    %3768 = vmatpush.msra.mxu0 %v584
    %3769 = vmatpush.msra.mxu0 %v576
    %3770 = vmatpush.msra.mxu0 %v568
    %3771 = vmatpush.msra.mxu0 %v560
    %3772 = vmatmul.f32.gmra.mxu0 %v3653
    %v3773 = vpop.f32.mrf.mxu0
    %v3774 = vadd.f32 %v3754, %v3773
    %3775 = vdwg.mxu0
    %3776 = vmatpush.msra.mxu0 %v553
    %3777 = vmatpush.msra.mxu0 %v545
    %3778 = vmatpush.msra.mxu0 %v537
    %3779 = vmatpush.msra.mxu0 %v529
    %3780 = vmatpush.msra.mxu0 %v521
    %3781 = vmatpush.msra.mxu0 %v513
    %3782 = vmatpush.msra.mxu0 %v505
    %3783 = vmatpush.msra.mxu0 %v497
    %3784 = vmatpush.msra.mxu0 %v489
    %3785 = vmatpush.msra.mxu0 %v481
    %3786 = vmatpush.msra.mxu0 %v473
    %3787 = vmatpush.msra.mxu0 %v465
    %3788 = vmatpush.msra.mxu0 %v457
    %3789 = vmatpush.msra.mxu0 %v449
    %3790 = vmatpush.msra.mxu0 %v441
    %3791 = vmatpush.msra.mxu0 %v433
    %3792 = vmatmul.f32.gmra.mxu0 %v3652
    %v3793 = vpop.f32.mrf.mxu0
    %v3794 = vadd.f32 0.0, %v3793
    %3795 = vdwg.mxu0
    %3796 = vmatpush.msra.mxu0 %v681
    %3797 = vmatpush.msra.mxu0 %v673
    %3798 = vmatpush.msra.mxu0 %v665
    %3799 = vmatpush.msra.mxu0 %v657
    %3800 = vmatpush.msra.mxu0 %v649
    %3801 = vmatpush.msra.mxu0 %v641
    %3802 = vmatpush.msra.mxu0 %v633
    %3803 = vmatpush.msra.mxu0 %v625
    %3804 = vmatpush.msra.mxu0 %v617
    %3805 = vmatpush.msra.mxu0 %v609
    %3806 = vmatpush.msra.mxu0 %v601
    %3807 = vmatpush.msra.mxu0 %v593
    %3808 = vmatpush.msra.mxu0 %v585
    %3809 = vmatpush.msra.mxu0 %v577
    %3810 = vmatpush.msra.mxu0 %v569
    %3811 = vmatpush.msra.mxu0 %v561
    %3812 = vmatmul.f32.gmra.mxu0 %v3653
    %v3813 = vpop.f32.mrf.mxu0
    %v3814 = vadd.f32 %v3794, %v3813
    %3815 = vdwg.mxu0
    %3816 = vmatpush.msra.mxu0 %v554
    %3817 = vmatpush.msra.mxu0 %v546
    %3818 = vmatpush.msra.mxu0 %v538
    %3819 = vmatpush.msra.mxu0 %v530
    %3820 = vmatpush.msra.mxu0 %v522
    %3821 = vmatpush.msra.mxu0 %v514
    %3822 = vmatpush.msra.mxu0 %v506
    %3823 = vmatpush.msra.mxu0 %v498
    %3824 = vmatpush.msra.mxu0 %v490
    %3825 = vmatpush.msra.mxu0 %v482
    %3826 = vmatpush.msra.mxu0 %v474
    %3827 = vmatpush.msra.mxu0 %v466
    %3828 = vmatpush.msra.mxu0 %v458
    %3829 = vmatpush.msra.mxu0 %v450
    %3830 = vmatpush.msra.mxu0 %v442
    %3831 = vmatpush.msra.mxu0 %v434
    %3832 = vmatmul.f32.gmra.mxu0 %v3652
    %v3833 = vpop.f32.mrf.mxu0
    %v3834 = vadd.f32 0.0, %v3833
    %3835 = vdwg.mxu0
    %3836 = vmatpush.msra.mxu0 %v682
    %3837 = vmatpush.msra.mxu0 %v674
    %3838 = vmatpush.msra.mxu0 %v666
    %3839 = vmatpush.msra.mxu0 %v658
    %3840 = vmatpush.msra.mxu0 %v650
    %3841 = vmatpush.msra.mxu0 %v642
    %3842 = vmatpush.msra.mxu0 %v634
    %3843 = vmatpush.msra.mxu0 %v626
    %3844 = vmatpush.msra.mxu0 %v618
    %3845 = vmatpush.msra.mxu0 %v610
    %3846 = vmatpush.msra.mxu0 %v602
    %3847 = vmatpush.msra.mxu0 %v594
    %3848 = vmatpush.msra.mxu0 %v586
    %3849 = vmatpush.msra.mxu0 %v578
    %3850 = vmatpush.msra.mxu0 %v570
    %3851 = vmatpush.msra.mxu0 %v562
    %3852 = vmatmul.f32.gmra.mxu0 %v3653
    %v3853 = vpop.f32.mrf.mxu0
    %v3854 = vadd.f32 %v3834, %v3853
    %3855 = vdwg.mxu0
    %3856 = vmatpush.msra.mxu0 %v555
    %3857 = vmatpush.msra.mxu0 %v547
    %3858 = vmatpush.msra.mxu0 %v539
    %3859 = vmatpush.msra.mxu0 %v531
    %3860 = vmatpush.msra.mxu0 %v523
    %3861 = vmatpush.msra.mxu0 %v515
    %3862 = vmatpush.msra.mxu0 %v507
    %3863 = vmatpush.msra.mxu0 %v499
    %3864 = vmatpush.msra.mxu0 %v491
    %3865 = vmatpush.msra.mxu0 %v483
    %3866 = vmatpush.msra.mxu0 %v475
    %3867 = vmatpush.msra.mxu0 %v467
    %3868 = vmatpush.msra.mxu0 %v459
    %3869 = vmatpush.msra.mxu0 %v451
    %3870 = vmatpush.msra.mxu0 %v443
    %3871 = vmatpush.msra.mxu0 %v435
    %3872 = vmatmul.f32.gmra.mxu0 %v3652
    %v3873 = vpop.f32.mrf.mxu0
    %v3874 = vadd.f32 0.0, %v3873
    %3875 = vdwg.mxu0
    %3876 = vmatpush.msra.mxu0 %v683
    %3877 = vmatpush.msra.mxu0 %v675
    %3878 = vmatpush.msra.mxu0 %v667
    %3879 = vmatpush.msra.mxu0 %v659
    %3880 = vmatpush.msra.mxu0 %v651
    %3881 = vmatpush.msra.mxu0 %v643
    %3882 = vmatpush.msra.mxu0 %v635
    %3883 = vmatpush.msra.mxu0 %v627
    %3884 = vmatpush.msra.mxu0 %v619
    %3885 = vmatpush.msra.mxu0 %v611
    %3886 = vmatpush.msra.mxu0 %v603
    %3887 = vmatpush.msra.mxu0 %v595
    %3888 = vmatpush.msra.mxu0 %v587
    %3889 = vmatpush.msra.mxu0 %v579
    %3890 = vmatpush.msra.mxu0 %v571
    %3891 = vmatpush.msra.mxu0 %v563
    %3892 = vmatmul.f32.gmra.mxu0 %v3653
    %v3893 = vpop.f32.mrf.mxu0
    %v3894 = vadd.f32 %v3874, %v3893
    %3895 = vdwg.mxu0
    %3896 = vmatpush.msra.mxu0 %v556
    %3897 = vmatpush.msra.mxu0 %v548
    %3898 = vmatpush.msra.mxu0 %v540
    %3899 = vmatpush.msra.mxu0 %v532
    %3900 = vmatpush.msra.mxu0 %v524
    %3901 = vmatpush.msra.mxu0 %v516
    %3902 = vmatpush.msra.mxu0 %v508
    %3903 = vmatpush.msra.mxu0 %v500
    %3904 = vmatpush.msra.mxu0 %v492
    %3905 = vmatpush.msra.mxu0 %v484
    %3906 = vmatpush.msra.mxu0 %v476
    %3907 = vmatpush.msra.mxu0 %v468
    %3908 = vmatpush.msra.mxu0 %v460
    %3909 = vmatpush.msra.mxu0 %v452
    %3910 = vmatpush.msra.mxu0 %v444
    %3911 = vmatpush.msra.mxu0 %v436
    %3912 = vmatmul.f32.gmra.mxu0 %v3652
    %v3913 = vpop.f32.mrf.mxu0
    %v3914 = vadd.f32 0.0, %v3913
    %3915 = vdwg.mxu0
    %3916 = vmatpush.msra.mxu0 %v684
    %3917 = vmatpush.msra.mxu0 %v676
    %3918 = vmatpush.msra.mxu0 %v668
    %3919 = vmatpush.msra.mxu0 %v660
    %3920 = vmatpush.msra.mxu0 %v652
    %3921 = vmatpush.msra.mxu0 %v644
    %3922 = vmatpush.msra.mxu0 %v636
    %3923 = vmatpush.msra.mxu0 %v628
    %3924 = vmatpush.msra.mxu0 %v620
    %3925 = vmatpush.msra.mxu0 %v612
    %3926 = vmatpush.msra.mxu0 %v604
    %3927 = vmatpush.msra.mxu0 %v596
    %3928 = vmatpush.msra.mxu0 %v588
    %3929 = vmatpush.msra.mxu0 %v580
    %3930 = vmatpush.msra.mxu0 %v572
    %3931 = vmatpush.msra.mxu0 %v564
    %3932 = vmatmul.f32.gmra.mxu0 %v3653
    %v3933 = vpop.f32.mrf.mxu0
    %v3934 = vadd.f32 %v3914, %v3933
    %3935 = vdwg.mxu0
    %3936 = vmatpush.msra.mxu0 %v557
    %3937 = vmatpush.msra.mxu0 %v549
    %3938 = vmatpush.msra.mxu0 %v541
    %3939 = vmatpush.msra.mxu0 %v533
    %3940 = vmatpush.msra.mxu0 %v525
    %3941 = vmatpush.msra.mxu0 %v517
    %3942 = vmatpush.msra.mxu0 %v509
    %3943 = vmatpush.msra.mxu0 %v501
    %3944 = vmatpush.msra.mxu0 %v493
    %3945 = vmatpush.msra.mxu0 %v485
    %3946 = vmatpush.msra.mxu0 %v477
    %3947 = vmatpush.msra.mxu0 %v469
    %3948 = vmatpush.msra.mxu0 %v461
    %3949 = vmatpush.msra.mxu0 %v453
    %3950 = vmatpush.msra.mxu0 %v445
    %3951 = vmatpush.msra.mxu0 %v437
    %3952 = vmatmul.f32.gmra.mxu0 %v3652
    %v3953 = vpop.f32.mrf.mxu0
    %v3954 = vadd.f32 0.0, %v3953
    %3955 = vdwg.mxu0
    %3956 = vmatpush.msra.mxu0 %v685
    %3957 = vmatpush.msra.mxu0 %v677
    %3958 = vmatpush.msra.mxu0 %v669
    %3959 = vmatpush.msra.mxu0 %v661
    %3960 = vmatpush.msra.mxu0 %v653
    %3961 = vmatpush.msra.mxu0 %v645
    %3962 = vmatpush.msra.mxu0 %v637
    %3963 = vmatpush.msra.mxu0 %v629
    %3964 = vmatpush.msra.mxu0 %v621
    %3965 = vmatpush.msra.mxu0 %v613
    %3966 = vmatpush.msra.mxu0 %v605
    %3967 = vmatpush.msra.mxu0 %v597
    %3968 = vmatpush.msra.mxu0 %v589
    %3969 = vmatpush.msra.mxu0 %v581
    %3970 = vmatpush.msra.mxu0 %v573
    %3971 = vmatpush.msra.mxu0 %v565
    %3972 = vmatmul.f32.gmra.mxu0 %v3653
    %v3973 = vpop.f32.mrf.mxu0
    %v3974 = vadd.f32 %v3954, %v3973
    %3975 = vdwg.mxu0
    %v3984 = vrot.slane %v3694, 1
    %v3985 = vrot.slane %v3734, 1
    %v3986 = vrot.slane %v3774, 1
    %v3987 = vrot.slane %v3814, 1
    %v3988 = vrot.slane %v3854, 1
    %v3989 = vrot.slane %v3894, 1
    %v3990 = vrot.slane %v3934, 1
    %v3991 = vrot.slane %v3974, 1
    %v4000 = vadd.f32 %v155, %v3984
    %v4001 = vadd.f32 %v175, %v3985
    %v4002 = vadd.f32 %v195, %v3986
    %v4003 = vadd.f32 %v215, %v3987
    %v4004 = vadd.f32 %v235, %v3988
    %v4005 = vadd.f32 %v255, %v3989
    %v4006 = vadd.f32 %v275, %v3990
    %v4007 = vadd.f32 %v295, %v3991
    %v4008 = vxor.u32 %v4000, 2147483648
    %v4009 = vxor.u32 %v4001, 2147483648
    %v4010 = vxor.u32 %v4002, 2147483648
    %v4011 = vxor.u32 %v4003, 2147483648
    %v4012 = vxor.u32 %v4004, 2147483648
    %v4013 = vxor.u32 %v4005, 2147483648
    %v4014 = vmul.f32 %v4008, 1.442695
    %v4015 = vpow.pop %v4014
    %v4016 = vmul.f32 %v4009, 1.442695
    %v4017 = vpow.pop %v4016
    %v4018 = vmul.f32 %v4010, 1.442695
    %v4019 = vpow.pop %v4018
    %v4020 = vmul.f32 %v4011, 1.442695
    %v4021 = vpow.pop %v4020
    %v4022 = vmul.f32 %v4012, 1.442695
    %v4023 = vpow.pop %v4022
    %v4024 = vmul.f32 %v4013, 1.442695
    %v4025 = vpow.pop %v4024
    %v4026 = vadd.f32 %v4015, 1.0
    %v4027 = vadd.f32 %v4017, 1.0
    %v4028 = vadd.f32 %v4019, 1.0
    %v4029 = vadd.f32 %v4021, 1.0
    %v4030 = vadd.f32 %v4023, 1.0
    %v4031 = vadd.f32 %v4025, 1.0
    %v4032 = vrcp.pop %v4026
    %v4033 = vmul.f32 %v4026, %v4032
    %v4034 = vsub.f32 1.0, %v4033
    %v4035 = vmul.f32 %v4032, %v4034
    %v4036 = vadd.f32 %v4032, %v4035
    %vm4037 = vweird.f32 %v4026
    %vm4038 = vweird.f32 %v4032
    %vm4039 = vmor %vm4037, %vm4038
    %v4040 = vsel %vm4039, %v4032, %v4036
    %v4041 = vand.u32 2147483647, %v4026
    %vm4042 = vcmp.eq.f32.partialorder %v4041, 8.507059e+37
    %v4043 = vand.u32 %v4026, 2147483648
    %v4044 = vor.u32 1.1754944e-38, %v4043
    %v4045 = vsel %vm4042, %v4044, %v4040
    %v4046 = vmul.f32 1.0, %v4045
    %v4047 = vrcp.pop %v4027
    %v4048 = vmul.f32 %v4027, %v4047
    %v4049 = vsub.f32 1.0, %v4048
    %v4050 = vmul.f32 %v4047, %v4049
    %v4051 = vadd.f32 %v4047, %v4050
    %vm4052 = vweird.f32 %v4027
    %vm4053 = vweird.f32 %v4047
    %vm4054 = vmor %vm4052, %vm4053
    %v4055 = vsel %vm4054, %v4047, %v4051
    %v4056 = vand.u32 2147483647, %v4027
    %vm4057 = vcmp.eq.f32.partialorder %v4056, 8.507059e+37
    %v4058 = vand.u32 %v4027, 2147483648
    %v4059 = vor.u32 1.1754944e-38, %v4058
    %v4060 = vsel %vm4057, %v4059, %v4055
    %v4061 = vmul.f32 1.0, %v4060
    %v4062 = vrcp.pop %v4028
    %v4063 = vmul.f32 %v4028, %v4062
    %v4064 = vsub.f32 1.0, %v4063
    %v4065 = vmul.f32 %v4062, %v4064
    %v4066 = vadd.f32 %v4062, %v4065
    %vm4067 = vweird.f32 %v4028
    %vm4068 = vweird.f32 %v4062
    %vm4069 = vmor %vm4067, %vm4068
    %v4070 = vsel %vm4069, %v4062, %v4066
    %v4071 = vand.u32 2147483647, %v4028
    %vm4072 = vcmp.eq.f32.partialorder %v4071, 8.507059e+37
    %v4073 = vand.u32 %v4028, 2147483648
    %v4074 = vor.u32 1.1754944e-38, %v4073
    %v4075 = vsel %vm4072, %v4074, %v4070
    %v4076 = vmul.f32 1.0, %v4075
    %v4077 = vrcp.pop %v4029
    %v4078 = vmul.f32 %v4029, %v4077
    %v4079 = vsub.f32 1.0, %v4078
    %v4080 = vmul.f32 %v4077, %v4079
    %v4081 = vadd.f32 %v4077, %v4080
    %vm4082 = vweird.f32 %v4029
    %vm4083 = vweird.f32 %v4077
    %vm4084 = vmor %vm4082, %vm4083
    %v4085 = vsel %vm4084, %v4077, %v4081
    %v4086 = vand.u32 2147483647, %v4029
    %vm4087 = vcmp.eq.f32.partialorder %v4086, 8.507059e+37
    %v4088 = vand.u32 %v4029, 2147483648
    %v4089 = vor.u32 1.1754944e-38, %v4088
    %v4090 = vsel %vm4087, %v4089, %v4085
    %v4091 = vmul.f32 1.0, %v4090
    %v4092 = vrcp.pop %v4030
    %v4093 = vmul.f32 %v4030, %v4092
    %v4094 = vsub.f32 1.0, %v4093
    %v4095 = vmul.f32 %v4092, %v4094
    %v4096 = vadd.f32 %v4092, %v4095
    %vm4097 = vweird.f32 %v4030
    %vm4098 = vweird.f32 %v4092
    %vm4099 = vmor %vm4097, %vm4098
    %v4100 = vsel %vm4099, %v4092, %v4096
    %v4101 = vand.u32 2147483647, %v4030
    %vm4102 = vcmp.eq.f32.partialorder %v4101, 8.507059e+37
    %v4103 = vand.u32 %v4030, 2147483648
    %v4104 = vor.u32 1.1754944e-38, %v4103
    %v4105 = vsel %vm4102, %v4104, %v4100
    %v4106 = vmul.f32 1.0, %v4105
    %v4107 = vrcp.pop %v4031
    %v4108 = vmul.f32 %v4031, %v4107
    %v4109 = vsub.f32 1.0, %v4108
    %v4110 = vmul.f32 %v4107, %v4109
    %v4111 = vadd.f32 %v4107, %v4110
    %vm4112 = vweird.f32 %v4031
    %vm4113 = vweird.f32 %v4107
    %vm4114 = vmor %vm4112, %vm4113
    %v4115 = vsel %vm4114, %v4107, %v4111
    %v4116 = vand.u32 2147483647, %v4031
    %vm4117 = vcmp.eq.f32.partialorder %v4116, 8.507059e+37
    %v4118 = vand.u32 %v4031, 2147483648
    %v4119 = vor.u32 1.1754944e-38, %v4118
    %v4120 = vsel %vm4117, %v4119, %v4115
    %v4121 = vmul.f32 1.0, %v4120
    %v4122 = vtanh.pop %v4006
    %v4123 = vtanh.pop %v4007
    %v4126 = vrot.slane %v3639, 7
    %v4127 = vrot.slane %v3640, 7
    %v4130 = vmul.f32 %v4076, %v4126
    %v4131 = vmul.f32 %v4091, %v4127
    %v4132 = vmul.f32 %v4046, %v4122
    %v4133 = vmul.f32 %v4061, %v4123
    %v4134 = vadd.f32 %v4130, %v4132
    %v4135 = vadd.f32 %v4131, %v4133
    %v4136 = vtanh.pop %v4134
    %v4137 = vtanh.pop %v4135
    %v4138 = vmul.f32 %v4106, %v4136
    %v4139 = vmul.f32 %v4121, %v4137
    %vm4140 = vcmp.eq.s32.totalorder %v298, 7
    %v4141 = vperm.slane %v4138, 7
    %v4142 = vperm.slane %v4139, 7
    %v4143 = vsel %vm4140, %v4141, %v3648
    %v4144 = vsel %vm4140, %v4142, %v3649
    %v4145 = vlaneseq
    %v4146 = vand.u32 %v4145, 127
    %v4147 = vld [vmem:[%s1] sm:$0x3]
    %4148 = vset.pattern.permute.xlu0 0
    %4149 = vperm.xlu0 %4148, %v4147
    %v4150 = vpop.permute.xlu0 %4149
    %vm4151 = vcmp.eq.s32.totalorder %v4146, %v4150
    %v4152 = vsel %vm4151, 1, 0
    %v4153 = vcvt.s32.f32 %v4152
    %v4155 = vsel %vm133, %v4153, 0
    %4157 = vmatpush.msra.mxu0 0.0
    %4158 = vmatpush.msra.mxu0 0.0
    %4159 = vmatpush.msra.mxu0 0.0
    %4160 = vmatpush.msra.mxu0 0.0
    %4161 = vmatpush.msra.mxu0 0.0
    %4162 = vmatpush.msra.mxu0 0.0
    %4163 = vmatpush.msra.mxu0 0.0
    %4164 = vmatpush.msra.mxu0 0.0
    %4165 = vmatpush.msra.mxu0 0.0
    %4166 = vmatpush.msra.mxu0 0.0
    %4167 = vmatpush.msra.mxu0 0.0
    %4168 = vmatpush.msra.mxu0 0.0
    %4169 = vmatpush.msra.mxu0 0.0
    %4170 = vmatpush.msra.mxu0 0.0
    %4171 = vmatpush.msra.mxu0 0.0
    %4172 = vmatpush.msra.mxu0 %v4143
    %4173 = vmatmul.f32.gmra.mxu0 %v4155
    %v4174 = vpop.f32.mrf.mxu0
    %v4175 = vadd.f32 0.0, %v4174
    %4176 = vdwg.mxu0
    %4177 = vmatpush.msra.mxu0 0.0
    %4178 = vmatpush.msra.mxu0 0.0
    %4179 = vmatpush.msra.mxu0 0.0
    %4180 = vmatpush.msra.mxu0 0.0
    %4181 = vmatpush.msra.mxu0 0.0
    %4182 = vmatpush.msra.mxu0 0.0
    %4183 = vmatpush.msra.mxu0 0.0
    %4184 = vmatpush.msra.mxu0 0.0
    %4185 = vmatpush.msra.mxu0 0.0
    %4186 = vmatpush.msra.mxu0 0.0
    %4187 = vmatpush.msra.mxu0 0.0
    %4188 = vmatpush.msra.mxu0 0.0
    %4189 = vmatpush.msra.mxu0 0.0
    %4190 = vmatpush.msra.mxu0 0.0
    %4191 = vmatpush.msra.mxu0 0.0
    %4192 = vmatpush.msra.mxu0 %v4144
    %4193 = vmatmul.f32.gmra.mxu0 %v4155
    %v4194 = vpop.f32.mrf.mxu0
    %v4195 = vadd.f32 0.0, %v4194
    %4196 = vdwg.mxu0
    %v4197 = vld [vmem:[%s2] sm:$0x3]
    %4198 = vset.pattern.permute.xlu0 0
    %4199 = vperm.xlu0 %4198, %v4197
    %v4200 = vpop.permute.xlu0 %4199
    %vm4201 = vcmp.eq.s32.totalorder %v4146, %v4200
    %v4202 = vsel %vm4201, 1, 0
    %v4203 = vcvt.s32.f32 %v4202
    %v4204 = vld [vmem:[%s8] sm:$0xff]
    %v4205 = vld [vmem:[%s8 + $0x8] sm:$0xff]
    %v4207 = vsel %vm133, %v4203, 0
    %4209 = vmatpush.msra.mxu0 0.0
    %4210 = vmatpush.msra.mxu0 0.0
    %4211 = vmatpush.msra.mxu0 0.0
    %4212 = vmatpush.msra.mxu0 0.0
    %4213 = vmatpush.msra.mxu0 0.0
    %4214 = vmatpush.msra.mxu0 0.0
    %4215 = vmatpush.msra.mxu0 0.0
    %4216 = vmatpush.msra.mxu0 0.0
    %4217 = vmatpush.msra.mxu0 0.0
    %4218 = vmatpush.msra.mxu0 0.0
    %4219 = vmatpush.msra.mxu0 0.0
    %4220 = vmatpush.msra.mxu0 0.0
    %4221 = vmatpush.msra.mxu0 0.0
    %4222 = vmatpush.msra.mxu0 0.0
    %4223 = vmatpush.msra.mxu0 0.0
    %4224 = vmatpush.msra.mxu0 %v4204
    %4225 = vmatmul.f32.gmra.mxu0 %v4207
    %v4226 = vpop.f32.mrf.mxu0
    %v4227 = vadd.f32 0.0, %v4226
    %4228 = vdwg.mxu0
    %4229 = vmatpush.msra.mxu0 0.0
    %4230 = vmatpush.msra.mxu0 0.0
    %4231 = vmatpush.msra.mxu0 0.0
    %4232 = vmatpush.msra.mxu0 0.0
    %4233 = vmatpush.msra.mxu0 0.0
    %4234 = vmatpush.msra.mxu0 0.0
    %4235 = vmatpush.msra.mxu0 0.0
    %4236 = vmatpush.msra.mxu0 0.0
    %4237 = vmatpush.msra.mxu0 0.0
    %4238 = vmatpush.msra.mxu0 0.0
    %4239 = vmatpush.msra.mxu0 0.0
    %4240 = vmatpush.msra.mxu0 0.0
    %4241 = vmatpush.msra.mxu0 0.0
    %4242 = vmatpush.msra.mxu0 0.0
    %4243 = vmatpush.msra.mxu0 0.0
    %4244 = vmatpush.msra.mxu0 %v4205
    %4245 = vmatmul.f32.gmra.mxu0 %v4207
    %v4246 = vpop.f32.mrf.mxu0
    %v4247 = vadd.f32 0.0, %v4246
    %4248 = vdwg.mxu0
    %v4249 = vld [vmem:[#allocation7] sm:$0xff]
    %v4250 = vld [vmem:[#allocation7 + $0x8] sm:$0xff]
    %v4251 = vld [vmem:[#allocation7 + $0x10] sm:$0xff]
    %v4252 = vld [vmem:[#allocation7 + $0x18] sm:$0xff]
    %v4253 = vld [vmem:[#allocation7 + $0x20] sm:$0xff]
    %v4254 = vld [vmem:[#allocation7 + $0x28] sm:$0xff]
    %v4255 = vld [vmem:[#allocation7 + $0x30] sm:$0xff]
    %v4256 = vld [vmem:[#allocation7 + $0x38] sm:$0xff]
    %v4257 = vld [vmem:[#allocation7 + $0x40] sm:$0xff]
    %v4258 = vld [vmem:[#allocation7 + $0x48] sm:$0xff]
    %v4259 = vld [vmem:[#allocation7 + $0x50] sm:$0xff]
    %v4260 = vld [vmem:[#allocation7 + $0x58] sm:$0xff]
    %v4261 = vld [vmem:[#allocation7 + $0x60] sm:$0xff]
    %v4262 = vld [vmem:[#allocation7 + $0x68] sm:$0xff]
    %v4263 = vld [vmem:[#allocation7 + $0x70] sm:$0xff]
    %v4264 = vld [vmem:[#allocation7 + $0x78] sm:$0xff]
    %v4265 = vld [vmem:[#allocation7 + $0x80] sm:$0xff]
    %v4266 = vld [vmem:[#allocation7 + $0x88] sm:$0xff]
    %v4267 = vld [vmem:[#allocation7 + $0x90] sm:$0xff]
    %v4268 = vld [vmem:[#allocation7 + $0x98] sm:$0xff]
    %v4269 = vld [vmem:[#allocation7 + $0xa0] sm:$0xff]
    %v4270 = vld [vmem:[#allocation7 + $0xa8] sm:$0xff]
    %v4271 = vld [vmem:[#allocation7 + $0xb0] sm:$0xff]
    %v4272 = vld [vmem:[#allocation7 + $0xb8] sm:$0xff]
    %v4273 = vld [vmem:[#allocation7 + $0xc0] sm:$0xff]
    %v4274 = vld [vmem:[#allocation7 + $0xc8] sm:$0xff]
    %v4275 = vld [vmem:[#allocation7 + $0xd0] sm:$0xff]
    %v4276 = vld [vmem:[#allocation7 + $0xd8] sm:$0xff]
    %v4277 = vld [vmem:[#allocation7 + $0xe0] sm:$0xff]
    %v4278 = vld [vmem:[#allocation7 + $0xe8] sm:$0xff]
    %v4279 = vld [vmem:[#allocation7 + $0xf0] sm:$0xff]
    %v4280 = vld [vmem:[#allocation7 + $0xf8] sm:$0xff]
    %v4281 = vld [vmem:[#allocation7 + $0x100] sm:$0xff]
    %v4282 = vld [vmem:[#allocation7 + $0x108] sm:$0xff]
    %v4283 = vld [vmem:[#allocation7 + $0x110] sm:$0xff]
    %v4284 = vld [vmem:[#allocation7 + $0x118] sm:$0xff]
    %v4285 = vld [vmem:[#allocation7 + $0x120] sm:$0xff]
    %v4286 = vld [vmem:[#allocation7 + $0x128] sm:$0xff]
    %v4287 = vld [vmem:[#allocation7 + $0x130] sm:$0xff]
    %v4288 = vld [vmem:[#allocation7 + $0x138] sm:$0xff]
    %v4289 = vld [vmem:[#allocation7 + $0x140] sm:$0xff]
    %v4290 = vld [vmem:[#allocation7 + $0x148] sm:$0xff]
    %v4291 = vld [vmem:[#allocation7 + $0x150] sm:$0xff]
    %v4292 = vld [vmem:[#allocation7 + $0x158] sm:$0xff]
    %v4293 = vld [vmem:[#allocation7 + $0x160] sm:$0xff]
    %v4294 = vld [vmem:[#allocation7 + $0x168] sm:$0xff]
    %v4295 = vld [vmem:[#allocation7 + $0x170] sm:$0xff]
    %v4296 = vld [vmem:[#allocation7 + $0x178] sm:$0xff]
    %v4297 = vld [vmem:[#allocation7 + $0x180] sm:$0xff]
    %v4298 = vld [vmem:[#allocation7 + $0x188] sm:$0xff]
    %v4299 = vld [vmem:[#allocation7 + $0x190] sm:$0xff]
    %v4300 = vld [vmem:[#allocation7 + $0x198] sm:$0xff]
    %v4301 = vld [vmem:[#allocation7 + $0x1a0] sm:$0xff]
    %v4302 = vld [vmem:[#allocation7 + $0x1a8] sm:$0xff]
    %v4303 = vld [vmem:[#allocation7 + $0x1b0] sm:$0xff]
    %v4304 = vld [vmem:[#allocation7 + $0x1b8] sm:$0xff]
    %v4305 = vld [vmem:[#allocation7 + $0x1c0] sm:$0xff]
    %v4306 = vld [vmem:[#allocation7 + $0x1c8] sm:$0xff]
    %v4307 = vld [vmem:[#allocation7 + $0x1d0] sm:$0xff]
    %v4308 = vld [vmem:[#allocation7 + $0x1d8] sm:$0xff]
    %v4309 = vld [vmem:[#allocation7 + $0x1e0] sm:$0xff]
    %v4310 = vld [vmem:[#allocation7 + $0x1e8] sm:$0xff]
    %v4311 = vld [vmem:[#allocation7 + $0x1f0] sm:$0xff]
    %v4312 = vld [vmem:[#allocation7 + $0x1f8] sm:$0xff]
    %4313 = vmatpush.msra.mxu0 %v4279
    %4314 = vmatpush.msra.mxu0 %v4277
    %4315 = vmatpush.msra.mxu0 %v4275
    %4316 = vmatpush.msra.mxu0 %v4273
    %4317 = vmatpush.msra.mxu0 %v4271
    %4318 = vmatpush.msra.mxu0 %v4269
    %4319 = vmatpush.msra.mxu0 %v4267
    %4320 = vmatpush.msra.mxu0 %v4265
    %4321 = vmatpush.msra.mxu0 %v4263
    %4322 = vmatpush.msra.mxu0 %v4261
    %4323 = vmatpush.msra.mxu0 %v4259
    %4324 = vmatpush.msra.mxu0 %v4257
    %4325 = vmatpush.msra.mxu0 %v4255
    %4326 = vmatpush.msra.mxu0 %v4253
    %4327 = vmatpush.msra.mxu0 %v4251
    %4328 = vmatpush.msra.mxu0 %v4249
    %4329 = vmatmul.f32.gmra.mxu0 %v4175
    %v4330 = vpop.f32.mrf.mxu0
    %v4331 = vadd.f32 %v4227, %v4330
    %4332 = vdwg.mxu0
    %4333 = vmatpush.msra.mxu0 %v4311
    %4334 = vmatpush.msra.mxu0 %v4309
    %4335 = vmatpush.msra.mxu0 %v4307
    %4336 = vmatpush.msra.mxu0 %v4305
    %4337 = vmatpush.msra.mxu0 %v4303
    %4338 = vmatpush.msra.mxu0 %v4301
    %4339 = vmatpush.msra.mxu0 %v4299
    %4340 = vmatpush.msra.mxu0 %v4297
    %4341 = vmatpush.msra.mxu0 %v4295
    %4342 = vmatpush.msra.mxu0 %v4293
    %4343 = vmatpush.msra.mxu0 %v4291
    %4344 = vmatpush.msra.mxu0 %v4289
    %4345 = vmatpush.msra.mxu0 %v4287
    %4346 = vmatpush.msra.mxu0 %v4285
    %4347 = vmatpush.msra.mxu0 %v4283
    %4348 = vmatpush.msra.mxu0 %v4281
    %4349 = vmatmul.f32.gmra.mxu0 %v4195
    %v4350 = vpop.f32.mrf.mxu0
    %v4351 = vadd.f32 %v4331, %v4350
    %4352 = vdwg.mxu0
    %4353 = vmatpush.msra.mxu0 %v4280
    %4354 = vmatpush.msra.mxu0 %v4278
    %4355 = vmatpush.msra.mxu0 %v4276
    %4356 = vmatpush.msra.mxu0 %v4274
    %4357 = vmatpush.msra.mxu0 %v4272
    %4358 = vmatpush.msra.mxu0 %v4270
    %4359 = vmatpush.msra.mxu0 %v4268
    %4360 = vmatpush.msra.mxu0 %v4266
    %4361 = vmatpush.msra.mxu0 %v4264
    %4362 = vmatpush.msra.mxu0 %v4262
    %4363 = vmatpush.msra.mxu0 %v4260
    %4364 = vmatpush.msra.mxu0 %v4258
    %4365 = vmatpush.msra.mxu0 %v4256
    %4366 = vmatpush.msra.mxu0 %v4254
    %4367 = vmatpush.msra.mxu0 %v4252
    %4368 = vmatpush.msra.mxu0 %v4250
    %4369 = vmatmul.f32.gmra.mxu0 %v4175
    %v4370 = vpop.f32.mrf.mxu0
    %v4371 = vadd.f32 %v4247, %v4370
    %4372 = vdwg.mxu0
    %4373 = vmatpush.msra.mxu0 %v4312
    %4374 = vmatpush.msra.mxu0 %v4310
    %4375 = vmatpush.msra.mxu0 %v4308
    %4376 = vmatpush.msra.mxu0 %v4306
    %4377 = vmatpush.msra.mxu0 %v4304
    %4378 = vmatpush.msra.mxu0 %v4302
    %4379 = vmatpush.msra.mxu0 %v4300
    %4380 = vmatpush.msra.mxu0 %v4298
    %4381 = vmatpush.msra.mxu0 %v4296
    %4382 = vmatpush.msra.mxu0 %v4294
    %4383 = vmatpush.msra.mxu0 %v4292
    %4384 = vmatpush.msra.mxu0 %v4290
    %4385 = vmatpush.msra.mxu0 %v4288
    %4386 = vmatpush.msra.mxu0 %v4286
    %4387 = vmatpush.msra.mxu0 %v4284
    %4388 = vmatpush.msra.mxu0 %v4282
    %4389 = vmatmul.f32.gmra.mxu0 %v4195
    %v4390 = vpop.f32.mrf.mxu0
    %v4391 = vadd.f32 %v4371, %v4390
    %4392 = vdwg.mxu0
    %v4393 = vld [vmem:[%s9] sm:$0x3]
    %v4395 = vperm.slane %v4393, 0
    %v4396 = vperm.slane %v4393, 1
    %v4399 = vadd.f32 %v4351, %v4395
    %v4400 = vadd.f32 %v4391, %v4396
    %v4401 = vmax.f32 %v4399, 0.0
    %v4402 = vmax.f32 %v4400, 0.0
    %v4403 = vld [vmem:[#allocation8] sm:$0xff]
    %v4404 = vld [vmem:[#allocation8 + $0x8] sm:$0xff]
    %v4405 = vld [vmem:[#allocation8 + $0x10] sm:$0xff]
    %v4406 = vld [vmem:[#allocation8 + $0x18] sm:$0xff]
    %v4407 = vld [vmem:[#allocation8 + $0x20] sm:$0xff]
    %v4408 = vld [vmem:[#allocation8 + $0x28] sm:$0xff]
    %v4409 = vld [vmem:[#allocation8 + $0x30] sm:$0xff]
    %v4410 = vld [vmem:[#allocation8 + $0x38] sm:$0xff]
    %v4411 = vld [vmem:[#allocation8 + $0x40] sm:$0xff]
    %v4412 = vld [vmem:[#allocation8 + $0x48] sm:$0xff]
    %v4413 = vld [vmem:[#allocation8 + $0x50] sm:$0xff]
    %v4414 = vld [vmem:[#allocation8 + $0x58] sm:$0xff]
    %v4415 = vld [vmem:[#allocation8 + $0x60] sm:$0xff]
    %v4416 = vld [vmem:[#allocation8 + $0x68] sm:$0xff]
    %v4417 = vld [vmem:[#allocation8 + $0x70] sm:$0xff]
    %v4418 = vld [vmem:[#allocation8 + $0x78] sm:$0xff]
    %v4419 = vld [vmem:[#allocation8 + $0x80] sm:$0xff]
    %v4420 = vld [vmem:[#allocation8 + $0x88] sm:$0xff]
    %v4421 = vld [vmem:[#allocation8 + $0x90] sm:$0xff]
    %v4422 = vld [vmem:[#allocation8 + $0x98] sm:$0xff]
    %v4423 = vld [vmem:[#allocation8 + $0xa0] sm:$0xff]
    %v4424 = vld [vmem:[#allocation8 + $0xa8] sm:$0xff]
    %v4425 = vld [vmem:[#allocation8 + $0xb0] sm:$0xff]
    %v4426 = vld [vmem:[#allocation8 + $0xb8] sm:$0xff]
    %v4427 = vld [vmem:[#allocation8 + $0xc0] sm:$0xff]
    %v4428 = vld [vmem:[#allocation8 + $0xc8] sm:$0xff]
    %v4429 = vld [vmem:[#allocation8 + $0xd0] sm:$0xff]
    %v4430 = vld [vmem:[#allocation8 + $0xd8] sm:$0xff]
    %v4431 = vld [vmem:[#allocation8 + $0xe0] sm:$0xff]
    %v4432 = vld [vmem:[#allocation8 + $0xe8] sm:$0xff]
    %v4433 = vld [vmem:[#allocation8 + $0xf0] sm:$0xff]
    %v4434 = vld [vmem:[#allocation8 + $0xf8] sm:$0xff]
    %v4435 = vld [vmem:[#allocation8 + $0x100] sm:$0xff]
    %v4436 = vld [vmem:[#allocation8 + $0x108] sm:$0xff]
    %v4437 = vld [vmem:[#allocation8 + $0x110] sm:$0xff]
    %v4438 = vld [vmem:[#allocation8 + $0x118] sm:$0xff]
    %v4439 = vld [vmem:[#allocation8 + $0x120] sm:$0xff]
    %v4440 = vld [vmem:[#allocation8 + $0x128] sm:$0xff]
    %v4441 = vld [vmem:[#allocation8 + $0x130] sm:$0xff]
    %v4442 = vld [vmem:[#allocation8 + $0x138] sm:$0xff]
    %v4443 = vld [vmem:[#allocation8 + $0x140] sm:$0xff]
    %v4444 = vld [vmem:[#allocation8 + $0x148] sm:$0xff]
    %v4445 = vld [vmem:[#allocation8 + $0x150] sm:$0xff]
    %v4446 = vld [vmem:[#allocation8 + $0x158] sm:$0xff]
    %v4447 = vld [vmem:[#allocation8 + $0x160] sm:$0xff]
    %v4448 = vld [vmem:[#allocation8 + $0x168] sm:$0xff]
    %v4449 = vld [vmem:[#allocation8 + $0x170] sm:$0xff]
    %v4450 = vld [vmem:[#allocation8 + $0x178] sm:$0xff]
    %v4451 = vld [vmem:[#allocation8 + $0x180] sm:$0xff]
    %v4452 = vld [vmem:[#allocation8 + $0x188] sm:$0xff]
    %v4453 = vld [vmem:[#allocation8 + $0x190] sm:$0xff]
    %v4454 = vld [vmem:[#allocation8 + $0x198] sm:$0xff]
    %v4455 = vld [vmem:[#allocation8 + $0x1a0] sm:$0xff]
    %v4456 = vld [vmem:[#allocation8 + $0x1a8] sm:$0xff]
    %v4457 = vld [vmem:[#allocation8 + $0x1b0] sm:$0xff]
    %v4458 = vld [vmem:[#allocation8 + $0x1b8] sm:$0xff]
    %v4459 = vld [vmem:[#allocation8 + $0x1c0] sm:$0xff]
    %v4460 = vld [vmem:[#allocation8 + $0x1c8] sm:$0xff]
    %v4461 = vld [vmem:[#allocation8 + $0x1d0] sm:$0xff]
    %v4462 = vld [vmem:[#allocation8 + $0x1d8] sm:$0xff]
    %v4463 = vld [vmem:[#allocation8 + $0x1e0] sm:$0xff]
    %v4464 = vld [vmem:[#allocation8 + $0x1e8] sm:$0xff]
    %v4465 = vld [vmem:[#allocation8 + $0x1f0] sm:$0xff]
    %v4466 = vld [vmem:[#allocation8 + $0x1f8] sm:$0xff]
    %v4467 = vld [vmem:[%s11] sm:$0x3]
    %v4469 = vperm.slane %v4467, 0
    %v4470 = vperm.slane %v4467, 1
    %4473 = vmatpush.msra.mxu0 %v4433
    %4474 = vmatpush.msra.mxu0 %v4431
    %4475 = vmatpush.msra.mxu0 %v4429
    %4476 = vmatpush.msra.mxu0 %v4427
    %4477 = vmatpush.msra.mxu0 %v4425
    %4478 = vmatpush.msra.mxu0 %v4423
    %4479 = vmatpush.msra.mxu0 %v4421
    %4480 = vmatpush.msra.mxu0 %v4419
    %4481 = vmatpush.msra.mxu0 %v4417
    %4482 = vmatpush.msra.mxu0 %v4415
    %4483 = vmatpush.msra.mxu0 %v4413
    %4484 = vmatpush.msra.mxu0 %v4411
    %4485 = vmatpush.msra.mxu0 %v4409
    %4486 = vmatpush.msra.mxu0 %v4407
    %4487 = vmatpush.msra.mxu0 %v4405
    %4488 = vmatpush.msra.mxu0 %v4403
    %4489 = vmatmul.f32.gmra.mxu0 %v4401
    %v4490 = vpop.f32.mrf.mxu0
    %v4491 = vadd.f32 %v4469, %v4490
    %4492 = vdwg.mxu0
    %4493 = vmatpush.msra.mxu0 %v4465
    %4494 = vmatpush.msra.mxu0 %v4463
    %4495 = vmatpush.msra.mxu0 %v4461
    %4496 = vmatpush.msra.mxu0 %v4459
    %4497 = vmatpush.msra.mxu0 %v4457
    %4498 = vmatpush.msra.mxu0 %v4455
    %4499 = vmatpush.msra.mxu0 %v4453
    %4500 = vmatpush.msra.mxu0 %v4451
    %4501 = vmatpush.msra.mxu0 %v4449
    %4502 = vmatpush.msra.mxu0 %v4447
    %4503 = vmatpush.msra.mxu0 %v4445
    %4504 = vmatpush.msra.mxu0 %v4443
    %4505 = vmatpush.msra.mxu0 %v4441
    %4506 = vmatpush.msra.mxu0 %v4439
    %4507 = vmatpush.msra.mxu0 %v4437
    %4508 = vmatpush.msra.mxu0 %v4435
    %4509 = vmatmul.f32.gmra.mxu0 %v4402
    %v4510 = vpop.f32.mrf.mxu0
    %v4511 = vadd.f32 %v4491, %v4510
    %4512 = vdwg.mxu0
    %4513 = vmatpush.msra.mxu0 %v4434
    %4514 = vmatpush.msra.mxu0 %v4432
    %4515 = vmatpush.msra.mxu0 %v4430
    %4516 = vmatpush.msra.mxu0 %v4428
    %4517 = vmatpush.msra.mxu0 %v4426
    %4518 = vmatpush.msra.mxu0 %v4424
    %4519 = vmatpush.msra.mxu0 %v4422
    %4520 = vmatpush.msra.mxu0 %v4420
    %4521 = vmatpush.msra.mxu0 %v4418
    %4522 = vmatpush.msra.mxu0 %v4416
    %4523 = vmatpush.msra.mxu0 %v4414
    %4524 = vmatpush.msra.mxu0 %v4412
    %4525 = vmatpush.msra.mxu0 %v4410
    %4526 = vmatpush.msra.mxu0 %v4408
    %4527 = vmatpush.msra.mxu0 %v4406
    %4528 = vmatpush.msra.mxu0 %v4404
    %4529 = vmatmul.f32.gmra.mxu0 %v4401
    %v4530 = vpop.f32.mrf.mxu0
    %v4531 = vadd.f32 %v4470, %v4530
    %4532 = vdwg.mxu0
    %4533 = vmatpush.msra.mxu0 %v4466
    %4534 = vmatpush.msra.mxu0 %v4464
    %4535 = vmatpush.msra.mxu0 %v4462
    %4536 = vmatpush.msra.mxu0 %v4460
    %4537 = vmatpush.msra.mxu0 %v4458
    %4538 = vmatpush.msra.mxu0 %v4456
    %4539 = vmatpush.msra.mxu0 %v4454
    %4540 = vmatpush.msra.mxu0 %v4452
    %4541 = vmatpush.msra.mxu0 %v4450
    %4542 = vmatpush.msra.mxu0 %v4448
    %4543 = vmatpush.msra.mxu0 %v4446
    %4544 = vmatpush.msra.mxu0 %v4444
    %4545 = vmatpush.msra.mxu0 %v4442
    %4546 = vmatpush.msra.mxu0 %v4440
    %4547 = vmatpush.msra.mxu0 %v4438
    %4548 = vmatpush.msra.mxu0 %v4436
    %4549 = vmatmul.f32.gmra.mxu0 %v4402
    %v4550 = vpop.f32.mrf.mxu0
    %v4551 = vadd.f32 %v4531, %v4550
    %4552 = vdwg.mxu0
    %v4553 = vmax.f32 %v4511, 0.0
    %v4554 = vmax.f32 %v4551, 0.0
    %v4555 = vld [vmem:[%s12] sm:$0x3]
    %v4557 = vperm.slane %v4555, 0
    %v4558 = vperm.slane %v4555, 1
    %v4561 = vmul.f32 %v4553, %v4557
    %v4562 = vmul.f32 %v4554, %v4558
    %vm4563 = vcmask 1041408
    %v4564 = vsel %vm4563, %v4561, 0.0
    %v4565 = vsel %vm4563, %v4562, 0.0
    %v4566 = vadd.f32 %v4564, %v4565
    %4567 = vadd.xlane.f32.xlu0 %v4566
    %v4568 = vpop.xlane.xlu0 %4567
    %s4569 = sld [smem:[#allocation2]]
    %v4570 = vstv %s4569
    %v4571 = vadd.f32 %v4568, %v4570
    %v4572 = vxor.u32 %v4571, 2147483648
    %v4573 = vmul.f32 %v4572, 1.442695
    %v4574 = vpow.pop %v4573
    %v4575 = vadd.f32 %v4574, 1.0
    %v4576 = vrcp.pop %v4575
    %v4577 = vmul.f32 %v4575, %v4576
    %v4578 = vsub.f32 1.0, %v4577
    %v4579 = vmul.f32 %v4576, %v4578
    %v4580 = vadd.f32 %v4576, %v4579
    %vm4581 = vweird.f32 %v4575
    %vm4582 = vweird.f32 %v4576
    %vm4583 = vmor %vm4581, %vm4582
    %v4584 = vsel %vm4583, %v4576, %v4580
    %v4585 = vand.u32 2147483647, %v4575
    %vm4586 = vcmp.eq.f32.partialorder %v4585, 8.507059e+37
    %v4587 = vand.u32 %v4575, 2147483648
    %v4588 = vor.u32 1.1754944e-38, %v4587
    %v4589 = vsel %vm4586, %v4588, %v4584
    %v4590 = vmul.f32 1.0, %v4589
    %4591 = vst [vmem:[%s13] sm:$0x3] %v4590
    // Predicated region
    $region70: #{shield_forward_pallas.1} parent=1 // pred_check
      _
    $region71: #{shield_forward_pallas.1} parent=1 // pred_check_branch
      %4593 = sbr.rel (0) target = $region73
    $region72: #{shield_forward_pallas.1} parent=1 // pred_region
      _
    $region73: #{shield_forward_pallas.1} parent=1 // pred_fallthru
      _
    // Predicated region
    $region74: #{shield_forward_pallas.1} parent=1 // pred_check
      _
    $region75: #{shield_forward_pallas.1} parent=1 // pred_check_branch
      %4595 = sbr.rel (0) target = $region77
    $region76: #{shield_forward_pallas.1} parent=1 // pred_region
      _
    $region77: #{shield_forward_pallas.1} parent=1 // pred_fallthru
      _
    %4596 = vsyncpa [#allocation4], 1
    %4597 = vsyncpa [#allocation6], 1
    %4598 = vsyncpa [#allocation9], 1

</llo_original>
